<compile_context>
chip_gen: v6e
topology: v6e:2x2x1
jax: 0.10.0
libtpu: 0.0.40
codegen_flags: <defaults>
</compile_context>

<pallas_src>
import jax
import jax.numpy as jnp
from jax import lax
from jax.experimental import pallas as pl
from jax.experimental.pallas import tpu as pltpu

# ----------------------------- configuration --------------------------------
LRP_LENGTH = 16          # L (must be a power of two for the in-kernel masks)
HID_DIM = 13             # hid_dim = lrp_out_dim (module default)
NUM_LAYERS = 4
NUM_ATOM_TYPE = 28
NUM_BOND_TYPE = 4
NUM_TASKS = 1

N_NODES = 8              # total nodes in the (batched) graph
N_EDGES = 12             # total edges
N_PERMS = 6              # P: number of local-relational-pattern rows
N_GRAPHS = 2             # graphs in the batch (node split 5 / 3)


# ------------------------------ Pallas kernel --------------------------------
def lrp_fused_kernel(n2p_ref, e2p_ref, pool_ref, degs_ref, mean_ref,
                     h0_ref, efeat_ref, wflat_ref, bias_ref,
                     w0_ref, b0_ref, w1_ref, b1_ref, wf_ref, bf_ref,
                     out_ref, perm_e_ref):
    """Fused LRP_PURE forward (4 LRP layers + degree nets + mean-pool readout).

    n2p_ref   : (P*L, N)         node -> perm-length scatter matrix, rows d*L + a
    e2p_ref   : (P*L, E)         edge -> perm-length scatter matrix
    pool_ref  : (N, P)           perm -> node pooling matrix
    degs_ref  : (N, 1)           node degrees (f32)
    mean_ref  : (G, N)           dgl.mean_nodes membership matrix (1/|V_g|)
    h0_ref    : (N, hid)         atom-encoded node features (f32)
    efeat_ref : (Lyr, E, hid)    per-layer bond-encoded edge features
    wflat_ref : (Lyr, hid, hid*L)  wflat[l][b, c*L + a] = W_l[b, c, a]
    bias_ref  : (Lyr, 1, hid)    f32
    w0_ref    : (Lyr, 1, 2h), b0_ref: (Lyr, 1, 2h)    degnet_0 (f32)
    w1_ref    : (Lyr, 2h, hid), b1_ref: (Lyr, 1, hid) degnet_1
    wf_ref    : (hid, tasks), bf_ref: (1, tasks)      final_predict
    out_ref   : (G, tasks)       f32
    perm_e_ref: (Lyr, P*L, hid)  f32 VMEM scratch: hoisted e2p @ efeat[l]

    MXU operands run at the dtype they are shipped in (f32 or bf16);
    accumulation is always f32 (preferred_element_type).
    """
    f32 = jnp.float32
    mm_dt = n2p_ref.dtype                       # matmul operand dtype
    num_layers, _, hid = efeat_ref.shape
    pl_rows = n2p_ref.shape[0]                  # P * L
    n_perms = pool_ref.shape[1]                 # P
    lh = wflat_ref.shape[2]                     # hid * L
    L = lh // hid
    assert L & (L - 1) == 0, "in-kernel iota masks assume power-of-two L"
    log2_l = L.bit_length() - 1

    # ---------------- hoisted, h-independent work ----------------------------
    # (a) edge->perm scatter for every layer: off the serial h-chain; written
    #     once into VMEM scratch, only read inside the layer loop.
    for l in range(num_layers):
        perm_e_ref[l] = jnp.dot(e2p_ref[...], efeat_ref[l],
                                preferred_element_type=f32)

    # (b) degree-net factors for every layer (tiny, independent of h).
    degs = degs_ref[...]                                          # (N, 1)
    factors = []
    for l in range(num_layers):
        dh = jnp.maximum(degs * w0_ref[l] + b0_ref[l], 0.0)       # (N, 2h)
        factors.append(jnp.dot(dh.astype(mm_dt), w1_ref[l],
                               preferred_element_type=f32) + b1_ref[l])  # (N, hid)

    # ---------------- serial per-layer chain ---------------------------------
    h = h0_ref[...]                                               # (N, hid) f32
    for l in range(num_layers):
        # node->perm scatter (K = N only; edge half precomputed above).
        perm = (jnp.dot(n2p_ref[...], h.astype(mm_dt),
                        preferred_element_type=f32)
                + perm_e_ref[l])                                  # (P*L, hid)

        # einsum('dab,bca->dc') decomposition (column layout col = c*L + a'):
        #   q[d*L+a, c*L+a'] = sum_b perm[d*L+a, b] * W[b, c, a']
        #   keep a == a' (iota mask), sum the L rows of each d block (rbs),
        #   sum each L-lane group over a' (teye).  Masks are regenerated per
        #   layer from iota compares: pure VPU (free slots), no structural
        #   DMA, no vregs pinned across the unrolled loop.
        q = jnp.dot(perm.astype(mm_dt), wflat_ref[l],
                    preferred_element_type=f32)                   # (P*L, hid*L)
        a_row = lax.broadcasted_iota(jnp.int32, (pl_rows, lh), 0) & (L - 1)
        a_col = lax.broadcasted_iota(jnp.int32, (pl_rows, lh), 1) & (L - 1)
        q = jnp.where(a_row == a_col, q, 0.0)

        r_idx = lax.broadcasted_iota(jnp.int32, (n_perms, pl_rows), 1)
        d_idx = lax.broadcasted_iota(jnp.int32, (n_perms, pl_rows), 0)
        rbs = jnp.where((r_idx >> log2_l) == d_idx, 1.0, 0.0).astype(mm_dt)

        col_idx = lax.broadcasted_iota(jnp.int32, (lh, hid), 0)
        c_idx = lax.broadcasted_iota(jnp.int32, (lh, hid), 1)
        teye = jnp.where((col_idx >> log2_l) == c_idx, 1.0, 0.0).astype(mm_dt)

        acc = jnp.dot(rbs, q.astype(mm_dt), preferred_element_type=f32)     # (P, hid*L)
        acc = jnp.dot(acc.astype(mm_dt), teye, preferred_element_type=f32)  # (P, hid)

        hperm = jnp.maximum(acc + bias_ref[l], 0.0)               # relu(+bias)
        pooled = jnp.dot(pool_ref[...], hperm.astype(mm_dt),
                         preferred_element_type=f32)              # (N, hid)
        h = pooled * factors[l]                                   # degnet factor

    # ---------------- readout: final_predict(dgl.mean_nodes(h)) --------------
    g = jnp.dot(mean_ref[...], h.astype(mm_dt), preferred_element_type=f32)  # (G, hid)
    out_ref[...] = (jnp.dot(g.astype(mm_dt), wf_ref[...],
                            preferred_element_type=f32) + bf_ref[...])


def call_lrp_fused(struct, h0, efeat_all, pp):
    num_graphs, n_nodes = struct['mean'].shape
    num_layers, n_edges, hid = efeat_all.shape
    num_tasks = pp['wf'].shape[1]
    pl_rows = struct['n2p'].shape[0]          # P * L
    n_perms = struct['pool'].shape[1]         # P
    lh = pp['wflat_all'].shape[2]             # hid * L

    args = (struct['n2p'], struct['e2p'], struct['pool'], struct['degs'],
            struct['mean'], h0, efeat_all,
            pp['wflat_all'], pp['bias_all'],
            pp['w0_all'], pp['b0_all'], pp['w1_all'], pp['b1_all'],
            pp['wf'], pp['bf'])

    # Advisory cost hint so XLA schedules the surrounding embedding gathers /
    # host work sensibly around this tiny (sub-10us) custom call.
    flops = 2 * (num_layers * (pl_rows * n_edges * hid            # e2p @ efeat
                               + n_nodes * 2 * hid * hid          # degnet_1
                               + pl_rows * n_nodes * hid          # n2p @ h
                               + pl_rows * hid * lh               # perm @ wflat
                               + n_perms * pl_rows * lh           # rbs @ q
                               + n_perms * lh * hid               # acc @ teye
                               + n_nodes * n_perms * hid)         # pool @ hperm
                 + num_graphs * n_nodes * hid                     # mean_nodes
                 + num_graphs * hid * num_tasks)                  # final_predict
    bytes_accessed = (sum(int(a.size) * a.dtype.itemsize for a in args)
                      + num_graphs * num_tasks * 4)
    cost = pl.CostEstimate(flops=int(flops), transcendentals=0,
                           bytes_accessed=int(bytes_accessed))

    vmem = pl.BlockSpec(memory_space=pltpu.MemorySpace.VMEM)
    # TODO(synk): when batching many molecules per call, switch to a grid over
    # graph chunks with dimension_semantics=("parallel",) (use both v7x TCs)
    # and re-derive tile sizes / vmem_limit_bytes against 64 MiB VMEM on v7x.
    return pl.pallas_call(
        lrp_fused_kernel,
        out_shape=jax.ShapeDtypeStruct((num_graphs, num_tasks), jnp.float32),
        in_specs=[vmem] * len(args),
        out_specs=vmem,
        scratch_shapes=[pltpu.VMEM((num_layers, pl_rows, hid), jnp.float32)],
        cost_estimate=cost,
    )(*args)


# ------------------------- wrapper-side preparation --------------------------
def prepare_params(params, mm_dtype=jnp.float32):
    """Param-only preprocessing into kernel-ready layouts (done once).

    mm_dtype is the MXU operand dtype (f32 or bf16); biases and anything used
    only elementwise stay f32.
    """
    layers = params['layers']
    hid, _, L = layers[0]['w_torch'].shape
    assert L & (L - 1) == 0, "in-kernel iota masks assume power-of-two lrp_length"

    # wflat[b, c*L + a] = W_torch[b, c, a]   (plain reshape, no transpose)
    wflat_all = jnp.stack([l['w_torch'].reshape(hid, hid * L) for l in layers]
                          ).astype(mm_dtype)
    bias_all = jnp.stack([l['b'] for l in layers])                    # (Lyr,1,hid)
    w0_all = jnp.stack([l['w0'] for l in layers])                     # (Lyr,1,2h)
    b0_all = jnp.stack([l['b0'] for l in layers])                     # (Lyr,1,2h)
    w1_all = jnp.stack([l['w1'] for l in layers]).astype(mm_dtype)    # (Lyr,2h,hid)
    b1_all = jnp.stack([l['b1'] for l in layers])                     # (Lyr,1,hid)
    bond_emb_all = jnp.stack([l['bond_emb'] for l in layers])         # (Lyr,nb,hid)

    return dict(atom_emb=params['atom_emb'], bond_emb_all=bond_emb_all,
                wflat_all=wflat_all, bias_all=bias_all,
                w0_all=w0_all, b0_all=b0_all, w1_all=w1_all, b1_all=b1_all,
                wf=params['wf'].astype(mm_dtype), bf=params['bf'])


def prepare_structure(n2p_dense, e2p_dense, pooling, degs, mean_mat,
                      mm_dtype=jnp.float32):
    """Per-graph-batch structural preprocessing (done once per batch).

    Note: no P-padding anywhere — acc/hperm carry exactly P rows inside the
    kernel, so the previous relu(bias)-ghost-row / zero-pool-column
    cancellation invariant no longer exists.
    """
    return dict(n2p=n2p_dense.astype(mm_dtype),
                e2p=e2p_dense.astype(mm_dtype),
                pool=pooling.astype(mm_dtype),
                degs=degs.reshape(-1, 1).astype(jnp.float32),
                mean=mean_mat.astype(mm_dtype))


@jax.jit
def lrp_pure_forward(prep_params, struct, node_ids, edge_ids):
    # Embedding lookups (glue): one gather for atoms, one stacked gather for
    # all layers' bond embeddings; efeat is cast to the MXU operand dtype.
    mm_dtype = prep_params['wflat_all'].dtype
    h0 = jnp.take(prep_params['atom_emb'], node_ids, axis=0).astype(jnp.float32)
    efeat_all = jnp.take(prep_params['bond_emb_all'], edge_ids, axis=1).astype(mm_dtype)
    return call_lrp_fused(struct, h0, efeat_all, prep_params)


# ------------------------------ param init -----------------------------------
def init_params(key, hid=HID_DIM, L=LRP_LENGTH, num_layers=NUM_LAYERS,
                num_atom_type=NUM_ATOM_TYPE, num_bond_type=NUM_BOND_TYPE,
                num_tasks=NUM_TASKS):
    keys = jax.random.split(key, 2 + num_layers)
    params = {
        'atom_emb': 0.1 * jax.random.normal(keys[0], (num_atom_type, hid), jnp.float32),
        'wf': 0.1 * jax.random.normal(keys[1], (hid, num_tasks), jnp.float32),
        'bf': jnp.zeros((1, num_tasks), jnp.float32),
        'layers': [],
    }
    for i in range(num_layers):
        lk = jax.random.split(keys[2 + i], 7)
        params['layers'].append({
            # torch weights: (hid, hid, L) indexed [b, c, a]
            'w_torch': 0.1 * jax.random.normal(lk[0], (hid, hid, L), jnp.float32),
            'b': 0.05 * jax.random.normal(lk[6], (1, hid), jnp.float32),
            'w0': 0.1 * jax.random.normal(lk[1], (1, 2 * hid), jnp.float32),
            'b0': 0.05 * jax.random.normal(lk[2], (1, 2 * hid), jnp.float32),
            'w1': 0.1 * jax.random.normal(lk[3], (2 * hid, hid), jnp.float32),
            'b1': 0.05 * jax.random.normal(lk[4], (1, hid), jnp.float32),
            'bond_emb': 0.1 * jax.random.normal(lk[5], (num_bond_type, hid), jnp.float32),
        })
    return params


# --------------------------- pure-JAX reference -------------------------------
def lrp_pure_reference(params, node_ids, edge_ids, n2p, e2p, pooling, degs, mean_mat,
                       L=LRP_LENGTH):
    """Direct transcription of the torch forward (dense spmm stand-ins)."""
    prec = jax.lax.Precision.HIGHEST
    h = jnp.take(params['atom_emb'], node_ids, axis=0)
    P = pooling.shape[1]
    hid = h.shape[1]
    for layer in params['layers']:
        ef = jnp.take(layer['bond_emb'], edge_ids, axis=0)
        perm = (jnp.dot(n2p, h, precision=prec)
                + jnp.dot(e2p, ef, precision=prec))                 # (P*L, hid), rows d*L+a
        x = perm.reshape(P, L, hid)                                 # x[d, a, b]
        acc = jnp.einsum('dab,bca->dc', x, layer['w_torch'], precision=prec)
        hperm = jax.nn.relu(acc + layer['b'])
        pooled = jnp.dot(pooling, hperm, precision=prec)            # (N, hid)
        dh = jax.nn.relu(degs[:, None] * layer['w0'] + layer['b0'])
        factor = jnp.dot(dh, layer['w1'], precision=prec) + layer['b1']
        h = pooled * factor
    g = jnp.dot(mean_mat, h, precision=prec)
    return jnp.dot(g, params['wf'], precision=prec) + params['bf']


# --------------------------------- main ---------------------------------------
if __name__ == "__main__":
    key = jax.random.PRNGKey(0)
    k_par, k_nid, k_eid, k_n2p, k_e2p, k_pool, k_deg = jax.random.split(key, 7)

    params = init_params(k_par)

    # Synthetic batched graph (2 graphs: 5 + 3 nodes, 12 edges total).
    node_ids = jax.random.randint(k_nid, (N_NODES,), 0, NUM_ATOM_TYPE)
    edge_ids = jax.random.randint(k_eid, (N_EDGES,), 0, NUM_BOND_TYPE)

    # Dense stand-ins for the torch_sparse matrices (sparse scatter maps),
    # rows ordered d*L + a as required by the transpose/view/permute.
    def sparse_like(k, shape, p=0.25):
        ka, kb = jax.random.split(k)
        mask = (jax.random.uniform(ka, shape) < p).astype(jnp.float32)
        vals = jax.random.normal(kb, shape).astype(jnp.float32)
        return mask * vals

    n2p_dense = sparse_like(k_n2p, (N_PERMS * LRP_LENGTH, N_NODES))   # (P*L, N)
    e2p_dense = sparse_like(k_e2p, (N_PERMS * LRP_LENGTH, N_EDGES))   # (P*L, E)
    pooling = sparse_like(k_pool, (N_NODES, N_PERMS), p=0.5)          # (N, P)
    degs = 1.0 + jax.random.uniform(k_deg, (N_NODES,), jnp.float32) * 3.0

    # dgl.mean_nodes membership matrix: (G, N) with 1/|V_g| entries.
    graph_sizes = [5, 3]
    rows, start = [], 0
    for sz in graph_sizes:
        rows.append(jnp.zeros((N_NODES,), jnp.float32).at[start:start + sz].set(1.0 / sz))
        start += sz
    mean_mat = jnp.stack(rows, axis=0)                                # (G, N)

    ref = lrp_pure_reference(params, node_ids, edge_ids, n2p_dense, e2p_dense,
                             pooling, degs, mean_mat)

    # --- f32 MXU-operand build: same math as before, original tight check ----
    pp32 = prepare_params(params, mm_dtype=jnp.float32)
    st32 = prepare_structure(n2p_dense, e2p_dense, pooling, degs, mean_mat,
                             mm_dtype=jnp.float32)
    out32 = jax.block_until_ready(lrp_pure_forward(pp32, st32, node_ids, edge_ids))
    assert out32.shape == (N_GRAPHS, NUM_TASKS)
    assert bool(jnp.all(jnp.isfinite(out32)))
    assert bool(jnp.allclose(out32, ref, rtol=1e-2, atol=1e-3)), (out32, ref)

    # --- bf16 MXU-operand build (perf configuration): single-pass MXU, half
    #     the DMA bytes.  Tolerance is sized for bf16 operand rounding (~2^-8)
    #     compounding over the 4-layer chain vs. the f32/HIGHEST reference. ---
    ppbf = prepare_params(params, mm_dtype=jnp.bfloat16)
    stbf = prepare_structure(n2p_dense, e2p_dense, pooling, degs, mean_mat,
                             mm_dtype=jnp.bfloat16)
    outbf = jax.block_until_ready(lrp_pure_forward(ppbf, stbf, node_ids, edge_ids))
    assert outbf.shape == (N_GRAPHS, NUM_TASKS)
    assert bool(jnp.all(jnp.isfinite(outbf)))
    assert bool(jnp.allclose(outbf, ref, rtol=3e-2, atol=3e-3)), (outbf, ref)

    print("KERNEL_OK")
</pallas_src>

<mosaic_0001>
module attributes {stable_mosaic.version = 11 : i64} {
  func.func @lrp_fused_kernel(%arg0: memref<96x8xf32, #tpu.memory_space<vmem>>, %arg1: memref<96x12xf32, #tpu.memory_space<vmem>>, %arg2: memref<8x6xf32, #tpu.memory_space<vmem>>, %arg3: memref<8x1xf32, #tpu.memory_space<vmem>>, %arg4: memref<2x8xf32, #tpu.memory_space<vmem>>, %arg5: memref<8x13xf32, #tpu.memory_space<vmem>>, %arg6: memref<4x12x13xf32, #tpu.memory_space<vmem>>, %arg7: memref<4x13x208xf32, #tpu.memory_space<vmem>>, %arg8: memref<4x1x13xf32, #tpu.memory_space<vmem>>, %arg9: memref<4x1x26xf32, #tpu.memory_space<vmem>>, %arg10: memref<4x1x26xf32, #tpu.memory_space<vmem>>, %arg11: memref<4x26x13xf32, #tpu.memory_space<vmem>>, %arg12: memref<4x1x13xf32, #tpu.memory_space<vmem>>, %arg13: memref<13x1xf32, #tpu.memory_space<vmem>>, %arg14: memref<1x1xf32, #tpu.memory_space<vmem>>, %arg15: memref<2x1xf32, #tpu.memory_space<vmem>>, %arg16: memref<4x96x13xf32, #tpu.memory_space<vmem>>) attributes {dimension_semantics = [], scalar_prefetch = 0 : i64, scratch_operands = 1 : i64, tpu.core_type = #tpu.core_type<tc>} {
    %c0 = arith.constant 0 : index
    %c0_0 = arith.constant 0 : index
    %0 = vector.load %arg1[%c0, %c0_0] : memref<96x12xf32, #tpu.memory_space<vmem>>, vector<96x12xf32>
    %c0_1 = arith.constant 0 : index
    %c0_2 = arith.constant 0 : index
    %c0_3 = arith.constant 0 : index
    %1 = vector.load %arg6[%c0_1, %c0_2, %c0_3] : memref<4x12x13xf32, #tpu.memory_space<vmem>>, vector<1x12x13xf32>
    %2 = vector.shape_cast %1 : vector<1x12x13xf32> to vector<12x13xf32>
    %cst = arith.constant dense<0.000000e+00> : vector<96x13xf32>
    %3 = tpu.matmul %0, %2, %cst {dimension_numbers = #tpu.dot_dimension_numbers<[1], [0], [0], [1], [0, 0, 1, 1], [], []>} : vector<96x12xf32>, vector<12x13xf32>, vector<96x13xf32> -> vector<96x13xf32>
    %c0_4 = arith.constant 0 : index
    %c0_5 = arith.constant 0 : index
    %c0_6 = arith.constant 0 : index
    %4 = vector.load %arg16[%c0_4, %c0_5, %c0_6] : memref<4x96x13xf32, #tpu.memory_space<vmem>>, vector<1x96x13xf32>
    %5 = vector.shape_cast %4 : vector<1x96x13xf32> to vector<96x13xf32>
    %6 = vector.shape_cast %3 : vector<96x13xf32> to vector<1x96x13xf32>
    tpu.vector_store %arg16[%c0_4, %c0_5, %c0_6], %6 {strides = array<i32>} : memref<4x96x13xf32, #tpu.memory_space<vmem>>, vector<1x96x13xf32>,
    %c0_7 = arith.constant 0 : index
    %c0_8 = arith.constant 0 : index
    %7 = vector.load %arg1[%c0_7, %c0_8] : memref<96x12xf32, #tpu.memory_space<vmem>>, vector<96x12xf32>
    %c1 = arith.constant 1 : index
    %c0_9 = arith.constant 0 : index
    %c0_10 = arith.constant 0 : index
    %8 = vector.load %arg6[%c1, %c0_9, %c0_10] : memref<4x12x13xf32, #tpu.memory_space<vmem>>, vector<1x12x13xf32>
    %9 = vector.shape_cast %8 : vector<1x12x13xf32> to vector<12x13xf32>
    %cst_11 = arith.constant dense<0.000000e+00> : vector<96x13xf32>
    %10 = tpu.matmul %7, %9, %cst_11 {dimension_numbers = #tpu.dot_dimension_numbers<[1], [0], [0], [1], [0, 0, 1, 1], [], []>} : vector<96x12xf32>, vector<12x13xf32>, vector<96x13xf32> -> vector<96x13xf32>
    %c1_12 = arith.constant 1 : index
    %c0_13 = arith.constant 0 : index
    %c0_14 = arith.constant 0 : index
    %11 = vector.load %arg16[%c1_12, %c0_13, %c0_14] : memref<4x96x13xf32, #tpu.memory_space<vmem>>, vector<1x96x13xf32>
    %12 = vector.shape_cast %11 : vector<1x96x13xf32> to vector<96x13xf32>
    %13 = vector.shape_cast %10 : vector<96x13xf32> to vector<1x96x13xf32>
    tpu.vector_store %arg16[%c1_12, %c0_13, %c0_14], %13 {strides = array<i32>} : memref<4x96x13xf32, #tpu.memory_space<vmem>>, vector<1x96x13xf32>,
    %c0_15 = arith.constant 0 : index
    %c0_16 = arith.constant 0 : index
    %14 = vector.load %arg1[%c0_15, %c0_16] : memref<96x12xf32, #tpu.memory_space<vmem>>, vector<96x12xf32>
    %c2 = arith.constant 2 : index
    %c0_17 = arith.constant 0 : index
    %c0_18 = arith.constant 0 : index
    %15 = vector.load %arg6[%c2, %c0_17, %c0_18] : memref<4x12x13xf32, #tpu.memory_space<vmem>>, vector<1x12x13xf32>
    %16 = vector.shape_cast %15 : vector<1x12x13xf32> to vector<12x13xf32>
    %cst_19 = arith.constant dense<0.000000e+00> : vector<96x13xf32>
    %17 = tpu.matmul %14, %16, %cst_19 {dimension_numbers = #tpu.dot_dimension_numbers<[1], [0], [0], [1], [0, 0, 1, 1], [], []>} : vector<96x12xf32>, vector<12x13xf32>, vector<96x13xf32> -> vector<96x13xf32>
    %c2_20 = arith.constant 2 : index
    %c0_21 = arith.constant 0 : index
    %c0_22 = arith.constant 0 : index
    %18 = vector.load %arg16[%c2_20, %c0_21, %c0_22] : memref<4x96x13xf32, #tpu.memory_space<vmem>>, vector<1x96x13xf32>
    %19 = vector.shape_cast %18 : vector<1x96x13xf32> to vector<96x13xf32>
    %20 = vector.shape_cast %17 : vector<96x13xf32> to vector<1x96x13xf32>
    tpu.vector_store %arg16[%c2_20, %c0_21, %c0_22], %20 {strides = array<i32>} : memref<4x96x13xf32, #tpu.memory_space<vmem>>, vector<1x96x13xf32>,
    %c0_23 = arith.constant 0 : index
    %c0_24 = arith.constant 0 : index
    %21 = vector.load %arg1[%c0_23, %c0_24] : memref<96x12xf32, #tpu.memory_space<vmem>>, vector<96x12xf32>
    %c3 = arith.constant 3 : index
    %c0_25 = arith.constant 0 : index
    %c0_26 = arith.constant 0 : index
    %22 = vector.load %arg6[%c3, %c0_25, %c0_26] : memref<4x12x13xf32, #tpu.memory_space<vmem>>, vector<1x12x13xf32>
    %23 = vector.shape_cast %22 : vector<1x12x13xf32> to vector<12x13xf32>
    %cst_27 = arith.constant dense<0.000000e+00> : vector<96x13xf32>
    %24 = tpu.matmul %21, %23, %cst_27 {dimension_numbers = #tpu.dot_dimension_numbers<[1], [0], [0], [1], [0, 0, 1, 1], [], []>} : vector<96x12xf32>, vector<12x13xf32>, vector<96x13xf32> -> vector<96x13xf32>
    %c3_28 = arith.constant 3 : index
    %c0_29 = arith.constant 0 : index
    %c0_30 = arith.constant 0 : index
    %25 = vector.load %arg16[%c3_28, %c0_29, %c0_30] : memref<4x96x13xf32, #tpu.memory_space<vmem>>, vector<1x96x13xf32>
    %26 = vector.shape_cast %25 : vector<1x96x13xf32> to vector<96x13xf32>
    %27 = vector.shape_cast %24 : vector<96x13xf32> to vector<1x96x13xf32>
    tpu.vector_store %arg16[%c3_28, %c0_29, %c0_30], %27 {strides = array<i32>} : memref<4x96x13xf32, #tpu.memory_space<vmem>>, vector<1x96x13xf32>,
    %c0_31 = arith.constant 0 : index
    %c0_32 = arith.constant 0 : index
    %28 = vector.load %arg3[%c0_31, %c0_32] : memref<8x1xf32, #tpu.memory_space<vmem>>, vector<8x1xf32>
    %c0_33 = arith.constant 0 : index
    %c0_34 = arith.constant 0 : index
    %c0_35 = arith.constant 0 : index
    %29 = vector.load %arg9[%c0_33, %c0_34, %c0_35] : memref<4x1x26xf32, #tpu.memory_space<vmem>>, vector<1x1x26xf32>
    %30 = vector.shape_cast %29 : vector<1x1x26xf32> to vector<1x26xf32>
    %31 = vector.broadcast %28 : vector<8x1xf32> to vector<8x26xf32>
    %32 = vector.broadcast %30 : vector<1x26xf32> to vector<8x26xf32>
    %33 = arith.mulf %31, %32 : vector<8x26xf32>
    %c0_36 = arith.constant 0 : index
    %c0_37 = arith.constant 0 : index
    %c0_38 = arith.constant 0 : index
    %34 = vector.load %arg10[%c0_36, %c0_37, %c0_38] : memref<4x1x26xf32, #tpu.memory_space<vmem>>, vector<1x1x26xf32>
    %35 = vector.shape_cast %34 : vector<1x1x26xf32> to vector<1x26xf32>
    %36 = vector.broadcast %35 : vector<1x26xf32> to vector<8x26xf32>
    %37 = arith.addf %33, %36 : vector<8x26xf32>
    %cst_39 = arith.constant 0.000000e+00 : f32
    %38 = vector.broadcast %cst_39 : f32 to vector<8x26xf32>
    %39 = arith.maximumf %37, %38 : vector<8x26xf32>
    %c0_40 = arith.constant 0 : index
    %c0_41 = arith.constant 0 : index
    %c0_42 = arith.constant 0 : index
    %40 = vector.load %arg11[%c0_40, %c0_41, %c0_42] : memref<4x26x13xf32, #tpu.memory_space<vmem>>, vector<1x26x13xf32>
    %41 = vector.shape_cast %40 : vector<1x26x13xf32> to vector<26x13xf32>
    %cst_43 = arith.constant dense<0.000000e+00> : vector<8x13xf32>
    %42 = tpu.matmul %39, %41, %cst_43 {dimension_numbers = #tpu.dot_dimension_numbers<[1], [0], [0], [1], [0, 0, 1, 1], [], []>} : vector<8x26xf32>, vector<26x13xf32>, vector<8x13xf32> -> vector<8x13xf32>
    %c0_44 = arith.constant 0 : index
    %c0_45 = arith.constant 0 : index
    %c0_46 = arith.constant 0 : index
    %43 = vector.load %arg12[%c0_44, %c0_45, %c0_46] : memref<4x1x13xf32, #tpu.memory_space<vmem>>, vector<1x1x13xf32>
    %44 = vector.shape_cast %43 : vector<1x1x13xf32> to vector<1x13xf32>
    %45 = vector.broadcast %44 : vector<1x13xf32> to vector<8x13xf32>
    %46 = arith.addf %42, %45 : vector<8x13xf32>
    %c1_47 = arith.constant 1 : index
    %c0_48 = arith.constant 0 : index
    %c0_49 = arith.constant 0 : index
    %47 = vector.load %arg9[%c1_47, %c0_48, %c0_49] : memref<4x1x26xf32, #tpu.memory_space<vmem>>, vector<1x1x26xf32>
    %48 = vector.shape_cast %47 : vector<1x1x26xf32> to vector<1x26xf32>
    %49 = vector.broadcast %28 : vector<8x1xf32> to vector<8x26xf32>
    %50 = vector.broadcast %48 : vector<1x26xf32> to vector<8x26xf32>
    %51 = arith.mulf %49, %50 : vector<8x26xf32>
    %c1_50 = arith.constant 1 : index
    %c0_51 = arith.constant 0 : index
    %c0_52 = arith.constant 0 : index
    %52 = vector.load %arg10[%c1_50, %c0_51, %c0_52] : memref<4x1x26xf32, #tpu.memory_space<vmem>>, vector<1x1x26xf32>
    %53 = vector.shape_cast %52 : vector<1x1x26xf32> to vector<1x26xf32>
    %54 = vector.broadcast %53 : vector<1x26xf32> to vector<8x26xf32>
    %55 = arith.addf %51, %54 : vector<8x26xf32>
    %cst_53 = arith.constant 0.000000e+00 : f32
    %56 = vector.broadcast %cst_53 : f32 to vector<8x26xf32>
    %57 = arith.maximumf %55, %56 : vector<8x26xf32>
    %c1_54 = arith.constant 1 : index
    %c0_55 = arith.constant 0 : index
    %c0_56 = arith.constant 0 : index
    %58 = vector.load %arg11[%c1_54, %c0_55, %c0_56] : memref<4x26x13xf32, #tpu.memory_space<vmem>>, vector<1x26x13xf32>
    %59 = vector.shape_cast %58 : vector<1x26x13xf32> to vector<26x13xf32>
    %cst_57 = arith.constant dense<0.000000e+00> : vector<8x13xf32>
    %60 = tpu.matmul %57, %59, %cst_57 {dimension_numbers = #tpu.dot_dimension_numbers<[1], [0], [0], [1], [0, 0, 1, 1], [], []>} : vector<8x26xf32>, vector<26x13xf32>, vector<8x13xf32> -> vector<8x13xf32>
    %c1_58 = arith.constant 1 : index
    %c0_59 = arith.constant 0 : index
    %c0_60 = arith.constant 0 : index
    %61 = vector.load %arg12[%c1_58, %c0_59, %c0_60] : memref<4x1x13xf32, #tpu.memory_space<vmem>>, vector<1x1x13xf32>
    %62 = vector.shape_cast %61 : vector<1x1x13xf32> to vector<1x13xf32>
    %63 = vector.broadcast %62 : vector<1x13xf32> to vector<8x13xf32>
    %64 = arith.addf %60, %63 : vector<8x13xf32>
    %c2_61 = arith.constant 2 : index
    %c0_62 = arith.constant 0 : index
    %c0_63 = arith.constant 0 : index
    %65 = vector.load %arg9[%c2_61, %c0_62, %c0_63] : memref<4x1x26xf32, #tpu.memory_space<vmem>>, vector<1x1x26xf32>
    %66 = vector.shape_cast %65 : vector<1x1x26xf32> to vector<1x26xf32>
    %67 = vector.broadcast %28 : vector<8x1xf32> to vector<8x26xf32>
    %68 = vector.broadcast %66 : vector<1x26xf32> to vector<8x26xf32>
    %69 = arith.mulf %67, %68 : vector<8x26xf32>
    %c2_64 = arith.constant 2 : index
    %c0_65 = arith.constant 0 : index
    %c0_66 = arith.constant 0 : index
    %70 = vector.load %arg10[%c2_64, %c0_65, %c0_66] : memref<4x1x26xf32, #tpu.memory_space<vmem>>, vector<1x1x26xf32>
    %71 = vector.shape_cast %70 : vector<1x1x26xf32> to vector<1x26xf32>
    %72 = vector.broadcast %71 : vector<1x26xf32> to vector<8x26xf32>
    %73 = arith.addf %69, %72 : vector<8x26xf32>
    %cst_67 = arith.constant 0.000000e+00 : f32
    %74 = vector.broadcast %cst_67 : f32 to vector<8x26xf32>
    %75 = arith.maximumf %73, %74 : vector<8x26xf32>
    %c2_68 = arith.constant 2 : index
    %c0_69 = arith.constant 0 : index
    %c0_70 = arith.constant 0 : index
    %76 = vector.load %arg11[%c2_68, %c0_69, %c0_70] : memref<4x26x13xf32, #tpu.memory_space<vmem>>, vector<1x26x13xf32>
    %77 = vector.shape_cast %76 : vector<1x26x13xf32> to vector<26x13xf32>
    %cst_71 = arith.constant dense<0.000000e+00> : vector<8x13xf32>
    %78 = tpu.matmul %75, %77, %cst_71 {dimension_numbers = #tpu.dot_dimension_numbers<[1], [0], [0], [1], [0, 0, 1, 1], [], []>} : vector<8x26xf32>, vector<26x13xf32>, vector<8x13xf32> -> vector<8x13xf32>
    %c2_72 = arith.constant 2 : index
    %c0_73 = arith.constant 0 : index
    %c0_74 = arith.constant 0 : index
    %79 = vector.load %arg12[%c2_72, %c0_73, %c0_74] : memref<4x1x13xf32, #tpu.memory_space<vmem>>, vector<1x1x13xf32>
    %80 = vector.shape_cast %79 : vector<1x1x13xf32> to vector<1x13xf32>
    %81 = vector.broadcast %80 : vector<1x13xf32> to vector<8x13xf32>
    %82 = arith.addf %78, %81 : vector<8x13xf32>
    %c3_75 = arith.constant 3 : index
    %c0_76 = arith.constant 0 : index
    %c0_77 = arith.constant 0 : index
    %83 = vector.load %arg9[%c3_75, %c0_76, %c0_77] : memref<4x1x26xf32, #tpu.memory_space<vmem>>, vector<1x1x26xf32>
    %84 = vector.shape_cast %83 : vector<1x1x26xf32> to vector<1x26xf32>
    %85 = vector.broadcast %28 : vector<8x1xf32> to vector<8x26xf32>
    %86 = vector.broadcast %84 : vector<1x26xf32> to vector<8x26xf32>
    %87 = arith.mulf %85, %86 : vector<8x26xf32>
    %c3_78 = arith.constant 3 : index
    %c0_79 = arith.constant 0 : index
    %c0_80 = arith.constant 0 : index
    %88 = vector.load %arg10[%c3_78, %c0_79, %c0_80] : memref<4x1x26xf32, #tpu.memory_space<vmem>>, vector<1x1x26xf32>
    %89 = vector.shape_cast %88 : vector<1x1x26xf32> to vector<1x26xf32>
    %90 = vector.broadcast %89 : vector<1x26xf32> to vector<8x26xf32>
    %91 = arith.addf %87, %90 : vector<8x26xf32>
    %cst_81 = arith.constant 0.000000e+00 : f32
    %92 = vector.broadcast %cst_81 : f32 to vector<8x26xf32>
    %93 = arith.maximumf %91, %92 : vector<8x26xf32>
    %c3_82 = arith.constant 3 : index
    %c0_83 = arith.constant 0 : index
    %c0_84 = arith.constant 0 : index
    %94 = vector.load %arg11[%c3_82, %c0_83, %c0_84] : memref<4x26x13xf32, #tpu.memory_space<vmem>>, vector<1x26x13xf32>
    %95 = vector.shape_cast %94 : vector<1x26x13xf32> to vector<26x13xf32>
    %cst_85 = arith.constant dense<0.000000e+00> : vector<8x13xf32>
    %96 = tpu.matmul %93, %95, %cst_85 {dimension_numbers = #tpu.dot_dimension_numbers<[1], [0], [0], [1], [0, 0, 1, 1], [], []>} : vector<8x26xf32>, vector<26x13xf32>, vector<8x13xf32> -> vector<8x13xf32>
    %c3_86 = arith.constant 3 : index
    %c0_87 = arith.constant 0 : index
    %c0_88 = arith.constant 0 : index
    %97 = vector.load %arg12[%c3_86, %c0_87, %c0_88] : memref<4x1x13xf32, #tpu.memory_space<vmem>>, vector<1x1x13xf32>
    %98 = vector.shape_cast %97 : vector<1x1x13xf32> to vector<1x13xf32>
    %99 = vector.broadcast %98 : vector<1x13xf32> to vector<8x13xf32>
    %100 = arith.addf %96, %99 : vector<8x13xf32>
    %c0_89 = arith.constant 0 : index
    %c0_90 = arith.constant 0 : index
    %101 = vector.load %arg5[%c0_89, %c0_90] : memref<8x13xf32, #tpu.memory_space<vmem>>, vector<8x13xf32>
    %c0_91 = arith.constant 0 : index
    %c0_92 = arith.constant 0 : index
    %102 = vector.load %arg0[%c0_91, %c0_92] : memref<96x8xf32, #tpu.memory_space<vmem>>, vector<96x8xf32>
    %cst_93 = arith.constant dense<0.000000e+00> : vector<96x13xf32>
    %103 = tpu.matmul %102, %101, %cst_93 {dimension_numbers = #tpu.dot_dimension_numbers<[1], [0], [0], [1], [0, 0, 1, 1], [], []>} : vector<96x8xf32>, vector<8x13xf32>, vector<96x13xf32> -> vector<96x13xf32>
    %c0_94 = arith.constant 0 : index
    %c0_95 = arith.constant 0 : index
    %c0_96 = arith.constant 0 : index
    %104 = vector.load %arg16[%c0_94, %c0_95, %c0_96] : memref<4x96x13xf32, #tpu.memory_space<vmem>>, vector<1x96x13xf32>
    %105 = vector.shape_cast %104 : vector<1x96x13xf32> to vector<96x13xf32>
    %106 = arith.addf %103, %105 : vector<96x13xf32>
    %c0_97 = arith.constant 0 : index
    %c0_98 = arith.constant 0 : index
    %c0_99 = arith.constant 0 : index
    %107 = vector.load %arg7[%c0_97, %c0_98, %c0_99] : memref<4x13x208xf32, #tpu.memory_space<vmem>>, vector<1x13x208xf32>
    %108 = vector.shape_cast %107 : vector<1x13x208xf32> to vector<13x208xf32>
    %cst_100 = arith.constant dense<0.000000e+00> : vector<96x208xf32>
    %109 = tpu.matmul %106, %108, %cst_100 {dimension_numbers = #tpu.dot_dimension_numbers<[1], [0], [0], [1], [0, 0, 1, 1], [], []>} : vector<96x13xf32>, vector<13x208xf32>, vector<96x208xf32> -> vector<96x208xf32>
    %110 = tpu.iota {dimensions = array<i32: 0>} : vector<96x208xi32>
    %c15_i32 = arith.constant 15 : i32
    %111 = vector.broadcast %c15_i32 : i32 to vector<96x208xi32>
    %112 = arith.andi %110, %111 : vector<96x208xi32>
    %113 = tpu.iota {dimensions = array<i32: 1>} : vector<96x208xi32>
    %c15_i32_101 = arith.constant 15 : i32
    %114 = vector.broadcast %c15_i32_101 : i32 to vector<96x208xi32>
    %115 = arith.andi %113, %114 : vector<96x208xi32>
    %116 = arith.cmpi eq, %112, %115 : vector<96x208xi32>
    %cst_102 = arith.constant 0.000000e+00 : f32
    %117 = vector.broadcast %cst_102 : f32 to vector<96x208xf32>
    %118 = arith.select %116, %109, %117 : vector<96x208xi1>, vector<96x208xf32>
    %119 = tpu.iota {dimensions = array<i32: 1>} : vector<6x96xi32>
    %120 = tpu.iota {dimensions = array<i32: 0>} : vector<6x96xi32>
    %c4_i32 = arith.constant 4 : i32
    %121 = vector.broadcast %c4_i32 : i32 to vector<6x96xi32>
    %122 = arith.shrsi %119, %121 : vector<6x96xi32>
    %123 = arith.cmpi eq, %122, %120 : vector<6x96xi32>
    %cst_103 = arith.constant 1.000000e+00 : f32
    %cst_104 = arith.constant 0.000000e+00 : f32
    %124 = vector.broadcast %cst_103 : f32 to vector<6x96xf32>
    %125 = vector.broadcast %cst_104 : f32 to vector<6x96xf32>
    %126 = arith.select %123, %124, %125 : vector<6x96xi1>, vector<6x96xf32>
    %127 = tpu.iota {dimensions = array<i32: 0>} : vector<208x13xi32>
    %128 = tpu.iota {dimensions = array<i32: 1>} : vector<208x13xi32>
    %c4_i32_105 = arith.constant 4 : i32
    %129 = vector.broadcast %c4_i32_105 : i32 to vector<208x13xi32>
    %130 = arith.shrsi %127, %129 : vector<208x13xi32>
    %131 = arith.cmpi eq, %130, %128 : vector<208x13xi32>
    %cst_106 = arith.constant 1.000000e+00 : f32
    %cst_107 = arith.constant 0.000000e+00 : f32
    %132 = vector.broadcast %cst_106 : f32 to vector<208x13xf32>
    %133 = vector.broadcast %cst_107 : f32 to vector<208x13xf32>
    %134 = arith.select %131, %132, %133 : vector<208x13xi1>, vector<208x13xf32>
    %cst_108 = arith.constant dense<0.000000e+00> : vector<6x208xf32>
    %135 = tpu.matmul %126, %118, %cst_108 {dimension_numbers = #tpu.dot_dimension_numbers<[1], [0], [0], [1], [0, 0, 1, 1], [], []>} : vector<6x96xf32>, vector<96x208xf32>, vector<6x208xf32> -> vector<6x208xf32>
    %cst_109 = arith.constant dense<0.000000e+00> : vector<6x13xf32>
    %136 = tpu.matmul %135, %134, %cst_109 {dimension_numbers = #tpu.dot_dimension_numbers<[1], [0], [0], [1], [0, 0, 1, 1], [], []>} : vector<6x208xf32>, vector<208x13xf32>, vector<6x13xf32> -> vector<6x13xf32>
    %c0_110 = arith.constant 0 : index
    %c0_111 = arith.constant 0 : index
    %c0_112 = arith.constant 0 : index
    %137 = vector.load %arg8[%c0_110, %c0_111, %c0_112] : memref<4x1x13xf32, #tpu.memory_space<vmem>>, vector<1x1x13xf32>
    %138 = vector.shape_cast %137 : vector<1x1x13xf32> to vector<1x13xf32>
    %139 = vector.broadcast %138 : vector<1x13xf32> to vector<6x13xf32>
    %140 = arith.addf %136, %139 : vector<6x13xf32>
    %cst_113 = arith.constant 0.000000e+00 : f32
    %141 = vector.broadcast %cst_113 : f32 to vector<6x13xf32>
    %142 = arith.maximumf %140, %141 : vector<6x13xf32>
    %c0_114 = arith.constant 0 : index
    %c0_115 = arith.constant 0 : index
    %143 = vector.load %arg2[%c0_114, %c0_115] : memref<8x6xf32, #tpu.memory_space<vmem>>, vector<8x6xf32>
    %cst_116 = arith.constant dense<0.000000e+00> : vector<8x13xf32>
    %144 = tpu.matmul %143, %142, %cst_116 {dimension_numbers = #tpu.dot_dimension_numbers<[1], [0], [0], [1], [0, 0, 1, 1], [], []>} : vector<8x6xf32>, vector<6x13xf32>, vector<8x13xf32> -> vector<8x13xf32>
    %145 = arith.mulf %144, %46 : vector<8x13xf32>
    %c0_117 = arith.constant 0 : index
    %c0_118 = arith.constant 0 : index
    %146 = vector.load %arg0[%c0_117, %c0_118] : memref<96x8xf32, #tpu.memory_space<vmem>>, vector<96x8xf32>
    %cst_119 = arith.constant dense<0.000000e+00> : vector<96x13xf32>
    %147 = tpu.matmul %146, %145, %cst_119 {dimension_numbers = #tpu.dot_dimension_numbers<[1], [0], [0], [1], [0, 0, 1, 1], [], []>} : vector<96x8xf32>, vector<8x13xf32>, vector<96x13xf32> -> vector<96x13xf32>
    %c1_120 = arith.constant 1 : index
    %c0_121 = arith.constant 0 : index
    %c0_122 = arith.constant 0 : index
    %148 = vector.load %arg16[%c1_120, %c0_121, %c0_122] : memref<4x96x13xf32, #tpu.memory_space<vmem>>, vector<1x96x13xf32>
    %149 = vector.shape_cast %148 : vector<1x96x13xf32> to vector<96x13xf32>
    %150 = arith.addf %147, %149 : vector<96x13xf32>
    %c1_123 = arith.constant 1 : index
    %c0_124 = arith.constant 0 : index
    %c0_125 = arith.constant 0 : index
    %151 = vector.load %arg7[%c1_123, %c0_124, %c0_125] : memref<4x13x208xf32, #tpu.memory_space<vmem>>, vector<1x13x208xf32>
    %152 = vector.shape_cast %151 : vector<1x13x208xf32> to vector<13x208xf32>
    %cst_126 = arith.constant dense<0.000000e+00> : vector<96x208xf32>
    %153 = tpu.matmul %150, %152, %cst_126 {dimension_numbers = #tpu.dot_dimension_numbers<[1], [0], [0], [1], [0, 0, 1, 1], [], []>} : vector<96x13xf32>, vector<13x208xf32>, vector<96x208xf32> -> vector<96x208xf32>
    %154 = tpu.iota {dimensions = array<i32: 0>} : vector<96x208xi32>
    %c15_i32_127 = arith.constant 15 : i32
    %155 = vector.broadcast %c15_i32_127 : i32 to vector<96x208xi32>
    %156 = arith.andi %154, %155 : vector<96x208xi32>
    %157 = tpu.iota {dimensions = array<i32: 1>} : vector<96x208xi32>
    %c15_i32_128 = arith.constant 15 : i32
    %158 = vector.broadcast %c15_i32_128 : i32 to vector<96x208xi32>
    %159 = arith.andi %157, %158 : vector<96x208xi32>
    %160 = arith.cmpi eq, %156, %159 : vector<96x208xi32>
    %cst_129 = arith.constant 0.000000e+00 : f32
    %161 = vector.broadcast %cst_129 : f32 to vector<96x208xf32>
    %162 = arith.select %160, %153, %161 : vector<96x208xi1>, vector<96x208xf32>
    %163 = tpu.iota {dimensions = array<i32: 1>} : vector<6x96xi32>
    %164 = tpu.iota {dimensions = array<i32: 0>} : vector<6x96xi32>
    %c4_i32_130 = arith.constant 4 : i32
    %165 = vector.broadcast %c4_i32_130 : i32 to vector<6x96xi32>
    %166 = arith.shrsi %163, %165 : vector<6x96xi32>
    %167 = arith.cmpi eq, %166, %164 : vector<6x96xi32>
    %cst_131 = arith.constant 1.000000e+00 : f32
    %cst_132 = arith.constant 0.000000e+00 : f32
    %168 = vector.broadcast %cst_131 : f32 to vector<6x96xf32>
    %169 = vector.broadcast %cst_132 : f32 to vector<6x96xf32>
    %170 = arith.select %167, %168, %169 : vector<6x96xi1>, vector<6x96xf32>
    %171 = tpu.iota {dimensions = array<i32: 0>} : vector<208x13xi32>
    %172 = tpu.iota {dimensions = array<i32: 1>} : vector<208x13xi32>
    %c4_i32_133 = arith.constant 4 : i32
    %173 = vector.broadcast %c4_i32_133 : i32 to vector<208x13xi32>
    %174 = arith.shrsi %171, %173 : vector<208x13xi32>
    %175 = arith.cmpi eq, %174, %172 : vector<208x13xi32>
    %cst_134 = arith.constant 1.000000e+00 : f32
    %cst_135 = arith.constant 0.000000e+00 : f32
    %176 = vector.broadcast %cst_134 : f32 to vector<208x13xf32>
    %177 = vector.broadcast %cst_135 : f32 to vector<208x13xf32>
    %178 = arith.select %175, %176, %177 : vector<208x13xi1>, vector<208x13xf32>
    %cst_136 = arith.constant dense<0.000000e+00> : vector<6x208xf32>
    %179 = tpu.matmul %170, %162, %cst_136 {dimension_numbers = #tpu.dot_dimension_numbers<[1], [0], [0], [1], [0, 0, 1, 1], [], []>} : vector<6x96xf32>, vector<96x208xf32>, vector<6x208xf32> -> vector<6x208xf32>
    %cst_137 = arith.constant dense<0.000000e+00> : vector<6x13xf32>
    %180 = tpu.matmul %179, %178, %cst_137 {dimension_numbers = #tpu.dot_dimension_numbers<[1], [0], [0], [1], [0, 0, 1, 1], [], []>} : vector<6x208xf32>, vector<208x13xf32>, vector<6x13xf32> -> vector<6x13xf32>
    %c1_138 = arith.constant 1 : index
    %c0_139 = arith.constant 0 : index
    %c0_140 = arith.constant 0 : index
    %181 = vector.load %arg8[%c1_138, %c0_139, %c0_140] : memref<4x1x13xf32, #tpu.memory_space<vmem>>, vector<1x1x13xf32>
    %182 = vector.shape_cast %181 : vector<1x1x13xf32> to vector<1x13xf32>
    %183 = vector.broadcast %182 : vector<1x13xf32> to vector<6x13xf32>
    %184 = arith.addf %180, %183 : vector<6x13xf32>
    %cst_141 = arith.constant 0.000000e+00 : f32
    %185 = vector.broadcast %cst_141 : f32 to vector<6x13xf32>
    %186 = arith.maximumf %184, %185 : vector<6x13xf32>
    %c0_142 = arith.constant 0 : index
    %c0_143 = arith.constant 0 : index
    %187 = vector.load %arg2[%c0_142, %c0_143] : memref<8x6xf32, #tpu.memory_space<vmem>>, vector<8x6xf32>
    %cst_144 = arith.constant dense<0.000000e+00> : vector<8x13xf32>
    %188 = tpu.matmul %187, %186, %cst_144 {dimension_numbers = #tpu.dot_dimension_numbers<[1], [0], [0], [1], [0, 0, 1, 1], [], []>} : vector<8x6xf32>, vector<6x13xf32>, vector<8x13xf32> -> vector<8x13xf32>
    %189 = arith.mulf %188, %64 : vector<8x13xf32>
    %c0_145 = arith.constant 0 : index
    %c0_146 = arith.constant 0 : index
    %190 = vector.load %arg0[%c0_145, %c0_146] : memref<96x8xf32, #tpu.memory_space<vmem>>, vector<96x8xf32>
    %cst_147 = arith.constant dense<0.000000e+00> : vector<96x13xf32>
    %191 = tpu.matmul %190, %189, %cst_147 {dimension_numbers = #tpu.dot_dimension_numbers<[1], [0], [0], [1], [0, 0, 1, 1], [], []>} : vector<96x8xf32>, vector<8x13xf32>, vector<96x13xf32> -> vector<96x13xf32>
    %c2_148 = arith.constant 2 : index
    %c0_149 = arith.constant 0 : index
    %c0_150 = arith.constant 0 : index
    %192 = vector.load %arg16[%c2_148, %c0_149, %c0_150] : memref<4x96x13xf32, #tpu.memory_space<vmem>>, vector<1x96x13xf32>
    %193 = vector.shape_cast %192 : vector<1x96x13xf32> to vector<96x13xf32>
    %194 = arith.addf %191, %193 : vector<96x13xf32>
    %c2_151 = arith.constant 2 : index
    %c0_152 = arith.constant 0 : index
    %c0_153 = arith.constant 0 : index
    %195 = vector.load %arg7[%c2_151, %c0_152, %c0_153] : memref<4x13x208xf32, #tpu.memory_space<vmem>>, vector<1x13x208xf32>
    %196 = vector.shape_cast %195 : vector<1x13x208xf32> to vector<13x208xf32>
    %cst_154 = arith.constant dense<0.000000e+00> : vector<96x208xf32>
    %197 = tpu.matmul %194, %196, %cst_154 {dimension_numbers = #tpu.dot_dimension_numbers<[1], [0], [0], [1], [0, 0, 1, 1], [], []>} : vector<96x13xf32>, vector<13x208xf32>, vector<96x208xf32> -> vector<96x208xf32>
    %198 = tpu.iota {dimensions = array<i32: 0>} : vector<96x208xi32>
    %c15_i32_155 = arith.constant 15 : i32
    %199 = vector.broadcast %c15_i32_155 : i32 to vector<96x208xi32>
    %200 = arith.andi %198, %199 : vector<96x208xi32>
    %201 = tpu.iota {dimensions = array<i32: 1>} : vector<96x208xi32>
    %c15_i32_156 = arith.constant 15 : i32
    %202 = vector.broadcast %c15_i32_156 : i32 to vector<96x208xi32>
    %203 = arith.andi %201, %202 : vector<96x208xi32>
    %204 = arith.cmpi eq, %200, %203 : vector<96x208xi32>
    %cst_157 = arith.constant 0.000000e+00 : f32
    %205 = vector.broadcast %cst_157 : f32 to vector<96x208xf32>
    %206 = arith.select %204, %197, %205 : vector<96x208xi1>, vector<96x208xf32>
    %207 = tpu.iota {dimensions = array<i32: 1>} : vector<6x96xi32>
    %208 = tpu.iota {dimensions = array<i32: 0>} : vector<6x96xi32>
    %c4_i32_158 = arith.constant 4 : i32
    %209 = vector.broadcast %c4_i32_158 : i32 to vector<6x96xi32>
    %210 = arith.shrsi %207, %209 : vector<6x96xi32>
    %211 = arith.cmpi eq, %210, %208 : vector<6x96xi32>
    %cst_159 = arith.constant 1.000000e+00 : f32
    %cst_160 = arith.constant 0.000000e+00 : f32
    %212 = vector.broadcast %cst_159 : f32 to vector<6x96xf32>
    %213 = vector.broadcast %cst_160 : f32 to vector<6x96xf32>
    %214 = arith.select %211, %212, %213 : vector<6x96xi1>, vector<6x96xf32>
    %215 = tpu.iota {dimensions = array<i32: 0>} : vector<208x13xi32>
    %216 = tpu.iota {dimensions = array<i32: 1>} : vector<208x13xi32>
    %c4_i32_161 = arith.constant 4 : i32
    %217 = vector.broadcast %c4_i32_161 : i32 to vector<208x13xi32>
    %218 = arith.shrsi %215, %217 : vector<208x13xi32>
    %219 = arith.cmpi eq, %218, %216 : vector<208x13xi32>
    %cst_162 = arith.constant 1.000000e+00 : f32
    %cst_163 = arith.constant 0.000000e+00 : f32
    %220 = vector.broadcast %cst_162 : f32 to vector<208x13xf32>
    %221 = vector.broadcast %cst_163 : f32 to vector<208x13xf32>
    %222 = arith.select %219, %220, %221 : vector<208x13xi1>, vector<208x13xf32>
    %cst_164 = arith.constant dense<0.000000e+00> : vector<6x208xf32>
    %223 = tpu.matmul %214, %206, %cst_164 {dimension_numbers = #tpu.dot_dimension_numbers<[1], [0], [0], [1], [0, 0, 1, 1], [], []>} : vector<6x96xf32>, vector<96x208xf32>, vector<6x208xf32> -> vector<6x208xf32>
    %cst_165 = arith.constant dense<0.000000e+00> : vector<6x13xf32>
    %224 = tpu.matmul %223, %222, %cst_165 {dimension_numbers = #tpu.dot_dimension_numbers<[1], [0], [0], [1], [0, 0, 1, 1], [], []>} : vector<6x208xf32>, vector<208x13xf32>, vector<6x13xf32> -> vector<6x13xf32>
    %c2_166 = arith.constant 2 : index
    %c0_167 = arith.constant 0 : index
    %c0_168 = arith.constant 0 : index
    %225 = vector.load %arg8[%c2_166, %c0_167, %c0_168] : memref<4x1x13xf32, #tpu.memory_space<vmem>>, vector<1x1x13xf32>
    %226 = vector.shape_cast %225 : vector<1x1x13xf32> to vector<1x13xf32>
    %227 = vector.broadcast %226 : vector<1x13xf32> to vector<6x13xf32>
    %228 = arith.addf %224, %227 : vector<6x13xf32>
    %cst_169 = arith.constant 0.000000e+00 : f32
    %229 = vector.broadcast %cst_169 : f32 to vector<6x13xf32>
    %230 = arith.maximumf %228, %229 : vector<6x13xf32>
    %c0_170 = arith.constant 0 : index
    %c0_171 = arith.constant 0 : index
    %231 = vector.load %arg2[%c0_170, %c0_171] : memref<8x6xf32, #tpu.memory_space<vmem>>, vector<8x6xf32>
    %cst_172 = arith.constant dense<0.000000e+00> : vector<8x13xf32>
    %232 = tpu.matmul %231, %230, %cst_172 {dimension_numbers = #tpu.dot_dimension_numbers<[1], [0], [0], [1], [0, 0, 1, 1], [], []>} : vector<8x6xf32>, vector<6x13xf32>, vector<8x13xf32> -> vector<8x13xf32>
    %233 = arith.mulf %232, %82 : vector<8x13xf32>
    %c0_173 = arith.constant 0 : index
    %c0_174 = arith.constant 0 : index
    %234 = vector.load %arg0[%c0_173, %c0_174] : memref<96x8xf32, #tpu.memory_space<vmem>>, vector<96x8xf32>
    %cst_175 = arith.constant dense<0.000000e+00> : vector<96x13xf32>
    %235 = tpu.matmul %234, %233, %cst_175 {dimension_numbers = #tpu.dot_dimension_numbers<[1], [0], [0], [1], [0, 0, 1, 1], [], []>} : vector<96x8xf32>, vector<8x13xf32>, vector<96x13xf32> -> vector<96x13xf32>
    %c3_176 = arith.constant 3 : index
    %c0_177 = arith.constant 0 : index
    %c0_178 = arith.constant 0 : index
    %236 = vector.load %arg16[%c3_176, %c0_177, %c0_178] : memref<4x96x13xf32, #tpu.memory_space<vmem>>, vector<1x96x13xf32>
    %237 = vector.shape_cast %236 : vector<1x96x13xf32> to vector<96x13xf32>
    %238 = arith.addf %235, %237 : vector<96x13xf32>
    %c3_179 = arith.constant 3 : index
    %c0_180 = arith.constant 0 : index
    %c0_181 = arith.constant 0 : index
    %239 = vector.load %arg7[%c3_179, %c0_180, %c0_181] : memref<4x13x208xf32, #tpu.memory_space<vmem>>, vector<1x13x208xf32>
    %240 = vector.shape_cast %239 : vector<1x13x208xf32> to vector<13x208xf32>
    %cst_182 = arith.constant dense<0.000000e+00> : vector<96x208xf32>
    %241 = tpu.matmul %238, %240, %cst_182 {dimension_numbers = #tpu.dot_dimension_numbers<[1], [0], [0], [1], [0, 0, 1, 1], [], []>} : vector<96x13xf32>, vector<13x208xf32>, vector<96x208xf32> -> vector<96x208xf32>
    %242 = tpu.iota {dimensions = array<i32: 0>} : vector<96x208xi32>
    %c15_i32_183 = arith.constant 15 : i32
    %243 = vector.broadcast %c15_i32_183 : i32 to vector<96x208xi32>
    %244 = arith.andi %242, %243 : vector<96x208xi32>
    %245 = tpu.iota {dimensions = array<i32: 1>} : vector<96x208xi32>
    %c15_i32_184 = arith.constant 15 : i32
    %246 = vector.broadcast %c15_i32_184 : i32 to vector<96x208xi32>
    %247 = arith.andi %245, %246 : vector<96x208xi32>
    %248 = arith.cmpi eq, %244, %247 : vector<96x208xi32>
    %cst_185 = arith.constant 0.000000e+00 : f32
    %249 = vector.broadcast %cst_185 : f32 to vector<96x208xf32>
    %250 = arith.select %248, %241, %249 : vector<96x208xi1>, vector<96x208xf32>
    %251 = tpu.iota {dimensions = array<i32: 1>} : vector<6x96xi32>
    %252 = tpu.iota {dimensions = array<i32: 0>} : vector<6x96xi32>
    %c4_i32_186 = arith.constant 4 : i32
    %253 = vector.broadcast %c4_i32_186 : i32 to vector<6x96xi32>
    %254 = arith.shrsi %251, %253 : vector<6x96xi32>
    %255 = arith.cmpi eq, %254, %252 : vector<6x96xi32>
    %cst_187 = arith.constant 1.000000e+00 : f32
    %cst_188 = arith.constant 0.000000e+00 : f32
    %256 = vector.broadcast %cst_187 : f32 to vector<6x96xf32>
    %257 = vector.broadcast %cst_188 : f32 to vector<6x96xf32>
    %258 = arith.select %255, %256, %257 : vector<6x96xi1>, vector<6x96xf32>
    %259 = tpu.iota {dimensions = array<i32: 0>} : vector<208x13xi32>
    %260 = tpu.iota {dimensions = array<i32: 1>} : vector<208x13xi32>
    %c4_i32_189 = arith.constant 4 : i32
    %261 = vector.broadcast %c4_i32_189 : i32 to vector<208x13xi32>
    %262 = arith.shrsi %259, %261 : vector<208x13xi32>
    %263 = arith.cmpi eq, %262, %260 : vector<208x13xi32>
    %cst_190 = arith.constant 1.000000e+00 : f32
    %cst_191 = arith.constant 0.000000e+00 : f32
    %264 = vector.broadcast %cst_190 : f32 to vector<208x13xf32>
    %265 = vector.broadcast %cst_191 : f32 to vector<208x13xf32>
    %266 = arith.select %263, %264, %265 : vector<208x13xi1>, vector<208x13xf32>
    %cst_192 = arith.constant dense<0.000000e+00> : vector<6x208xf32>
    %267 = tpu.matmul %258, %250, %cst_192 {dimension_numbers = #tpu.dot_dimension_numbers<[1], [0], [0], [1], [0, 0, 1, 1], [], []>} : vector<6x96xf32>, vector<96x208xf32>, vector<6x208xf32> -> vector<6x208xf32>
    %cst_193 = arith.constant dense<0.000000e+00> : vector<6x13xf32>
    %268 = tpu.matmul %267, %266, %cst_193 {dimension_numbers = #tpu.dot_dimension_numbers<[1], [0], [0], [1], [0, 0, 1, 1], [], []>} : vector<6x208xf32>, vector<208x13xf32>, vector<6x13xf32> -> vector<6x13xf32>
    %c3_194 = arith.constant 3 : index
    %c0_195 = arith.constant 0 : index
    %c0_196 = arith.constant 0 : index
    %269 = vector.load %arg8[%c3_194, %c0_195, %c0_196] : memref<4x1x13xf32, #tpu.memory_space<vmem>>, vector<1x1x13xf32>
    %270 = vector.shape_cast %269 : vector<1x1x13xf32> to vector<1x13xf32>
    %271 = vector.broadcast %270 : vector<1x13xf32> to vector<6x13xf32>
    %272 = arith.addf %268, %271 : vector<6x13xf32>
    %cst_197 = arith.constant 0.000000e+00 : f32
    %273 = vector.broadcast %cst_197 : f32 to vector<6x13xf32>
    %274 = arith.maximumf %272, %273 : vector<6x13xf32>
    %c0_198 = arith.constant 0 : index
    %c0_199 = arith.constant 0 : index
    %275 = vector.load %arg2[%c0_198, %c0_199] : memref<8x6xf32, #tpu.memory_space<vmem>>, vector<8x6xf32>
    %cst_200 = arith.constant dense<0.000000e+00> : vector<8x13xf32>
    %276 = tpu.matmul %275, %274, %cst_200 {dimension_numbers = #tpu.dot_dimension_numbers<[1], [0], [0], [1], [0, 0, 1, 1], [], []>} : vector<8x6xf32>, vector<6x13xf32>, vector<8x13xf32> -> vector<8x13xf32>
    %277 = arith.mulf %276, %100 : vector<8x13xf32>
    %c0_201 = arith.constant 0 : index
    %c0_202 = arith.constant 0 : index
    %278 = vector.load %arg4[%c0_201, %c0_202] : memref<2x8xf32, #tpu.memory_space<vmem>>, vector<2x8xf32>
    %cst_203 = arith.constant dense<0.000000e+00> : vector<2x13xf32>
    %279 = tpu.matmul %278, %277, %cst_203 {dimension_numbers = #tpu.dot_dimension_numbers<[1], [0], [0], [1], [0, 0, 1, 1], [], []>} : vector<2x8xf32>, vector<8x13xf32>, vector<2x13xf32> -> vector<2x13xf32>
    %c0_204 = arith.constant 0 : index
    %c0_205 = arith.constant 0 : index
    %280 = vector.load %arg13[%c0_204, %c0_205] : memref<13x1xf32, #tpu.memory_space<vmem>>, vector<13x1xf32>
    %cst_206 = arith.constant dense<0.000000e+00> : vector<2x1xf32>
    %281 = tpu.matmul %279, %280, %cst_206 {dimension_numbers = #tpu.dot_dimension_numbers<[1], [0], [0], [1], [0, 0, 1, 1], [], []>} : vector<2x13xf32>, vector<13x1xf32>, vector<2x1xf32> -> vector<2x1xf32>
    %c0_207 = arith.constant 0 : index
    %c0_208 = arith.constant 0 : index
    %282 = vector.load %arg14[%c0_207, %c0_208] : memref<1x1xf32, #tpu.memory_space<vmem>>, vector<1x1xf32>
    %283 = vector.broadcast %282 : vector<1x1xf32> to vector<2x1xf32>
    %284 = arith.addf %281, %283 : vector<2x1xf32>
    %c0_209 = arith.constant 0 : index
    %c0_210 = arith.constant 0 : index
    %285 = vector.load %arg15[%c0_209, %c0_210] : memref<2x1xf32, #tpu.memory_space<vmem>>, vector<2x1xf32>
    tpu.vector_store %arg15[%c0_209, %c0_210], %284 {strides = array<i32>} : memref<2x1xf32, #tpu.memory_space<vmem>>, vector<2x1xf32>,
    return
  }
}

</mosaic_0001>

<llo_original>
// kernel: lrp_pure_forward.1
$region0: #{lrp_pure_forward.1}
  #allocation0 [shape = 'u32[]', space=smem, size = 0x4, offset = 0x4, fixed_abs, tag = 'smem constant byte address 0x4 - core index']
  #allocation1 [shape = 'u32[144,128]{1,0:T(1,128)}', space=vmem, size = 0x12000, scoped, tag = 'internal scratch']
  #allocation2 [shape = 'f32[4,96,13]{2,1,0:T(8,128)}', space=vmem, size = 0x30000, scoped, tag = 'scratch operand']
  #allocation3 [shape = 'f32[1,1]{1,0:T(1,128)S(1)}', space=vmem, size = 0x200, scoped, tag = 'scoped memory for lrp_pure_forward.1']
  %s0 = inlined_call_operand.vmem [shape: f32[96,8], index: 0, kind: input, shape index: {}]
  %s1 = inlined_call_operand.vmem [shape: f32[96,12], index: 1, kind: input, shape index: {}]
  %s2 = inlined_call_operand.vmem [shape: f32[8,6], index: 2, kind: input, shape index: {}]
  %s3 = inlined_call_operand.vmem [shape: f32[8,1], index: 3, kind: input, shape index: {}]
  %s4 = inlined_call_operand.vmem [shape: f32[2,8], index: 4, kind: input, shape index: {}]
  %s5 = inlined_call_operand.vmem [shape: f32[8,13], index: 5, kind: input, shape index: {}]
  %s6 = inlined_call_operand.vmem [shape: f32[4,12,13], index: 6, kind: input, shape index: {}]
  %s7 = inlined_call_operand.vmem [shape: f32[4,13,208], index: 7, kind: input, shape index: {}]
  %s8 = inlined_call_operand.vmem [shape: f32[4,1,13], index: 8, kind: input, shape index: {}]
  %s9 = inlined_call_operand.vmem [shape: f32[4,1,26], index: 9, kind: input, shape index: {}]
  %s10 = inlined_call_operand.vmem [shape: f32[4,1,26], index: 10, kind: input, shape index: {}]
  %s11 = inlined_call_operand.vmem [shape: f32[4,26,13], index: 11, kind: input, shape index: {}]
  %s12 = inlined_call_operand.vmem [shape: f32[4,1,13], index: 12, kind: input, shape index: {}]
  %s13 = inlined_call_operand.vmem [shape: f32[13,1], index: 13, kind: input, shape index: {}]
  %s14 = inlined_call_operand.<no memory space> [shape: f32[1,1], index: 14, kind: input, shape index: {}]
  %s15 = inlined_call_operand.vmem [shape: f32[2,1], index: 15, kind: output, shape index: {}]
  %s16 = sld [smem:[#allocation0]]
  $region70: #{lrp_pure_forward.1} parent=0
    _
  %s18 = ssub.s32 1, %s16
  %s19 = scalar_select 0, %s18, %s16
  %v20 = vstv %s14
  %21 = vst [vmem:[#allocation3] sm:$0x1] %v20
  // Predicated region
  $region2: #{lrp_pure_forward.1} parent=0 // pred_check
    _
  $region3: #{lrp_pure_forward.1} parent=0 // pred_check_branch
    %23 = sbr.rel (0) target = $region5
  $region4: #{lrp_pure_forward.1} parent=0 // pred_region
    _
  $region5: #{lrp_pure_forward.1} parent=0 // pred_fallthru
    _
  // Predicated region
  $region6: #{lrp_pure_forward.1} parent=0 // pred_check
    _
  $region7: #{lrp_pure_forward.1} parent=0 // pred_check_branch
    %25 = sbr.rel (0) target = $region9
  $region8: #{lrp_pure_forward.1} parent=0 // pred_region
    _
  $region9: #{lrp_pure_forward.1} parent=0 // pred_fallthru
    _
  // Predicated region
  $region10: #{lrp_pure_forward.1} parent=0 // pred_check
    _
  $region11: #{lrp_pure_forward.1} parent=0 // pred_check_branch
    %27 = sbr.rel (0) target = $region13
  $region12: #{lrp_pure_forward.1} parent=0 // pred_region
    _
  $region13: #{lrp_pure_forward.1} parent=0 // pred_fallthru
    _
  // Predicated region
  $region14: #{lrp_pure_forward.1} parent=0 // pred_check
    _
  $region15: #{lrp_pure_forward.1} parent=0 // pred_check_branch
    %29 = sbr.rel (0) target = $region17
  $region16: #{lrp_pure_forward.1} parent=0 // pred_region
    _
  $region17: #{lrp_pure_forward.1} parent=0 // pred_fallthru
    _
  // Predicated region
  $region18: #{lrp_pure_forward.1} parent=0 // pred_check
    _
  $region19: #{lrp_pure_forward.1} parent=0 // pred_check_branch
    %31 = sbr.rel (0) target = $region21
  $region20: #{lrp_pure_forward.1} parent=0 // pred_region
    _
  $region21: #{lrp_pure_forward.1} parent=0 // pred_fallthru
    _
  // Predicated region
  $region22: #{lrp_pure_forward.1} parent=0 // pred_check
    _
  $region23: #{lrp_pure_forward.1} parent=0 // pred_check_branch
    %33 = sbr.rel (0) target = $region25
  $region24: #{lrp_pure_forward.1} parent=0 // pred_region
    _
  $region25: #{lrp_pure_forward.1} parent=0 // pred_fallthru
    _
  // Predicated region
  $region26: #{lrp_pure_forward.1} parent=0 // pred_check
    _
  $region27: #{lrp_pure_forward.1} parent=0 // pred_check_branch
    %35 = sbr.rel (0) target = $region29
  $region28: #{lrp_pure_forward.1} parent=0 // pred_region
    _
  $region29: #{lrp_pure_forward.1} parent=0 // pred_fallthru
    _
  // Predicated region
  $region30: #{lrp_pure_forward.1} parent=0 // pred_check
    _
  $region31: #{lrp_pure_forward.1} parent=0 // pred_check_branch
    %37 = sbr.rel (0) target = $region33
  $region32: #{lrp_pure_forward.1} parent=0 // pred_region
    _
  $region33: #{lrp_pure_forward.1} parent=0 // pred_fallthru
    _
  // Predicated region
  $region34: #{lrp_pure_forward.1} parent=0 // pred_check
    _
  $region35: #{lrp_pure_forward.1} parent=0 // pred_check_branch
    %39 = sbr.rel (0) target = $region37
  $region36: #{lrp_pure_forward.1} parent=0 // pred_region
    _
  $region37: #{lrp_pure_forward.1} parent=0 // pred_fallthru
    _
  // Predicated region
  $region38: #{lrp_pure_forward.1} parent=0 // pred_check
    _
  $region39: #{lrp_pure_forward.1} parent=0 // pred_check_branch
    %41 = sbr.rel (0) target = $region41
  $region40: #{lrp_pure_forward.1} parent=0 // pred_region
    _
  $region41: #{lrp_pure_forward.1} parent=0 // pred_fallthru
    _
  // Predicated region
  $region42: #{lrp_pure_forward.1} parent=0 // pred_check
    _
  $region43: #{lrp_pure_forward.1} parent=0 // pred_check_branch
    %43 = sbr.rel (0) target = $region45
  $region44: #{lrp_pure_forward.1} parent=0 // pred_region
    _
  $region45: #{lrp_pure_forward.1} parent=0 // pred_fallthru
    _
  // Predicated region
  $region46: #{lrp_pure_forward.1} parent=0 // pred_check
    _
  $region47: #{lrp_pure_forward.1} parent=0 // pred_check_branch
    %45 = sbr.rel (0) target = $region49
  $region48: #{lrp_pure_forward.1} parent=0 // pred_region
    _
  $region49: #{lrp_pure_forward.1} parent=0 // pred_fallthru
    _
  // Predicated region
  $region50: #{lrp_pure_forward.1} parent=0 // pred_check
    _
  $region51: #{lrp_pure_forward.1} parent=0 // pred_check_branch
    %47 = sbr.rel (0) target = $region53
  $region52: #{lrp_pure_forward.1} parent=0 // pred_region
    _
  $region53: #{lrp_pure_forward.1} parent=0 // pred_fallthru
    _
  // Predicated region
  $region54: #{lrp_pure_forward.1} parent=0 // pred_check
    _
  $region55: #{lrp_pure_forward.1} parent=0 // pred_check_branch
    %49 = sbr.rel (0) target = $region57
  $region56: #{lrp_pure_forward.1} parent=0 // pred_region
    _
  $region57: #{lrp_pure_forward.1} parent=0 // pred_fallthru
    _
  // Predicated region
  $region58: #{lrp_pure_forward.1} parent=0 // pred_check
    _
  $region59: #{lrp_pure_forward.1} parent=0 // pred_check_branch
    %51 = sbr.rel (0) target = $region61
  $region60: #{lrp_pure_forward.1} parent=0 // pred_region
    _
  $region61: #{lrp_pure_forward.1} parent=0 // pred_fallthru
    _
  %v52 = vld [vmem:[%s1] sm:$0xff]
  %v53 = vld [vmem:[%s1 + $0x8] sm:$0xff]
  %v54 = vld [vmem:[%s1 + $0x10] sm:$0xff]
  %v55 = vld [vmem:[%s1 + $0x18] sm:$0xff]
  %v56 = vld [vmem:[%s1 + $0x20] sm:$0xff]
  %v57 = vld [vmem:[%s1 + $0x28] sm:$0xff]
  %v58 = vld [vmem:[%s1 + $0x30] sm:$0xff]
  %v59 = vld [vmem:[%s1 + $0x38] sm:$0xff]
  %v60 = vld [vmem:[%s1 + $0x40] sm:$0xff]
  %v61 = vld [vmem:[%s1 + $0x48] sm:$0xff]
  %v62 = vld [vmem:[%s1 + $0x50] sm:$0xff]
  %v63 = vld [vmem:[%s1 + $0x58] sm:$0xff]
  %v64 = vld [vmem:[%s6] sm:$0xff]
  %v65 = vld [vmem:[%s6 + $0x8] sm:$0xf]
  %vm66 = vcmask 97280
  %v68 = vsel %vm66, %v52, 0
  %v71 = vsel %vm66, %v53, 0
  %v74 = vsel %vm66, %v54, 0
  %v77 = vsel %vm66, %v55, 0
  %v80 = vsel %vm66, %v56, 0
  %v83 = vsel %vm66, %v57, 0
  %v86 = vsel %vm66, %v58, 0
  %v89 = vsel %vm66, %v59, 0
  %v92 = vsel %vm66, %v60, 0
  %v95 = vsel %vm66, %v61, 0
  %v98 = vsel %vm66, %v62, 0
  %v101 = vsel %vm66, %v63, 0
  %vm103 = vcmask 1043456
  %v105 = vsel %vm103, %v65, 0
  %107 = vmatprep.subr.mxu0 0.0
  %108 = vmatpush1.msra.mxu0 0.0
  %109 = vmatprep.subr.mxu0 0.0
  %110 = vmatpush1.msra.mxu0 0.0
  %111 = vmatprep.subr.mxu0 0.0
  %112 = vmatpush1.msra.mxu0 0.0
  %113 = vmatprep.subr.mxu0 0.0
  %114 = vmatpush1.msra.mxu0 0.0
  %115 = vmatprep.subr.mxu0 0.0
  %116 = vmatpush1.msra.mxu0 0.0
  %117 = vmatprep.subr.mxu0 0.0
  %118 = vmatpush1.msra.mxu0 0.0
  %119 = vmatprep.subr.mxu0 0.0
  %120 = vmatpush1.msra.mxu0 0.0
  %121 = vmatprep.subr.mxu0 0.0
  %122 = vmatpush1.msra.mxu0 0.0
  %123 = vmatprep.subr.mxu0 0.0
  %124 = vmatpush1.msra.mxu0 0.0
  %125 = vmatprep.subr.mxu0 0.0
  %126 = vmatpush1.msra.mxu0 0.0
  %127 = vmatprep.subr.mxu0 0.0
  %128 = vmatpush1.msra.mxu0 0.0
  %129 = vmatprep.subr.mxu0 0.0
  %130 = vmatpush1.msra.mxu0 0.0
  %131 = vmatprep.subr.mxu0 0.0
  %132 = vmatpush1.msra.mxu0 0.0
  %133 = vmatprep.subr.mxu0 0.0
  %134 = vmatpush1.msra.mxu0 0.0
  %135 = vmatprep.subr.mxu0 0.0
  %136 = vmatpush1.msra.mxu0 %v105
  %137 = vmatprep.subr.mxu0 0.0
  %138 = vmatpush1.msra.mxu0 %v64
  %139 = vmatprep.subr.mxu0 0.0
  %140 = vmatpush2.msra.mxu0 0.0
  %141 = vmatprep.subr.mxu0 0.0
  %142 = vmatpush2.msra.mxu0 0.0
  %143 = vmatprep.subr.mxu0 0.0
  %144 = vmatpush2.msra.mxu0 0.0
  %145 = vmatprep.subr.mxu0 0.0
  %146 = vmatpush2.msra.mxu0 0.0
  %147 = vmatprep.subr.mxu0 0.0
  %148 = vmatpush2.msra.mxu0 0.0
  %149 = vmatprep.subr.mxu0 0.0
  %150 = vmatpush2.msra.mxu0 0.0
  %151 = vmatprep.subr.mxu0 0.0
  %152 = vmatpush2.msra.mxu0 0.0
  %153 = vmatprep.subr.mxu0 0.0
  %154 = vmatpush2.msra.mxu0 0.0
  %155 = vmatprep.subr.mxu0 0.0
  %156 = vmatpush2.msra.mxu0 0.0
  %157 = vmatprep.subr.mxu0 0.0
  %158 = vmatpush2.msra.mxu0 0.0
  %159 = vmatprep.subr.mxu0 0.0
  %160 = vmatpush2.msra.mxu0 0.0
  %161 = vmatprep.subr.mxu0 0.0
  %162 = vmatpush2.msra.mxu0 0.0
  %163 = vmatprep.subr.mxu0 0.0
  %164 = vmatpush2.msra.mxu0 0.0
  %165 = vmatprep.subr.mxu0 0.0
  %166 = vmatpush2.msra.mxu0 0.0
  %167 = vmatprep.subr.mxu0 0.0
  %168 = vmatpush2.msra.mxu0 0.0
  %169 = vmatprep.subr.mxu0 0.0
  %170 = vmatpush2.msra.mxu0 0.0
  %171 = vmatprep.mubr.f32.mxu0 0.0
  %172 = vmatmul.mubr.f32.gmra.mxu0 %v68
  %v173 = vpop.f32.mrf.mxu0
  %v174 = vadd.f32 0.0, %v173
  %v175 = vpop.f32.mrf.mxu0
  %176 = vmatprep.mubr.f32.mxu0 0.0
  %177 = vmatmul.mubr.f32.gmra.mxu0 %v71
  %v178 = vpop.f32.mrf.mxu0
  %v179 = vadd.f32 0.0, %v178
  %v180 = vpop.f32.mrf.mxu0
  %181 = vmatprep.mubr.f32.mxu0 0.0
  %182 = vmatmul.mubr.f32.gmra.mxu0 %v74
  %v183 = vpop.f32.mrf.mxu0
  %v184 = vadd.f32 0.0, %v183
  %v185 = vpop.f32.mrf.mxu0
  %186 = vmatprep.mubr.f32.mxu0 0.0
  %187 = vmatmul.mubr.f32.gmra.mxu0 %v77
  %v188 = vpop.f32.mrf.mxu0
  %v189 = vadd.f32 0.0, %v188
  %v190 = vpop.f32.mrf.mxu0
  %191 = vmatprep.mubr.f32.mxu0 0.0
  %192 = vmatmul.mubr.f32.gmra.mxu0 %v80
  %v193 = vpop.f32.mrf.mxu0
  %v194 = vadd.f32 0.0, %v193
  %v195 = vpop.f32.mrf.mxu0
  %196 = vmatprep.mubr.f32.mxu0 0.0
  %197 = vmatmul.mubr.f32.gmra.mxu0 %v83
  %v198 = vpop.f32.mrf.mxu0
  %v199 = vadd.f32 0.0, %v198
  %v200 = vpop.f32.mrf.mxu0
  %201 = vmatprep.mubr.f32.mxu0 0.0
  %202 = vmatmul.mubr.f32.gmra.mxu0 %v86
  %v203 = vpop.f32.mrf.mxu0
  %v204 = vadd.f32 0.0, %v203
  %v205 = vpop.f32.mrf.mxu0
  %206 = vmatprep.mubr.f32.mxu0 0.0
  %207 = vmatmul.mubr.f32.gmra.mxu0 %v89
  %v208 = vpop.f32.mrf.mxu0
  %v209 = vadd.f32 0.0, %v208
  %v210 = vpop.f32.mrf.mxu0
  %211 = vmatprep.mubr.f32.mxu0 0.0
  %212 = vmatmul.mubr.f32.gmra.mxu0 %v92
  %v213 = vpop.f32.mrf.mxu0
  %v214 = vadd.f32 0.0, %v213
  %v215 = vpop.f32.mrf.mxu0
  %216 = vmatprep.mubr.f32.mxu0 0.0
  %217 = vmatmul.mubr.f32.gmra.mxu0 %v95
  %v218 = vpop.f32.mrf.mxu0
  %v219 = vadd.f32 0.0, %v218
  %v220 = vpop.f32.mrf.mxu0
  %221 = vmatprep.mubr.f32.mxu0 0.0
  %222 = vmatmul.mubr.f32.gmra.mxu0 %v98
  %v223 = vpop.f32.mrf.mxu0
  %v224 = vadd.f32 0.0, %v223
  %v225 = vpop.f32.mrf.mxu0
  %226 = vmatprep.mubr.f32.mxu0 0.0
  %227 = vmatmul.mubr.f32.gmra.mxu0 %v101
  %v228 = vpop.f32.mrf.mxu0
  %v229 = vadd.f32 0.0, %v228
  %v230 = vpop.f32.mrf.mxu0
  %231 = vdwg.mxu0
  %vm232 = vcmask 105472
  %233 = vst.msk [vmem:[#allocation2] sm:$0xff] %vm232, %v174
  %234 = vst.msk [vmem:[#allocation2 + $0x8] sm:$0xff] %vm232, %v179
  %235 = vst.msk [vmem:[#allocation2 + $0x10] sm:$0xff] %vm232, %v184
  %236 = vst.msk [vmem:[#allocation2 + $0x18] sm:$0xff] %vm232, %v189
  %237 = vst.msk [vmem:[#allocation2 + $0x20] sm:$0xff] %vm232, %v194
  %238 = vst.msk [vmem:[#allocation2 + $0x28] sm:$0xff] %vm232, %v199
  %239 = vst.msk [vmem:[#allocation2 + $0x30] sm:$0xff] %vm232, %v204
  %240 = vst.msk [vmem:[#allocation2 + $0x38] sm:$0xff] %vm232, %v209
  %241 = vst.msk [vmem:[#allocation2 + $0x40] sm:$0xff] %vm232, %v214
  %242 = vst.msk [vmem:[#allocation2 + $0x48] sm:$0xff] %vm232, %v219
  %243 = vst.msk [vmem:[#allocation2 + $0x50] sm:$0xff] %vm232, %v224
  %244 = vst.msk [vmem:[#allocation2 + $0x58] sm:$0xff] %vm232, %v229
  %v245 = vld [vmem:[%s1] sm:$0xff]
  %v246 = vld [vmem:[%s1 + $0x8] sm:$0xff]
  %v247 = vld [vmem:[%s1 + $0x10] sm:$0xff]
  %v248 = vld [vmem:[%s1 + $0x18] sm:$0xff]
  %v249 = vld [vmem:[%s1 + $0x20] sm:$0xff]
  %v250 = vld [vmem:[%s1 + $0x28] sm:$0xff]
  %v251 = vld [vmem:[%s1 + $0x30] sm:$0xff]
  %v252 = vld [vmem:[%s1 + $0x38] sm:$0xff]
  %v253 = vld [vmem:[%s1 + $0x40] sm:$0xff]
  %v254 = vld [vmem:[%s1 + $0x48] sm:$0xff]
  %v255 = vld [vmem:[%s1 + $0x50] sm:$0xff]
  %v256 = vld [vmem:[%s1 + $0x58] sm:$0xff]
  %s257 = scalar_lea.vmem %s6, 16
  %v258 = vld [vmem:[%s257] sm:$0xff]
  %v259 = vld [vmem:[%s257 + $0x8] sm:$0xf]
  %v261 = vsel %vm66, %v245, 0
  %v264 = vsel %vm66, %v246, 0
  %v267 = vsel %vm66, %v247, 0
  %v270 = vsel %vm66, %v248, 0
  %v273 = vsel %vm66, %v249, 0
  %v276 = vsel %vm66, %v250, 0
  %v279 = vsel %vm66, %v251, 0
  %v282 = vsel %vm66, %v252, 0
  %v285 = vsel %vm66, %v253, 0
  %v288 = vsel %vm66, %v254, 0
  %v291 = vsel %vm66, %v255, 0
  %v294 = vsel %vm66, %v256, 0
  %v297 = vsel %vm103, %v259, 0
  %299 = vmatprep.subr.mxu0 0.0
  %300 = vmatpush1.msra.mxu0 0.0
  %301 = vmatprep.subr.mxu0 0.0
  %302 = vmatpush1.msra.mxu0 0.0
  %303 = vmatprep.subr.mxu0 0.0
  %304 = vmatpush1.msra.mxu0 0.0
  %305 = vmatprep.subr.mxu0 0.0
  %306 = vmatpush1.msra.mxu0 0.0
  %307 = vmatprep.subr.mxu0 0.0
  %308 = vmatpush1.msra.mxu0 0.0
  %309 = vmatprep.subr.mxu0 0.0
  %310 = vmatpush1.msra.mxu0 0.0
  %311 = vmatprep.subr.mxu0 0.0
  %312 = vmatpush1.msra.mxu0 0.0
  %313 = vmatprep.subr.mxu0 0.0
  %314 = vmatpush1.msra.mxu0 0.0
  %315 = vmatprep.subr.mxu0 0.0
  %316 = vmatpush1.msra.mxu0 0.0
  %317 = vmatprep.subr.mxu0 0.0
  %318 = vmatpush1.msra.mxu0 0.0
  %319 = vmatprep.subr.mxu0 0.0
  %320 = vmatpush1.msra.mxu0 0.0
  %321 = vmatprep.subr.mxu0 0.0
  %322 = vmatpush1.msra.mxu0 0.0
  %323 = vmatprep.subr.mxu0 0.0
  %324 = vmatpush1.msra.mxu0 0.0
  %325 = vmatprep.subr.mxu0 0.0
  %326 = vmatpush1.msra.mxu0 0.0
  %327 = vmatprep.subr.mxu0 0.0
  %328 = vmatpush1.msra.mxu0 %v297
  %329 = vmatprep.subr.mxu0 0.0
  %330 = vmatpush1.msra.mxu0 %v258
  %331 = vmatprep.subr.mxu0 0.0
  %332 = vmatpush2.msra.mxu0 0.0
  %333 = vmatprep.subr.mxu0 0.0
  %334 = vmatpush2.msra.mxu0 0.0
  %335 = vmatprep.subr.mxu0 0.0
  %336 = vmatpush2.msra.mxu0 0.0
  %337 = vmatprep.subr.mxu0 0.0
  %338 = vmatpush2.msra.mxu0 0.0
  %339 = vmatprep.subr.mxu0 0.0
  %340 = vmatpush2.msra.mxu0 0.0
  %341 = vmatprep.subr.mxu0 0.0
  %342 = vmatpush2.msra.mxu0 0.0
  %343 = vmatprep.subr.mxu0 0.0
  %344 = vmatpush2.msra.mxu0 0.0
  %345 = vmatprep.subr.mxu0 0.0
  %346 = vmatpush2.msra.mxu0 0.0
  %347 = vmatprep.subr.mxu0 0.0
  %348 = vmatpush2.msra.mxu0 0.0
  %349 = vmatprep.subr.mxu0 0.0
  %350 = vmatpush2.msra.mxu0 0.0
  %351 = vmatprep.subr.mxu0 0.0
  %352 = vmatpush2.msra.mxu0 0.0
  %353 = vmatprep.subr.mxu0 0.0
  %354 = vmatpush2.msra.mxu0 0.0
  %355 = vmatprep.subr.mxu0 0.0
  %356 = vmatpush2.msra.mxu0 0.0
  %357 = vmatprep.subr.mxu0 0.0
  %358 = vmatpush2.msra.mxu0 0.0
  %359 = vmatprep.subr.mxu0 0.0
  %360 = vmatpush2.msra.mxu0 0.0
  %361 = vmatprep.subr.mxu0 0.0
  %362 = vmatpush2.msra.mxu0 0.0
  %363 = vmatprep.mubr.f32.mxu0 0.0
  %364 = vmatmul.mubr.f32.gmra.mxu0 %v261
  %v365 = vpop.f32.mrf.mxu0
  %v366 = vadd.f32 0.0, %v365
  %v367 = vpop.f32.mrf.mxu0
  %368 = vmatprep.mubr.f32.mxu0 0.0
  %369 = vmatmul.mubr.f32.gmra.mxu0 %v264
  %v370 = vpop.f32.mrf.mxu0
  %v371 = vadd.f32 0.0, %v370
  %v372 = vpop.f32.mrf.mxu0
  %373 = vmatprep.mubr.f32.mxu0 0.0
  %374 = vmatmul.mubr.f32.gmra.mxu0 %v267
  %v375 = vpop.f32.mrf.mxu0
  %v376 = vadd.f32 0.0, %v375
  %v377 = vpop.f32.mrf.mxu0
  %378 = vmatprep.mubr.f32.mxu0 0.0
  %379 = vmatmul.mubr.f32.gmra.mxu0 %v270
  %v380 = vpop.f32.mrf.mxu0
  %v381 = vadd.f32 0.0, %v380
  %v382 = vpop.f32.mrf.mxu0
  %383 = vmatprep.mubr.f32.mxu0 0.0
  %384 = vmatmul.mubr.f32.gmra.mxu0 %v273
  %v385 = vpop.f32.mrf.mxu0
  %v386 = vadd.f32 0.0, %v385
  %v387 = vpop.f32.mrf.mxu0
  %388 = vmatprep.mubr.f32.mxu0 0.0
  %389 = vmatmul.mubr.f32.gmra.mxu0 %v276
  %v390 = vpop.f32.mrf.mxu0
  %v391 = vadd.f32 0.0, %v390
  %v392 = vpop.f32.mrf.mxu0
  %393 = vmatprep.mubr.f32.mxu0 0.0
  %394 = vmatmul.mubr.f32.gmra.mxu0 %v279
  %v395 = vpop.f32.mrf.mxu0
  %v396 = vadd.f32 0.0, %v395
  %v397 = vpop.f32.mrf.mxu0
  %398 = vmatprep.mubr.f32.mxu0 0.0
  %399 = vmatmul.mubr.f32.gmra.mxu0 %v282
  %v400 = vpop.f32.mrf.mxu0
  %v401 = vadd.f32 0.0, %v400
  %v402 = vpop.f32.mrf.mxu0
  %403 = vmatprep.mubr.f32.mxu0 0.0
  %404 = vmatmul.mubr.f32.gmra.mxu0 %v285
  %v405 = vpop.f32.mrf.mxu0
  %v406 = vadd.f32 0.0, %v405
  %v407 = vpop.f32.mrf.mxu0
  %408 = vmatprep.mubr.f32.mxu0 0.0
  %409 = vmatmul.mubr.f32.gmra.mxu0 %v288
  %v410 = vpop.f32.mrf.mxu0
  %v411 = vadd.f32 0.0, %v410
  %v412 = vpop.f32.mrf.mxu0
  %413 = vmatprep.mubr.f32.mxu0 0.0
  %414 = vmatmul.mubr.f32.gmra.mxu0 %v291
  %v415 = vpop.f32.mrf.mxu0
  %v416 = vadd.f32 0.0, %v415
  %v417 = vpop.f32.mrf.mxu0
  %418 = vmatprep.mubr.f32.mxu0 0.0
  %419 = vmatmul.mubr.f32.gmra.mxu0 %v294
  %v420 = vpop.f32.mrf.mxu0
  %v421 = vadd.f32 0.0, %v420
  %v422 = vpop.f32.mrf.mxu0
  %423 = vdwg.mxu0
  %s424 = scalar_lea.vmem [#allocation2], 96
  %425 = vst.msk [vmem:[%s424] sm:$0xff] %vm232, %v366
  %426 = vst.msk [vmem:[%s424 + $0x8] sm:$0xff] %vm232, %v371
  %427 = vst.msk [vmem:[%s424 + $0x10] sm:$0xff] %vm232, %v376
  %428 = vst.msk [vmem:[%s424 + $0x18] sm:$0xff] %vm232, %v381
  %429 = vst.msk [vmem:[%s424 + $0x20] sm:$0xff] %vm232, %v386
  %430 = vst.msk [vmem:[%s424 + $0x28] sm:$0xff] %vm232, %v391
  %431 = vst.msk [vmem:[%s424 + $0x30] sm:$0xff] %vm232, %v396
  %432 = vst.msk [vmem:[%s424 + $0x38] sm:$0xff] %vm232, %v401
  %433 = vst.msk [vmem:[%s424 + $0x40] sm:$0xff] %vm232, %v406
  %434 = vst.msk [vmem:[%s424 + $0x48] sm:$0xff] %vm232, %v411
  %435 = vst.msk [vmem:[%s424 + $0x50] sm:$0xff] %vm232, %v416
  %436 = vst.msk [vmem:[%s424 + $0x58] sm:$0xff] %vm232, %v421
  %v437 = vld [vmem:[%s1] sm:$0xff]
  %v438 = vld [vmem:[%s1 + $0x8] sm:$0xff]
  %v439 = vld [vmem:[%s1 + $0x10] sm:$0xff]
  %v440 = vld [vmem:[%s1 + $0x18] sm:$0xff]
  %v441 = vld [vmem:[%s1 + $0x20] sm:$0xff]
  %v442 = vld [vmem:[%s1 + $0x28] sm:$0xff]
  %v443 = vld [vmem:[%s1 + $0x30] sm:$0xff]
  %v444 = vld [vmem:[%s1 + $0x38] sm:$0xff]
  %v445 = vld [vmem:[%s1 + $0x40] sm:$0xff]
  %v446 = vld [vmem:[%s1 + $0x48] sm:$0xff]
  %v447 = vld [vmem:[%s1 + $0x50] sm:$0xff]
  %v448 = vld [vmem:[%s1 + $0x58] sm:$0xff]
  %s449 = scalar_lea.vmem %s6, 32
  %v450 = vld [vmem:[%s449] sm:$0xff]
  %v451 = vld [vmem:[%s449 + $0x8] sm:$0xf]
  %v453 = vsel %vm66, %v437, 0
  %v456 = vsel %vm66, %v438, 0
  %v459 = vsel %vm66, %v439, 0
  %v462 = vsel %vm66, %v440, 0
  %v465 = vsel %vm66, %v441, 0
  %v468 = vsel %vm66, %v442, 0
  %v471 = vsel %vm66, %v443, 0
  %v474 = vsel %vm66, %v444, 0
  %v477 = vsel %vm66, %v445, 0
  %v480 = vsel %vm66, %v446, 0
  %v483 = vsel %vm66, %v447, 0
  %v486 = vsel %vm66, %v448, 0
  %v489 = vsel %vm103, %v451, 0
  %491 = vmatprep.subr.mxu0 0.0
  %492 = vmatpush1.msra.mxu0 0.0
  %493 = vmatprep.subr.mxu0 0.0
  %494 = vmatpush1.msra.mxu0 0.0
  %495 = vmatprep.subr.mxu0 0.0
  %496 = vmatpush1.msra.mxu0 0.0
  %497 = vmatprep.subr.mxu0 0.0
  %498 = vmatpush1.msra.mxu0 0.0
  %499 = vmatprep.subr.mxu0 0.0
  %500 = vmatpush1.msra.mxu0 0.0
  %501 = vmatprep.subr.mxu0 0.0
  %502 = vmatpush1.msra.mxu0 0.0
  %503 = vmatprep.subr.mxu0 0.0
  %504 = vmatpush1.msra.mxu0 0.0
  %505 = vmatprep.subr.mxu0 0.0
  %506 = vmatpush1.msra.mxu0 0.0
  %507 = vmatprep.subr.mxu0 0.0
  %508 = vmatpush1.msra.mxu0 0.0
  %509 = vmatprep.subr.mxu0 0.0
  %510 = vmatpush1.msra.mxu0 0.0
  %511 = vmatprep.subr.mxu0 0.0
  %512 = vmatpush1.msra.mxu0 0.0
  %513 = vmatprep.subr.mxu0 0.0
  %514 = vmatpush1.msra.mxu0 0.0
  %515 = vmatprep.subr.mxu0 0.0
  %516 = vmatpush1.msra.mxu0 0.0
  %517 = vmatprep.subr.mxu0 0.0
  %518 = vmatpush1.msra.mxu0 0.0
  %519 = vmatprep.subr.mxu0 0.0
  %520 = vmatpush1.msra.mxu0 %v489
  %521 = vmatprep.subr.mxu0 0.0
  %522 = vmatpush1.msra.mxu0 %v450
  %523 = vmatprep.subr.mxu0 0.0
  %524 = vmatpush2.msra.mxu0 0.0
  %525 = vmatprep.subr.mxu0 0.0
  %526 = vmatpush2.msra.mxu0 0.0
  %527 = vmatprep.subr.mxu0 0.0
  %528 = vmatpush2.msra.mxu0 0.0
  %529 = vmatprep.subr.mxu0 0.0
  %530 = vmatpush2.msra.mxu0 0.0
  %531 = vmatprep.subr.mxu0 0.0
  %532 = vmatpush2.msra.mxu0 0.0
  %533 = vmatprep.subr.mxu0 0.0
  %534 = vmatpush2.msra.mxu0 0.0
  %535 = vmatprep.subr.mxu0 0.0
  %536 = vmatpush2.msra.mxu0 0.0
  %537 = vmatprep.subr.mxu0 0.0
  %538 = vmatpush2.msra.mxu0 0.0
  %539 = vmatprep.subr.mxu0 0.0
  %540 = vmatpush2.msra.mxu0 0.0
  %541 = vmatprep.subr.mxu0 0.0
  %542 = vmatpush2.msra.mxu0 0.0
  %543 = vmatprep.subr.mxu0 0.0
  %544 = vmatpush2.msra.mxu0 0.0
  %545 = vmatprep.subr.mxu0 0.0
  %546 = vmatpush2.msra.mxu0 0.0
  %547 = vmatprep.subr.mxu0 0.0
  %548 = vmatpush2.msra.mxu0 0.0
  %549 = vmatprep.subr.mxu0 0.0
  %550 = vmatpush2.msra.mxu0 0.0
  %551 = vmatprep.subr.mxu0 0.0
  %552 = vmatpush2.msra.mxu0 0.0
  %553 = vmatprep.subr.mxu0 0.0
  %554 = vmatpush2.msra.mxu0 0.0
  %555 = vmatprep.mubr.f32.mxu0 0.0
  %556 = vmatmul.mubr.f32.gmra.mxu0 %v453
  %v557 = vpop.f32.mrf.mxu0
  %v558 = vadd.f32 0.0, %v557
  %v559 = vpop.f32.mrf.mxu0
  %560 = vmatprep.mubr.f32.mxu0 0.0
  %561 = vmatmul.mubr.f32.gmra.mxu0 %v456
  %v562 = vpop.f32.mrf.mxu0
  %v563 = vadd.f32 0.0, %v562
  %v564 = vpop.f32.mrf.mxu0
  %565 = vmatprep.mubr.f32.mxu0 0.0
  %566 = vmatmul.mubr.f32.gmra.mxu0 %v459
  %v567 = vpop.f32.mrf.mxu0
  %v568 = vadd.f32 0.0, %v567
  %v569 = vpop.f32.mrf.mxu0
  %570 = vmatprep.mubr.f32.mxu0 0.0
  %571 = vmatmul.mubr.f32.gmra.mxu0 %v462
  %v572 = vpop.f32.mrf.mxu0
  %v573 = vadd.f32 0.0, %v572
  %v574 = vpop.f32.mrf.mxu0
  %575 = vmatprep.mubr.f32.mxu0 0.0
  %576 = vmatmul.mubr.f32.gmra.mxu0 %v465
  %v577 = vpop.f32.mrf.mxu0
  %v578 = vadd.f32 0.0, %v577
  %v579 = vpop.f32.mrf.mxu0
  %580 = vmatprep.mubr.f32.mxu0 0.0
  %581 = vmatmul.mubr.f32.gmra.mxu0 %v468
  %v582 = vpop.f32.mrf.mxu0
  %v583 = vadd.f32 0.0, %v582
  %v584 = vpop.f32.mrf.mxu0
  %585 = vmatprep.mubr.f32.mxu0 0.0
  %586 = vmatmul.mubr.f32.gmra.mxu0 %v471
  %v587 = vpop.f32.mrf.mxu0
  %v588 = vadd.f32 0.0, %v587
  %v589 = vpop.f32.mrf.mxu0
  %590 = vmatprep.mubr.f32.mxu0 0.0
  %591 = vmatmul.mubr.f32.gmra.mxu0 %v474
  %v592 = vpop.f32.mrf.mxu0
  %v593 = vadd.f32 0.0, %v592
  %v594 = vpop.f32.mrf.mxu0
  %595 = vmatprep.mubr.f32.mxu0 0.0
  %596 = vmatmul.mubr.f32.gmra.mxu0 %v477
  %v597 = vpop.f32.mrf.mxu0
  %v598 = vadd.f32 0.0, %v597
  %v599 = vpop.f32.mrf.mxu0
  %600 = vmatprep.mubr.f32.mxu0 0.0
  %601 = vmatmul.mubr.f32.gmra.mxu0 %v480
  %v602 = vpop.f32.mrf.mxu0
  %v603 = vadd.f32 0.0, %v602
  %v604 = vpop.f32.mrf.mxu0
  %605 = vmatprep.mubr.f32.mxu0 0.0
  %606 = vmatmul.mubr.f32.gmra.mxu0 %v483
  %v607 = vpop.f32.mrf.mxu0
  %v608 = vadd.f32 0.0, %v607
  %v609 = vpop.f32.mrf.mxu0
  %610 = vmatprep.mubr.f32.mxu0 0.0
  %611 = vmatmul.mubr.f32.gmra.mxu0 %v486
  %v612 = vpop.f32.mrf.mxu0
  %v613 = vadd.f32 0.0, %v612
  %v614 = vpop.f32.mrf.mxu0
  %615 = vdwg.mxu0
  %s616 = scalar_lea.vmem [#allocation2], 192
  %617 = vst.msk [vmem:[%s616] sm:$0xff] %vm232, %v558
  %618 = vst.msk [vmem:[%s616 + $0x8] sm:$0xff] %vm232, %v563
  %619 = vst.msk [vmem:[%s616 + $0x10] sm:$0xff] %vm232, %v568
  %620 = vst.msk [vmem:[%s616 + $0x18] sm:$0xff] %vm232, %v573
  %621 = vst.msk [vmem:[%s616 + $0x20] sm:$0xff] %vm232, %v578
  %622 = vst.msk [vmem:[%s616 + $0x28] sm:$0xff] %vm232, %v583
  %623 = vst.msk [vmem:[%s616 + $0x30] sm:$0xff] %vm232, %v588
  %624 = vst.msk [vmem:[%s616 + $0x38] sm:$0xff] %vm232, %v593
  %625 = vst.msk [vmem:[%s616 + $0x40] sm:$0xff] %vm232, %v598
  %626 = vst.msk [vmem:[%s616 + $0x48] sm:$0xff] %vm232, %v603
  %627 = vst.msk [vmem:[%s616 + $0x50] sm:$0xff] %vm232, %v608
  %628 = vst.msk [vmem:[%s616 + $0x58] sm:$0xff] %vm232, %v613
  %v629 = vld [vmem:[%s1] sm:$0xff]
  %v630 = vld [vmem:[%s1 + $0x8] sm:$0xff]
  %v631 = vld [vmem:[%s1 + $0x10] sm:$0xff]
  %v632 = vld [vmem:[%s1 + $0x18] sm:$0xff]
  %v633 = vld [vmem:[%s1 + $0x20] sm:$0xff]
  %v634 = vld [vmem:[%s1 + $0x28] sm:$0xff]
  %v635 = vld [vmem:[%s1 + $0x30] sm:$0xff]
  %v636 = vld [vmem:[%s1 + $0x38] sm:$0xff]
  %v637 = vld [vmem:[%s1 + $0x40] sm:$0xff]
  %v638 = vld [vmem:[%s1 + $0x48] sm:$0xff]
  %v639 = vld [vmem:[%s1 + $0x50] sm:$0xff]
  %v640 = vld [vmem:[%s1 + $0x58] sm:$0xff]
  %s641 = scalar_lea.vmem %s6, 48
  %v642 = vld [vmem:[%s641] sm:$0xff]
  %v643 = vld [vmem:[%s641 + $0x8] sm:$0xf]
  %v645 = vsel %vm66, %v629, 0
  %v648 = vsel %vm66, %v630, 0
  %v651 = vsel %vm66, %v631, 0
  %v654 = vsel %vm66, %v632, 0
  %v657 = vsel %vm66, %v633, 0
  %v660 = vsel %vm66, %v634, 0
  %v663 = vsel %vm66, %v635, 0
  %v666 = vsel %vm66, %v636, 0
  %v669 = vsel %vm66, %v637, 0
  %v672 = vsel %vm66, %v638, 0
  %v675 = vsel %vm66, %v639, 0
  %v678 = vsel %vm66, %v640, 0
  %v681 = vsel %vm103, %v643, 0
  %683 = vmatprep.subr.mxu0 0.0
  %684 = vmatpush1.msra.mxu0 0.0
  %685 = vmatprep.subr.mxu0 0.0
  %686 = vmatpush1.msra.mxu0 0.0
  %687 = vmatprep.subr.mxu0 0.0
  %688 = vmatpush1.msra.mxu0 0.0
  %689 = vmatprep.subr.mxu0 0.0
  %690 = vmatpush1.msra.mxu0 0.0
  %691 = vmatprep.subr.mxu0 0.0
  %692 = vmatpush1.msra.mxu0 0.0
  %693 = vmatprep.subr.mxu0 0.0
  %694 = vmatpush1.msra.mxu0 0.0
  %695 = vmatprep.subr.mxu0 0.0
  %696 = vmatpush1.msra.mxu0 0.0
  %697 = vmatprep.subr.mxu0 0.0
  %698 = vmatpush1.msra.mxu0 0.0
  %699 = vmatprep.subr.mxu0 0.0
  %700 = vmatpush1.msra.mxu0 0.0
  %701 = vmatprep.subr.mxu0 0.0
  %702 = vmatpush1.msra.mxu0 0.0
  %703 = vmatprep.subr.mxu0 0.0
  %704 = vmatpush1.msra.mxu0 0.0
  %705 = vmatprep.subr.mxu0 0.0
  %706 = vmatpush1.msra.mxu0 0.0
  %707 = vmatprep.subr.mxu0 0.0
  %708 = vmatpush1.msra.mxu0 0.0
  %709 = vmatprep.subr.mxu0 0.0
  %710 = vmatpush1.msra.mxu0 0.0
  %711 = vmatprep.subr.mxu0 0.0
  %712 = vmatpush1.msra.mxu0 %v681
  %713 = vmatprep.subr.mxu0 0.0
  %714 = vmatpush1.msra.mxu0 %v642
  %715 = vmatprep.subr.mxu0 0.0
  %716 = vmatpush2.msra.mxu0 0.0
  %717 = vmatprep.subr.mxu0 0.0
  %718 = vmatpush2.msra.mxu0 0.0
  %719 = vmatprep.subr.mxu0 0.0
  %720 = vmatpush2.msra.mxu0 0.0
  %721 = vmatprep.subr.mxu0 0.0
  %722 = vmatpush2.msra.mxu0 0.0
  %723 = vmatprep.subr.mxu0 0.0
  %724 = vmatpush2.msra.mxu0 0.0
  %725 = vmatprep.subr.mxu0 0.0
  %726 = vmatpush2.msra.mxu0 0.0
  %727 = vmatprep.subr.mxu0 0.0
  %728 = vmatpush2.msra.mxu0 0.0
  %729 = vmatprep.subr.mxu0 0.0
  %730 = vmatpush2.msra.mxu0 0.0
  %731 = vmatprep.subr.mxu0 0.0
  %732 = vmatpush2.msra.mxu0 0.0
  %733 = vmatprep.subr.mxu0 0.0
  %734 = vmatpush2.msra.mxu0 0.0
  %735 = vmatprep.subr.mxu0 0.0
  %736 = vmatpush2.msra.mxu0 0.0
  %737 = vmatprep.subr.mxu0 0.0
  %738 = vmatpush2.msra.mxu0 0.0
  %739 = vmatprep.subr.mxu0 0.0
  %740 = vmatpush2.msra.mxu0 0.0
  %741 = vmatprep.subr.mxu0 0.0
  %742 = vmatpush2.msra.mxu0 0.0
  %743 = vmatprep.subr.mxu0 0.0
  %744 = vmatpush2.msra.mxu0 0.0
  %745 = vmatprep.subr.mxu0 0.0
  %746 = vmatpush2.msra.mxu0 0.0
  %747 = vmatprep.mubr.f32.mxu0 0.0
  %748 = vmatmul.mubr.f32.gmra.mxu0 %v645
  %v749 = vpop.f32.mrf.mxu0
  %v750 = vadd.f32 0.0, %v749
  %v751 = vpop.f32.mrf.mxu0
  %752 = vmatprep.mubr.f32.mxu0 0.0
  %753 = vmatmul.mubr.f32.gmra.mxu0 %v648
  %v754 = vpop.f32.mrf.mxu0
  %v755 = vadd.f32 0.0, %v754
  %v756 = vpop.f32.mrf.mxu0
  %757 = vmatprep.mubr.f32.mxu0 0.0
  %758 = vmatmul.mubr.f32.gmra.mxu0 %v651
  %v759 = vpop.f32.mrf.mxu0
  %v760 = vadd.f32 0.0, %v759
  %v761 = vpop.f32.mrf.mxu0
  %762 = vmatprep.mubr.f32.mxu0 0.0
  %763 = vmatmul.mubr.f32.gmra.mxu0 %v654
  %v764 = vpop.f32.mrf.mxu0
  %v765 = vadd.f32 0.0, %v764
  %v766 = vpop.f32.mrf.mxu0
  %767 = vmatprep.mubr.f32.mxu0 0.0
  %768 = vmatmul.mubr.f32.gmra.mxu0 %v657
  %v769 = vpop.f32.mrf.mxu0
  %v770 = vadd.f32 0.0, %v769
  %v771 = vpop.f32.mrf.mxu0
  %772 = vmatprep.mubr.f32.mxu0 0.0
  %773 = vmatmul.mubr.f32.gmra.mxu0 %v660
  %v774 = vpop.f32.mrf.mxu0
  %v775 = vadd.f32 0.0, %v774
  %v776 = vpop.f32.mrf.mxu0
  %777 = vmatprep.mubr.f32.mxu0 0.0
  %778 = vmatmul.mubr.f32.gmra.mxu0 %v663
  %v779 = vpop.f32.mrf.mxu0
  %v780 = vadd.f32 0.0, %v779
  %v781 = vpop.f32.mrf.mxu0
  %782 = vmatprep.mubr.f32.mxu0 0.0
  %783 = vmatmul.mubr.f32.gmra.mxu0 %v666
  %v784 = vpop.f32.mrf.mxu0
  %v785 = vadd.f32 0.0, %v784
  %v786 = vpop.f32.mrf.mxu0
  %787 = vmatprep.mubr.f32.mxu0 0.0
  %788 = vmatmul.mubr.f32.gmra.mxu0 %v669
  %v789 = vpop.f32.mrf.mxu0
  %v790 = vadd.f32 0.0, %v789
  %v791 = vpop.f32.mrf.mxu0
  %792 = vmatprep.mubr.f32.mxu0 0.0
  %793 = vmatmul.mubr.f32.gmra.mxu0 %v672
  %v794 = vpop.f32.mrf.mxu0
  %v795 = vadd.f32 0.0, %v794
  %v796 = vpop.f32.mrf.mxu0
  %797 = vmatprep.mubr.f32.mxu0 0.0
  %798 = vmatmul.mubr.f32.gmra.mxu0 %v675
  %v799 = vpop.f32.mrf.mxu0
  %v800 = vadd.f32 0.0, %v799
  %v801 = vpop.f32.mrf.mxu0
  %802 = vmatprep.mubr.f32.mxu0 0.0
  %803 = vmatmul.mubr.f32.gmra.mxu0 %v678
  %v804 = vpop.f32.mrf.mxu0
  %v805 = vadd.f32 0.0, %v804
  %v806 = vpop.f32.mrf.mxu0
  %807 = vdwg.mxu0
  %s808 = scalar_lea.vmem [#allocation2], 288
  %809 = vst.msk [vmem:[%s808] sm:$0xff] %vm232, %v750
  %810 = vst.msk [vmem:[%s808 + $0x8] sm:$0xff] %vm232, %v755
  %811 = vst.msk [vmem:[%s808 + $0x10] sm:$0xff] %vm232, %v760
  %812 = vst.msk [vmem:[%s808 + $0x18] sm:$0xff] %vm232, %v765
  %813 = vst.msk [vmem:[%s808 + $0x20] sm:$0xff] %vm232, %v770
  %814 = vst.msk [vmem:[%s808 + $0x28] sm:$0xff] %vm232, %v775
  %815 = vst.msk [vmem:[%s808 + $0x30] sm:$0xff] %vm232, %v780
  %816 = vst.msk [vmem:[%s808 + $0x38] sm:$0xff] %vm232, %v785
  %817 = vst.msk [vmem:[%s808 + $0x40] sm:$0xff] %vm232, %v790
  %818 = vst.msk [vmem:[%s808 + $0x48] sm:$0xff] %vm232, %v795
  %819 = vst.msk [vmem:[%s808 + $0x50] sm:$0xff] %vm232, %v800
  %820 = vst.msk [vmem:[%s808 + $0x58] sm:$0xff] %vm232, %v805
  %v821 = vld [vmem:[%s3] sm:$0xff]
  %v822 = vld [vmem:[%s9] sm:$0x1]
  %824 = vset.pattern.permute.xlu0 0
  %825 = vperm.xlu0 %824, %v821
  %v826 = vpop.permute.xlu0 %825
  %v829 = vlaneseq
  %v830 = vshrl.u32 %v829, 7
  %v831 = vsub.s32 0, %v830
  %v832 = vrot.slane %v822, %v831
  %v834 = vmul.f32 %v826, %v832
  %v835 = vld [vmem:[%s10] sm:$0x1]
  %v837 = vlaneseq
  %v838 = vshrl.u32 %v837, 7
  %v839 = vsub.s32 0, %v838
  %v840 = vrot.slane %v835, %v839
  %v842 = vadd.f32 %v834, %v840
  %v843 = vmax.f32 %v842, 0.0
  %v844 = vld [vmem:[%s11] sm:$0xff]
  %v845 = vld [vmem:[%s11 + $0x8] sm:$0xff]
  %v846 = vld [vmem:[%s11 + $0x10] sm:$0xff]
  %v847 = vld [vmem:[%s11 + $0x18] sm:$0x3]
  %v848 = vld [vmem:[%s12] sm:$0x1]
  %v850 = vlaneseq
  %v851 = vshrl.u32 %v850, 7
  %v852 = vsub.s32 0, %v851
  %v853 = vrot.slane %v848, %v852
  %vm855 = vcmask 211968
  %v857 = vsel %vm855, %v843, 0
  %vm859 = vcmask 1041408
  %v861 = vsel %vm859, %v847, 0
  %863 = vmatprep.subr.mxu0 0.0
  %864 = vmatpush1.msra.mxu0 0.0
  %865 = vmatprep.subr.mxu0 0.0
  %866 = vmatpush1.msra.mxu0 0.0
  %867 = vmatprep.subr.mxu0 0.0
  %868 = vmatpush1.msra.mxu0 0.0
  %869 = vmatprep.subr.mxu0 0.0
  %870 = vmatpush1.msra.mxu0 0.0
  %871 = vmatprep.subr.mxu0 0.0
  %872 = vmatpush1.msra.mxu0 0.0
  %873 = vmatprep.subr.mxu0 0.0
  %874 = vmatpush1.msra.mxu0 0.0
  %875 = vmatprep.subr.mxu0 0.0
  %876 = vmatpush1.msra.mxu0 0.0
  %877 = vmatprep.subr.mxu0 0.0
  %878 = vmatpush1.msra.mxu0 0.0
  %879 = vmatprep.subr.mxu0 0.0
  %880 = vmatpush1.msra.mxu0 0.0
  %881 = vmatprep.subr.mxu0 0.0
  %882 = vmatpush1.msra.mxu0 0.0
  %883 = vmatprep.subr.mxu0 0.0
  %884 = vmatpush1.msra.mxu0 0.0
  %885 = vmatprep.subr.mxu0 0.0
  %886 = vmatpush1.msra.mxu0 0.0
  %887 = vmatprep.subr.mxu0 0.0
  %888 = vmatpush1.msra.mxu0 %v861
  %889 = vmatprep.subr.mxu0 0.0
  %890 = vmatpush1.msra.mxu0 %v846
  %891 = vmatprep.subr.mxu0 0.0
  %892 = vmatpush1.msra.mxu0 %v845
  %893 = vmatprep.subr.mxu0 0.0
  %894 = vmatpush1.msra.mxu0 %v844
  %895 = vmatprep.subr.mxu0 0.0
  %896 = vmatpush2.msra.mxu0 0.0
  %897 = vmatprep.subr.mxu0 0.0
  %898 = vmatpush2.msra.mxu0 0.0
  %899 = vmatprep.subr.mxu0 0.0
  %900 = vmatpush2.msra.mxu0 0.0
  %901 = vmatprep.subr.mxu0 0.0
  %902 = vmatpush2.msra.mxu0 0.0
  %903 = vmatprep.subr.mxu0 0.0
  %904 = vmatpush2.msra.mxu0 0.0
  %905 = vmatprep.subr.mxu0 0.0
  %906 = vmatpush2.msra.mxu0 0.0
  %907 = vmatprep.subr.mxu0 0.0
  %908 = vmatpush2.msra.mxu0 0.0
  %909 = vmatprep.subr.mxu0 0.0
  %910 = vmatpush2.msra.mxu0 0.0
  %911 = vmatprep.subr.mxu0 0.0
  %912 = vmatpush2.msra.mxu0 0.0
  %913 = vmatprep.subr.mxu0 0.0
  %914 = vmatpush2.msra.mxu0 0.0
  %915 = vmatprep.subr.mxu0 0.0
  %916 = vmatpush2.msra.mxu0 0.0
  %917 = vmatprep.subr.mxu0 0.0
  %918 = vmatpush2.msra.mxu0 0.0
  %919 = vmatprep.subr.mxu0 0.0
  %920 = vmatpush2.msra.mxu0 0.0
  %921 = vmatprep.subr.mxu0 0.0
  %922 = vmatpush2.msra.mxu0 0.0
  %923 = vmatprep.subr.mxu0 0.0
  %924 = vmatpush2.msra.mxu0 0.0
  %925 = vmatprep.subr.mxu0 0.0
  %926 = vmatpush2.msra.mxu0 0.0
  %927 = vmatprep.mubr.f32.mxu0 0.0
  %928 = vmatmul.mubr.f32.gmra.mxu0 %v857
  %v929 = vpop.f32.mrf.mxu0
  %v930 = vadd.f32 %v853, %v929
  %v931 = vpop.f32.mrf.mxu0
  %932 = vdwg.mxu0
  %s933 = scalar_lea.vmem %s9, 1
  %v934 = vld [vmem:[%s933] sm:$0x1]
  %v936 = vlaneseq
  %v937 = vshrl.u32 %v936, 7
  %v938 = vsub.s32 0, %v937
  %v939 = vrot.slane %v934, %v938
  %v941 = vmul.f32 %v826, %v939
  %s942 = scalar_lea.vmem %s10, 1
  %v943 = vld [vmem:[%s942] sm:$0x1]
  %v945 = vlaneseq
  %v946 = vshrl.u32 %v945, 7
  %v947 = vsub.s32 0, %v946
  %v948 = vrot.slane %v943, %v947
  %v950 = vadd.f32 %v941, %v948
  %v951 = vmax.f32 %v950, 0.0
  %s952 = scalar_lea.vmem %s11, 32
  %v953 = vld [vmem:[%s952] sm:$0xff]
  %v954 = vld [vmem:[%s952 + $0x8] sm:$0xff]
  %v955 = vld [vmem:[%s952 + $0x10] sm:$0xff]
  %v956 = vld [vmem:[%s952 + $0x18] sm:$0x3]
  %s957 = scalar_lea.vmem %s12, 1
  %v958 = vld [vmem:[%s957] sm:$0x1]
  %v960 = vlaneseq
  %v961 = vshrl.u32 %v960, 7
  %v962 = vsub.s32 0, %v961
  %v963 = vrot.slane %v958, %v962
  %v966 = vsel %vm855, %v951, 0
  %v969 = vsel %vm859, %v956, 0
  %971 = vmatprep.subr.mxu0 0.0
  %972 = vmatpush1.msra.mxu0 0.0
  %973 = vmatprep.subr.mxu0 0.0
  %974 = vmatpush1.msra.mxu0 0.0
  %975 = vmatprep.subr.mxu0 0.0
  %976 = vmatpush1.msra.mxu0 0.0
  %977 = vmatprep.subr.mxu0 0.0
  %978 = vmatpush1.msra.mxu0 0.0
  %979 = vmatprep.subr.mxu0 0.0
  %980 = vmatpush1.msra.mxu0 0.0
  %981 = vmatprep.subr.mxu0 0.0
  %982 = vmatpush1.msra.mxu0 0.0
  %983 = vmatprep.subr.mxu0 0.0
  %984 = vmatpush1.msra.mxu0 0.0
  %985 = vmatprep.subr.mxu0 0.0
  %986 = vmatpush1.msra.mxu0 0.0
  %987 = vmatprep.subr.mxu0 0.0
  %988 = vmatpush1.msra.mxu0 0.0
  %989 = vmatprep.subr.mxu0 0.0
  %990 = vmatpush1.msra.mxu0 0.0
  %991 = vmatprep.subr.mxu0 0.0
  %992 = vmatpush1.msra.mxu0 0.0
  %993 = vmatprep.subr.mxu0 0.0
  %994 = vmatpush1.msra.mxu0 0.0
  %995 = vmatprep.subr.mxu0 0.0
  %996 = vmatpush1.msra.mxu0 %v969
  %997 = vmatprep.subr.mxu0 0.0
  %998 = vmatpush1.msra.mxu0 %v955
  %999 = vmatprep.subr.mxu0 0.0
  %1000 = vmatpush1.msra.mxu0 %v954
  %1001 = vmatprep.subr.mxu0 0.0
  %1002 = vmatpush1.msra.mxu0 %v953
  %1003 = vmatprep.subr.mxu0 0.0
  %1004 = vmatpush2.msra.mxu0 0.0
  %1005 = vmatprep.subr.mxu0 0.0
  %1006 = vmatpush2.msra.mxu0 0.0
  %1007 = vmatprep.subr.mxu0 0.0
  %1008 = vmatpush2.msra.mxu0 0.0
  %1009 = vmatprep.subr.mxu0 0.0
  %1010 = vmatpush2.msra.mxu0 0.0
  %1011 = vmatprep.subr.mxu0 0.0
  %1012 = vmatpush2.msra.mxu0 0.0
  %1013 = vmatprep.subr.mxu0 0.0
  %1014 = vmatpush2.msra.mxu0 0.0
  %1015 = vmatprep.subr.mxu0 0.0
  %1016 = vmatpush2.msra.mxu0 0.0
  %1017 = vmatprep.subr.mxu0 0.0
  %1018 = vmatpush2.msra.mxu0 0.0
  %1019 = vmatprep.subr.mxu0 0.0
  %1020 = vmatpush2.msra.mxu0 0.0
  %1021 = vmatprep.subr.mxu0 0.0
  %1022 = vmatpush2.msra.mxu0 0.0
  %1023 = vmatprep.subr.mxu0 0.0
  %1024 = vmatpush2.msra.mxu0 0.0
  %1025 = vmatprep.subr.mxu0 0.0
  %1026 = vmatpush2.msra.mxu0 0.0
  %1027 = vmatprep.subr.mxu0 0.0
  %1028 = vmatpush2.msra.mxu0 0.0
  %1029 = vmatprep.subr.mxu0 0.0
  %1030 = vmatpush2.msra.mxu0 0.0
  %1031 = vmatprep.subr.mxu0 0.0
  %1032 = vmatpush2.msra.mxu0 0.0
  %1033 = vmatprep.subr.mxu0 0.0
  %1034 = vmatpush2.msra.mxu0 0.0
  %1035 = vmatprep.mubr.f32.mxu0 0.0
  %1036 = vmatmul.mubr.f32.gmra.mxu0 %v966
  %v1037 = vpop.f32.mrf.mxu0
  %v1038 = vadd.f32 %v963, %v1037
  %v1039 = vpop.f32.mrf.mxu0
  %1040 = vdwg.mxu0
  %s1041 = scalar_lea.vmem %s9, 2
  %v1042 = vld [vmem:[%s1041] sm:$0x1]
  %v1044 = vlaneseq
  %v1045 = vshrl.u32 %v1044, 7
  %v1046 = vsub.s32 0, %v1045
  %v1047 = vrot.slane %v1042, %v1046
  %v1049 = vmul.f32 %v826, %v1047
  %s1050 = scalar_lea.vmem %s10, 2
  %v1051 = vld [vmem:[%s1050] sm:$0x1]
  %v1053 = vlaneseq
  %v1054 = vshrl.u32 %v1053, 7
  %v1055 = vsub.s32 0, %v1054
  %v1056 = vrot.slane %v1051, %v1055
  %v1058 = vadd.f32 %v1049, %v1056
  %v1059 = vmax.f32 %v1058, 0.0
  %s1060 = scalar_lea.vmem %s11, 64
  %v1061 = vld [vmem:[%s1060] sm:$0xff]
  %v1062 = vld [vmem:[%s1060 + $0x8] sm:$0xff]
  %v1063 = vld [vmem:[%s1060 + $0x10] sm:$0xff]
  %v1064 = vld [vmem:[%s1060 + $0x18] sm:$0x3]
  %s1065 = scalar_lea.vmem %s12, 2
  %v1066 = vld [vmem:[%s1065] sm:$0x1]
  %v1068 = vlaneseq
  %v1069 = vshrl.u32 %v1068, 7
  %v1070 = vsub.s32 0, %v1069
  %v1071 = vrot.slane %v1066, %v1070
  %v1074 = vsel %vm855, %v1059, 0
  %v1077 = vsel %vm859, %v1064, 0
  %1079 = vmatprep.subr.mxu0 0.0
  %1080 = vmatpush1.msra.mxu0 0.0
  %1081 = vmatprep.subr.mxu0 0.0
  %1082 = vmatpush1.msra.mxu0 0.0
  %1083 = vmatprep.subr.mxu0 0.0
  %1084 = vmatpush1.msra.mxu0 0.0
  %1085 = vmatprep.subr.mxu0 0.0
  %1086 = vmatpush1.msra.mxu0 0.0
  %1087 = vmatprep.subr.mxu0 0.0
  %1088 = vmatpush1.msra.mxu0 0.0
  %1089 = vmatprep.subr.mxu0 0.0
  %1090 = vmatpush1.msra.mxu0 0.0
  %1091 = vmatprep.subr.mxu0 0.0
  %1092 = vmatpush1.msra.mxu0 0.0
  %1093 = vmatprep.subr.mxu0 0.0
  %1094 = vmatpush1.msra.mxu0 0.0
  %1095 = vmatprep.subr.mxu0 0.0
  %1096 = vmatpush1.msra.mxu0 0.0
  %1097 = vmatprep.subr.mxu0 0.0
  %1098 = vmatpush1.msra.mxu0 0.0
  %1099 = vmatprep.subr.mxu0 0.0
  %1100 = vmatpush1.msra.mxu0 0.0
  %1101 = vmatprep.subr.mxu0 0.0
  %1102 = vmatpush1.msra.mxu0 0.0
  %1103 = vmatprep.subr.mxu0 0.0
  %1104 = vmatpush1.msra.mxu0 %v1077
  %1105 = vmatprep.subr.mxu0 0.0
  %1106 = vmatpush1.msra.mxu0 %v1063
  %1107 = vmatprep.subr.mxu0 0.0
  %1108 = vmatpush1.msra.mxu0 %v1062
  %1109 = vmatprep.subr.mxu0 0.0
  %1110 = vmatpush1.msra.mxu0 %v1061
  %1111 = vmatprep.subr.mxu0 0.0
  %1112 = vmatpush2.msra.mxu0 0.0
  %1113 = vmatprep.subr.mxu0 0.0
  %1114 = vmatpush2.msra.mxu0 0.0
  %1115 = vmatprep.subr.mxu0 0.0
  %1116 = vmatpush2.msra.mxu0 0.0
  %1117 = vmatprep.subr.mxu0 0.0
  %1118 = vmatpush2.msra.mxu0 0.0
  %1119 = vmatprep.subr.mxu0 0.0
  %1120 = vmatpush2.msra.mxu0 0.0
  %1121 = vmatprep.subr.mxu0 0.0
  %1122 = vmatpush2.msra.mxu0 0.0
  %1123 = vmatprep.subr.mxu0 0.0
  %1124 = vmatpush2.msra.mxu0 0.0
  %1125 = vmatprep.subr.mxu0 0.0
  %1126 = vmatpush2.msra.mxu0 0.0
  %1127 = vmatprep.subr.mxu0 0.0
  %1128 = vmatpush2.msra.mxu0 0.0
  %1129 = vmatprep.subr.mxu0 0.0
  %1130 = vmatpush2.msra.mxu0 0.0
  %1131 = vmatprep.subr.mxu0 0.0
  %1132 = vmatpush2.msra.mxu0 0.0
  %1133 = vmatprep.subr.mxu0 0.0
  %1134 = vmatpush2.msra.mxu0 0.0
  %1135 = vmatprep.subr.mxu0 0.0
  %1136 = vmatpush2.msra.mxu0 0.0
  %1137 = vmatprep.subr.mxu0 0.0
  %1138 = vmatpush2.msra.mxu0 0.0
  %1139 = vmatprep.subr.mxu0 0.0
  %1140 = vmatpush2.msra.mxu0 0.0
  %1141 = vmatprep.subr.mxu0 0.0
  %1142 = vmatpush2.msra.mxu0 0.0
  %1143 = vmatprep.mubr.f32.mxu0 0.0
  %1144 = vmatmul.mubr.f32.gmra.mxu0 %v1074
  %v1145 = vpop.f32.mrf.mxu0
  %v1146 = vadd.f32 %v1071, %v1145
  %v1147 = vpop.f32.mrf.mxu0
  %1148 = vdwg.mxu0
  %s1149 = scalar_lea.vmem %s9, 3
  %v1150 = vld [vmem:[%s1149] sm:$0x1]
  %v1152 = vlaneseq
  %v1153 = vshrl.u32 %v1152, 7
  %v1154 = vsub.s32 0, %v1153
  %v1155 = vrot.slane %v1150, %v1154
  %v1157 = vmul.f32 %v826, %v1155
  %s1158 = scalar_lea.vmem %s10, 3
  %v1159 = vld [vmem:[%s1158] sm:$0x1]
  %v1161 = vlaneseq
  %v1162 = vshrl.u32 %v1161, 7
  %v1163 = vsub.s32 0, %v1162
  %v1164 = vrot.slane %v1159, %v1163
  %v1166 = vadd.f32 %v1157, %v1164
  %v1167 = vmax.f32 %v1166, 0.0
  %s1168 = scalar_lea.vmem %s11, 96
  %v1169 = vld [vmem:[%s1168] sm:$0xff]
  %v1170 = vld [vmem:[%s1168 + $0x8] sm:$0xff]
  %v1171 = vld [vmem:[%s1168 + $0x10] sm:$0xff]
  %v1172 = vld [vmem:[%s1168 + $0x18] sm:$0x3]
  %s1173 = scalar_lea.vmem %s12, 3
  %v1174 = vld [vmem:[%s1173] sm:$0x1]
  %v1176 = vlaneseq
  %v1177 = vshrl.u32 %v1176, 7
  %v1178 = vsub.s32 0, %v1177
  %v1179 = vrot.slane %v1174, %v1178
  %v1182 = vsel %vm855, %v1167, 0
  %v1185 = vsel %vm859, %v1172, 0
  %1187 = vmatprep.subr.mxu0 0.0
  %1188 = vmatpush1.msra.mxu0 0.0
  %1189 = vmatprep.subr.mxu0 0.0
  %1190 = vmatpush1.msra.mxu0 0.0
  %1191 = vmatprep.subr.mxu0 0.0
  %1192 = vmatpush1.msra.mxu0 0.0
  %1193 = vmatprep.subr.mxu0 0.0
  %1194 = vmatpush1.msra.mxu0 0.0
  %1195 = vmatprep.subr.mxu0 0.0
  %1196 = vmatpush1.msra.mxu0 0.0
  %1197 = vmatprep.subr.mxu0 0.0
  %1198 = vmatpush1.msra.mxu0 0.0
  %1199 = vmatprep.subr.mxu0 0.0
  %1200 = vmatpush1.msra.mxu0 0.0
  %1201 = vmatprep.subr.mxu0 0.0
  %1202 = vmatpush1.msra.mxu0 0.0
  %1203 = vmatprep.subr.mxu0 0.0
  %1204 = vmatpush1.msra.mxu0 0.0
  %1205 = vmatprep.subr.mxu0 0.0
  %1206 = vmatpush1.msra.mxu0 0.0
  %1207 = vmatprep.subr.mxu0 0.0
  %1208 = vmatpush1.msra.mxu0 0.0
  %1209 = vmatprep.subr.mxu0 0.0
  %1210 = vmatpush1.msra.mxu0 0.0
  %1211 = vmatprep.subr.mxu0 0.0
  %1212 = vmatpush1.msra.mxu0 %v1185
  %1213 = vmatprep.subr.mxu0 0.0
  %1214 = vmatpush1.msra.mxu0 %v1171
  %1215 = vmatprep.subr.mxu0 0.0
  %1216 = vmatpush1.msra.mxu0 %v1170
  %1217 = vmatprep.subr.mxu0 0.0
  %1218 = vmatpush1.msra.mxu0 %v1169
  %1219 = vmatprep.subr.mxu0 0.0
  %1220 = vmatpush2.msra.mxu0 0.0
  %1221 = vmatprep.subr.mxu0 0.0
  %1222 = vmatpush2.msra.mxu0 0.0
  %1223 = vmatprep.subr.mxu0 0.0
  %1224 = vmatpush2.msra.mxu0 0.0
  %1225 = vmatprep.subr.mxu0 0.0
  %1226 = vmatpush2.msra.mxu0 0.0
  %1227 = vmatprep.subr.mxu0 0.0
  %1228 = vmatpush2.msra.mxu0 0.0
  %1229 = vmatprep.subr.mxu0 0.0
  %1230 = vmatpush2.msra.mxu0 0.0
  %1231 = vmatprep.subr.mxu0 0.0
  %1232 = vmatpush2.msra.mxu0 0.0
  %1233 = vmatprep.subr.mxu0 0.0
  %1234 = vmatpush2.msra.mxu0 0.0
  %1235 = vmatprep.subr.mxu0 0.0
  %1236 = vmatpush2.msra.mxu0 0.0
  %1237 = vmatprep.subr.mxu0 0.0
  %1238 = vmatpush2.msra.mxu0 0.0
  %1239 = vmatprep.subr.mxu0 0.0
  %1240 = vmatpush2.msra.mxu0 0.0
  %1241 = vmatprep.subr.mxu0 0.0
  %1242 = vmatpush2.msra.mxu0 0.0
  %1243 = vmatprep.subr.mxu0 0.0
  %1244 = vmatpush2.msra.mxu0 0.0
  %1245 = vmatprep.subr.mxu0 0.0
  %1246 = vmatpush2.msra.mxu0 0.0
  %1247 = vmatprep.subr.mxu0 0.0
  %1248 = vmatpush2.msra.mxu0 0.0
  %1249 = vmatprep.subr.mxu0 0.0
  %1250 = vmatpush2.msra.mxu0 0.0
  %1251 = vmatprep.mubr.f32.mxu0 0.0
  %1252 = vmatmul.mubr.f32.gmra.mxu0 %v1182
  %v1253 = vpop.f32.mrf.mxu0
  %v1254 = vadd.f32 %v1179, %v1253
  %v1255 = vpop.f32.mrf.mxu0
  %1256 = vdwg.mxu0
  %v1257 = vld [vmem:[%s5] sm:$0xff]
  %v1258 = vld [vmem:[%s0] sm:$0xff]
  %v1259 = vld [vmem:[%s0 + $0x8] sm:$0xff]
  %v1260 = vld [vmem:[%s0 + $0x10] sm:$0xff]
  %v1261 = vld [vmem:[%s0 + $0x18] sm:$0xff]
  %v1262 = vld [vmem:[%s0 + $0x20] sm:$0xff]
  %v1263 = vld [vmem:[%s0 + $0x28] sm:$0xff]
  %v1264 = vld [vmem:[%s0 + $0x30] sm:$0xff]
  %v1265 = vld [vmem:[%s0 + $0x38] sm:$0xff]
  %v1266 = vld [vmem:[%s0 + $0x40] sm:$0xff]
  %v1267 = vld [vmem:[%s0 + $0x48] sm:$0xff]
  %v1268 = vld [vmem:[%s0 + $0x50] sm:$0xff]
  %v1269 = vld [vmem:[%s0 + $0x58] sm:$0xff]
  %v1270 = vld [vmem:[#allocation2] sm:$0xff]
  %v1271 = vld [vmem:[#allocation2 + $0x8] sm:$0xff]
  %v1272 = vld [vmem:[#allocation2 + $0x10] sm:$0xff]
  %v1273 = vld [vmem:[#allocation2 + $0x18] sm:$0xff]
  %v1274 = vld [vmem:[#allocation2 + $0x20] sm:$0xff]
  %v1275 = vld [vmem:[#allocation2 + $0x28] sm:$0xff]
  %v1276 = vld [vmem:[#allocation2 + $0x30] sm:$0xff]
  %v1277 = vld [vmem:[#allocation2 + $0x38] sm:$0xff]
  %v1278 = vld [vmem:[#allocation2 + $0x40] sm:$0xff]
  %v1279 = vld [vmem:[#allocation2 + $0x48] sm:$0xff]
  %v1280 = vld [vmem:[#allocation2 + $0x50] sm:$0xff]
  %v1281 = vld [vmem:[#allocation2 + $0x58] sm:$0xff]
  %vm1282 = vcmask 64512
  %v1284 = vsel %vm1282, %v1258, 0
  %v1287 = vsel %vm1282, %v1259, 0
  %v1290 = vsel %vm1282, %v1260, 0
  %v1293 = vsel %vm1282, %v1261, 0
  %v1296 = vsel %vm1282, %v1262, 0
  %v1299 = vsel %vm1282, %v1263, 0
  %v1302 = vsel %vm1282, %v1264, 0
  %v1305 = vsel %vm1282, %v1265, 0
  %v1308 = vsel %vm1282, %v1266, 0
  %v1311 = vsel %vm1282, %v1267, 0
  %v1314 = vsel %vm1282, %v1268, 0
  %v1317 = vsel %vm1282, %v1269, 0
  %1319 = vmatprep.subr.mxu0 0.0
  %1320 = vmatpush1.msra.mxu0 0.0
  %1321 = vmatprep.subr.mxu0 0.0
  %1322 = vmatpush1.msra.mxu0 0.0
  %1323 = vmatprep.subr.mxu0 0.0
  %1324 = vmatpush1.msra.mxu0 0.0
  %1325 = vmatprep.subr.mxu0 0.0
  %1326 = vmatpush1.msra.mxu0 0.0
  %1327 = vmatprep.subr.mxu0 0.0
  %1328 = vmatpush1.msra.mxu0 0.0
  %1329 = vmatprep.subr.mxu0 0.0
  %1330 = vmatpush1.msra.mxu0 0.0
  %1331 = vmatprep.subr.mxu0 0.0
  %1332 = vmatpush1.msra.mxu0 0.0
  %1333 = vmatprep.subr.mxu0 0.0
  %1334 = vmatpush1.msra.mxu0 0.0
  %1335 = vmatprep.subr.mxu0 0.0
  %1336 = vmatpush1.msra.mxu0 0.0
  %1337 = vmatprep.subr.mxu0 0.0
  %1338 = vmatpush1.msra.mxu0 0.0
  %1339 = vmatprep.subr.mxu0 0.0
  %1340 = vmatpush1.msra.mxu0 0.0
  %1341 = vmatprep.subr.mxu0 0.0
  %1342 = vmatpush1.msra.mxu0 0.0
  %1343 = vmatprep.subr.mxu0 0.0
  %1344 = vmatpush1.msra.mxu0 0.0
  %1345 = vmatprep.subr.mxu0 0.0
  %1346 = vmatpush1.msra.mxu0 0.0
  %1347 = vmatprep.subr.mxu0 0.0
  %1348 = vmatpush1.msra.mxu0 0.0
  %1349 = vmatprep.subr.mxu0 0.0
  %1350 = vmatpush1.msra.mxu0 %v1257
  %1351 = vmatprep.subr.mxu0 0.0
  %1352 = vmatpush2.msra.mxu0 0.0
  %1353 = vmatprep.subr.mxu0 0.0
  %1354 = vmatpush2.msra.mxu0 0.0
  %1355 = vmatprep.subr.mxu0 0.0
  %1356 = vmatpush2.msra.mxu0 0.0
  %1357 = vmatprep.subr.mxu0 0.0
  %1358 = vmatpush2.msra.mxu0 0.0
  %1359 = vmatprep.subr.mxu0 0.0
  %1360 = vmatpush2.msra.mxu0 0.0
  %1361 = vmatprep.subr.mxu0 0.0
  %1362 = vmatpush2.msra.mxu0 0.0
  %1363 = vmatprep.subr.mxu0 0.0
  %1364 = vmatpush2.msra.mxu0 0.0
  %1365 = vmatprep.subr.mxu0 0.0
  %1366 = vmatpush2.msra.mxu0 0.0
  %1367 = vmatprep.subr.mxu0 0.0
  %1368 = vmatpush2.msra.mxu0 0.0
  %1369 = vmatprep.subr.mxu0 0.0
  %1370 = vmatpush2.msra.mxu0 0.0
  %1371 = vmatprep.subr.mxu0 0.0
  %1372 = vmatpush2.msra.mxu0 0.0
  %1373 = vmatprep.subr.mxu0 0.0
  %1374 = vmatpush2.msra.mxu0 0.0
  %1375 = vmatprep.subr.mxu0 0.0
  %1376 = vmatpush2.msra.mxu0 0.0
  %1377 = vmatprep.subr.mxu0 0.0
  %1378 = vmatpush2.msra.mxu0 0.0
  %1379 = vmatprep.subr.mxu0 0.0
  %1380 = vmatpush2.msra.mxu0 0.0
  %1381 = vmatprep.subr.mxu0 0.0
  %1382 = vmatpush2.msra.mxu0 0.0
  %1383 = vmatprep.mubr.f32.mxu0 0.0
  %1384 = vmatmul.mubr.f32.gmra.mxu0 %v1284
  %v1385 = vpop.f32.mrf.mxu0
  %v1386 = vadd.f32 %v1270, %v1385
  %v1387 = vpop.f32.mrf.mxu0
  %1388 = vmatprep.mubr.f32.mxu0 0.0
  %1389 = vmatmul.mubr.f32.gmra.mxu0 %v1287
  %v1390 = vpop.f32.mrf.mxu0
  %v1391 = vadd.f32 %v1271, %v1390
  %v1392 = vpop.f32.mrf.mxu0
  %1393 = vmatprep.mubr.f32.mxu0 0.0
  %1394 = vmatmul.mubr.f32.gmra.mxu0 %v1290
  %v1395 = vpop.f32.mrf.mxu0
  %v1396 = vadd.f32 %v1272, %v1395
  %v1397 = vpop.f32.mrf.mxu0
  %1398 = vmatprep.mubr.f32.mxu0 0.0
  %1399 = vmatmul.mubr.f32.gmra.mxu0 %v1293
  %v1400 = vpop.f32.mrf.mxu0
  %v1401 = vadd.f32 %v1273, %v1400
  %v1402 = vpop.f32.mrf.mxu0
  %1403 = vmatprep.mubr.f32.mxu0 0.0
  %1404 = vmatmul.mubr.f32.gmra.mxu0 %v1296
  %v1405 = vpop.f32.mrf.mxu0
  %v1406 = vadd.f32 %v1274, %v1405
  %v1407 = vpop.f32.mrf.mxu0
  %1408 = vmatprep.mubr.f32.mxu0 0.0
  %1409 = vmatmul.mubr.f32.gmra.mxu0 %v1299
  %v1410 = vpop.f32.mrf.mxu0
  %v1411 = vadd.f32 %v1275, %v1410
  %v1412 = vpop.f32.mrf.mxu0
  %1413 = vmatprep.mubr.f32.mxu0 0.0
  %1414 = vmatmul.mubr.f32.gmra.mxu0 %v1302
  %v1415 = vpop.f32.mrf.mxu0
  %v1416 = vadd.f32 %v1276, %v1415
  %v1417 = vpop.f32.mrf.mxu0
  %1418 = vmatprep.mubr.f32.mxu0 0.0
  %1419 = vmatmul.mubr.f32.gmra.mxu0 %v1305
  %v1420 = vpop.f32.mrf.mxu0
  %v1421 = vadd.f32 %v1277, %v1420
  %v1422 = vpop.f32.mrf.mxu0
  %1423 = vmatprep.mubr.f32.mxu0 0.0
  %1424 = vmatmul.mubr.f32.gmra.mxu0 %v1308
  %v1425 = vpop.f32.mrf.mxu0
  %v1426 = vadd.f32 %v1278, %v1425
  %v1427 = vpop.f32.mrf.mxu0
  %1428 = vmatprep.mubr.f32.mxu0 0.0
  %1429 = vmatmul.mubr.f32.gmra.mxu0 %v1311
  %v1430 = vpop.f32.mrf.mxu0
  %v1431 = vadd.f32 %v1279, %v1430
  %v1432 = vpop.f32.mrf.mxu0
  %1433 = vmatprep.mubr.f32.mxu0 0.0
  %1434 = vmatmul.mubr.f32.gmra.mxu0 %v1314
  %v1435 = vpop.f32.mrf.mxu0
  %v1436 = vadd.f32 %v1280, %v1435
  %v1437 = vpop.f32.mrf.mxu0
  %1438 = vmatprep.mubr.f32.mxu0 0.0
  %1439 = vmatmul.mubr.f32.gmra.mxu0 %v1317
  %v1440 = vpop.f32.mrf.mxu0
  %v1441 = vadd.f32 %v1281, %v1440
  %v1442 = vpop.f32.mrf.mxu0
  %1443 = vdwg.mxu0
  %v1444 = vld [vmem:[%s7] sm:$0xff]
  %v1445 = vld [vmem:[%s7 + $0x8] sm:$0xff]
  %v1446 = vld [vmem:[%s7 + $0x10] sm:$0x1f]
  %v1447 = vld [vmem:[%s7 + $0x18] sm:$0x1f]
  %v1449 = vsel %vm232, %v1386, 0
  %v1452 = vsel %vm232, %v1391, 0
  %v1455 = vsel %vm232, %v1396, 0
  %v1458 = vsel %vm232, %v1401, 0
  %v1461 = vsel %vm232, %v1406, 0
  %v1464 = vsel %vm232, %v1411, 0
  %v1467 = vsel %vm232, %v1416, 0
  %v1470 = vsel %vm232, %v1421, 0
  %v1473 = vsel %vm232, %v1426, 0
  %v1476 = vsel %vm232, %v1431, 0
  %v1479 = vsel %vm232, %v1436, 0
  %v1482 = vsel %vm232, %v1441, 0
  %vm1484 = vcmask 1044480
  %v1486 = vsel %vm1484, %v1446, 0
  %v1489 = vsel %vm1484, %v1447, 0
  %1491 = vmatprep.subr.mxu0 0.0
  %1492 = vmatpush1.msra.mxu0 0.0
  %1493 = vmatprep.subr.mxu0 0.0
  %1494 = vmatpush1.msra.mxu0 0.0
  %1495 = vmatprep.subr.mxu0 0.0
  %1496 = vmatpush1.msra.mxu0 0.0
  %1497 = vmatprep.subr.mxu0 0.0
  %1498 = vmatpush1.msra.mxu0 0.0
  %1499 = vmatprep.subr.mxu0 0.0
  %1500 = vmatpush1.msra.mxu0 0.0
  %1501 = vmatprep.subr.mxu0 0.0
  %1502 = vmatpush1.msra.mxu0 0.0
  %1503 = vmatprep.subr.mxu0 0.0
  %1504 = vmatpush1.msra.mxu0 0.0
  %1505 = vmatprep.subr.mxu0 0.0
  %1506 = vmatpush1.msra.mxu0 0.0
  %1507 = vmatprep.subr.mxu0 0.0
  %1508 = vmatpush1.msra.mxu0 0.0
  %1509 = vmatprep.subr.mxu0 0.0
  %1510 = vmatpush1.msra.mxu0 0.0
  %1511 = vmatprep.subr.mxu0 0.0
  %1512 = vmatpush1.msra.mxu0 0.0
  %1513 = vmatprep.subr.mxu0 0.0
  %1514 = vmatpush1.msra.mxu0 0.0
  %1515 = vmatprep.subr.mxu0 0.0
  %1516 = vmatpush1.msra.mxu0 0.0
  %1517 = vmatprep.subr.mxu0 0.0
  %1518 = vmatpush1.msra.mxu0 0.0
  %1519 = vmatprep.subr.mxu0 %v1489
  %1520 = vmatpush1.msra.mxu0 %v1486
  %1521 = vmatprep.subr.mxu0 %v1445
  %1522 = vmatpush1.msra.mxu0 %v1444
  %1523 = vmatprep.subr.mxu0 0.0
  %1524 = vmatpush2.msra.mxu0 0.0
  %1525 = vmatprep.subr.mxu0 0.0
  %1526 = vmatpush2.msra.mxu0 0.0
  %1527 = vmatprep.subr.mxu0 0.0
  %1528 = vmatpush2.msra.mxu0 0.0
  %1529 = vmatprep.subr.mxu0 0.0
  %1530 = vmatpush2.msra.mxu0 0.0
  %1531 = vmatprep.subr.mxu0 0.0
  %1532 = vmatpush2.msra.mxu0 0.0
  %1533 = vmatprep.subr.mxu0 0.0
  %1534 = vmatpush2.msra.mxu0 0.0
  %1535 = vmatprep.subr.mxu0 0.0
  %1536 = vmatpush2.msra.mxu0 0.0
  %1537 = vmatprep.subr.mxu0 0.0
  %1538 = vmatpush2.msra.mxu0 0.0
  %1539 = vmatprep.subr.mxu0 0.0
  %1540 = vmatpush2.msra.mxu0 0.0
  %1541 = vmatprep.subr.mxu0 0.0
  %1542 = vmatpush2.msra.mxu0 0.0
  %1543 = vmatprep.subr.mxu0 0.0
  %1544 = vmatpush2.msra.mxu0 0.0
  %1545 = vmatprep.subr.mxu0 0.0
  %1546 = vmatpush2.msra.mxu0 0.0
  %1547 = vmatprep.subr.mxu0 0.0
  %1548 = vmatpush2.msra.mxu0 0.0
  %1549 = vmatprep.subr.mxu0 0.0
  %1550 = vmatpush2.msra.mxu0 0.0
  %1551 = vmatprep.subr.mxu0 0.0
  %1552 = vmatpush2.msra.mxu0 0.0
  %1553 = vmatprep.subr.mxu0 0.0
  %1554 = vmatpush2.msra.mxu0 0.0
  %1555 = vmatprep.mubr.f32.mxu0 0.0
  %1556 = vmatmul.mubr.f32.gmra.mxu0 %v1449
  %v1557 = vpop.f32.mrf.mxu0
  %v1558 = vadd.f32 0.0, %v1557
  %v1559 = vpop.f32.mrf.mxu0
  %v1560 = vadd.f32 0.0, %v1559
  %1561 = vmatprep.mubr.f32.mxu0 0.0
  %1562 = vmatmul.mubr.f32.gmra.mxu0 %v1452
  %v1563 = vpop.f32.mrf.mxu0
  %v1564 = vadd.f32 0.0, %v1563
  %v1565 = vpop.f32.mrf.mxu0
  %v1566 = vadd.f32 0.0, %v1565
  %1567 = vmatprep.mubr.f32.mxu0 0.0
  %1568 = vmatmul.mubr.f32.gmra.mxu0 %v1455
  %v1569 = vpop.f32.mrf.mxu0
  %v1570 = vadd.f32 0.0, %v1569
  %v1571 = vpop.f32.mrf.mxu0
  %v1572 = vadd.f32 0.0, %v1571
  %1573 = vmatprep.mubr.f32.mxu0 0.0
  %1574 = vmatmul.mubr.f32.gmra.mxu0 %v1458
  %v1575 = vpop.f32.mrf.mxu0
  %v1576 = vadd.f32 0.0, %v1575
  %v1577 = vpop.f32.mrf.mxu0
  %v1578 = vadd.f32 0.0, %v1577
  %1579 = vmatprep.mubr.f32.mxu0 0.0
  %1580 = vmatmul.mubr.f32.gmra.mxu0 %v1461
  %v1581 = vpop.f32.mrf.mxu0
  %v1582 = vadd.f32 0.0, %v1581
  %v1583 = vpop.f32.mrf.mxu0
  %v1584 = vadd.f32 0.0, %v1583
  %1585 = vmatprep.mubr.f32.mxu0 0.0
  %1586 = vmatmul.mubr.f32.gmra.mxu0 %v1464
  %v1587 = vpop.f32.mrf.mxu0
  %v1588 = vadd.f32 0.0, %v1587
  %v1589 = vpop.f32.mrf.mxu0
  %v1590 = vadd.f32 0.0, %v1589
  %1591 = vmatprep.mubr.f32.mxu0 0.0
  %1592 = vmatmul.mubr.f32.gmra.mxu0 %v1467
  %v1593 = vpop.f32.mrf.mxu0
  %v1594 = vadd.f32 0.0, %v1593
  %v1595 = vpop.f32.mrf.mxu0
  %v1596 = vadd.f32 0.0, %v1595
  %1597 = vmatprep.mubr.f32.mxu0 0.0
  %1598 = vmatmul.mubr.f32.gmra.mxu0 %v1470
  %v1599 = vpop.f32.mrf.mxu0
  %v1600 = vadd.f32 0.0, %v1599
  %v1601 = vpop.f32.mrf.mxu0
  %v1602 = vadd.f32 0.0, %v1601
  %1603 = vmatprep.mubr.f32.mxu0 0.0
  %1604 = vmatmul.mubr.f32.gmra.mxu0 %v1473
  %v1605 = vpop.f32.mrf.mxu0
  %v1606 = vadd.f32 0.0, %v1605
  %v1607 = vpop.f32.mrf.mxu0
  %v1608 = vadd.f32 0.0, %v1607
  %1609 = vmatprep.mubr.f32.mxu0 0.0
  %1610 = vmatmul.mubr.f32.gmra.mxu0 %v1476
  %v1611 = vpop.f32.mrf.mxu0
  %v1612 = vadd.f32 0.0, %v1611
  %v1613 = vpop.f32.mrf.mxu0
  %v1614 = vadd.f32 0.0, %v1613
  %1615 = vmatprep.mubr.f32.mxu0 0.0
  %1616 = vmatmul.mubr.f32.gmra.mxu0 %v1479
  %v1617 = vpop.f32.mrf.mxu0
  %v1618 = vadd.f32 0.0, %v1617
  %v1619 = vpop.f32.mrf.mxu0
  %v1620 = vadd.f32 0.0, %v1619
  %1621 = vmatprep.mubr.f32.mxu0 0.0
  %1622 = vmatmul.mubr.f32.gmra.mxu0 %v1482
  %v1623 = vpop.f32.mrf.mxu0
  %v1624 = vadd.f32 0.0, %v1623
  %v1625 = vpop.f32.mrf.mxu0
  %v1626 = vadd.f32 0.0, %v1625
  %1627 = vdwg.mxu0
  %v1628 = vlaneseq
  %v1629 = vshrl.u32 %v1628, 7
  %v1630 = vadd.s32 %v1629, 8
  %v1631 = vadd.s32 %v1629, 16
  %v1632 = vadd.s32 %v1629, 24
  %v1633 = vadd.s32 %v1629, 32
  %v1634 = vadd.s32 %v1629, 40
  %v1635 = vadd.s32 %v1629, 48
  %v1636 = vadd.s32 %v1629, 56
  %v1637 = vadd.s32 %v1629, 64
  %v1638 = vadd.s32 %v1629, 72
  %v1639 = vadd.s32 %v1629, 80
  %v1640 = vadd.s32 %v1629, 88
  %v1641 = vand.u32 %v1629, 15
  %v1642 = vand.u32 %v1630, 15
  %v1643 = vand.u32 %v1631, 15
  %v1644 = vand.u32 %v1632, 15
  %v1645 = vand.u32 %v1633, 15
  %v1646 = vand.u32 %v1634, 15
  %v1647 = vand.u32 %v1635, 15
  %v1648 = vand.u32 %v1636, 15
  %v1649 = vand.u32 %v1637, 15
  %v1650 = vand.u32 %v1638, 15
  %v1651 = vand.u32 %v1639, 15
  %v1652 = vand.u32 %v1640, 15
  %v1653 = vlaneseq
  %v1654 = vand.u32 %v1653, 127
  %v1655 = vadd.s32 %v1654, 128
  %v1656 = vand.u32 %v1654, 15
  %v1657 = vand.u32 %v1655, 15
  %vm1658 = vcmp.eq.s32.totalorder %v1641, %v1656
  %vm1659 = vcmp.eq.s32.totalorder %v1641, %v1657
  %vm1660 = vcmp.eq.s32.totalorder %v1642, %v1656
  %vm1661 = vcmp.eq.s32.totalorder %v1642, %v1657
  %vm1662 = vcmp.eq.s32.totalorder %v1643, %v1656
  %vm1663 = vcmp.eq.s32.totalorder %v1643, %v1657
  %vm1664 = vcmp.eq.s32.totalorder %v1644, %v1656
  %vm1665 = vcmp.eq.s32.totalorder %v1644, %v1657
  %vm1666 = vcmp.eq.s32.totalorder %v1645, %v1656
  %vm1667 = vcmp.eq.s32.totalorder %v1645, %v1657
  %vm1668 = vcmp.eq.s32.totalorder %v1646, %v1656
  %vm1669 = vcmp.eq.s32.totalorder %v1646, %v1657
  %vm1670 = vcmp.eq.s32.totalorder %v1647, %v1656
  %vm1671 = vcmp.eq.s32.totalorder %v1647, %v1657
  %vm1672 = vcmp.eq.s32.totalorder %v1648, %v1656
  %vm1673 = vcmp.eq.s32.totalorder %v1648, %v1657
  %vm1674 = vcmp.eq.s32.totalorder %v1649, %v1656
  %vm1675 = vcmp.eq.s32.totalorder %v1649, %v1657
  %vm1676 = vcmp.eq.s32.totalorder %v1650, %v1656
  %vm1677 = vcmp.eq.s32.totalorder %v1650, %v1657
  %vm1678 = vcmp.eq.s32.totalorder %v1651, %v1656
  %vm1679 = vcmp.eq.s32.totalorder %v1651, %v1657
  %vm1680 = vcmp.eq.s32.totalorder %v1652, %v1656
  %vm1681 = vcmp.eq.s32.totalorder %v1652, %v1657
  %v1682 = vsel %vm1658, %v1558, 0.0
  %v1683 = vsel %vm1659, %v1560, 0.0
  %v1684 = vsel %vm1660, %v1564, 0.0
  %v1685 = vsel %vm1661, %v1566, 0.0
  %v1686 = vsel %vm1662, %v1570, 0.0
  %v1687 = vsel %vm1663, %v1572, 0.0
  %v1688 = vsel %vm1664, %v1576, 0.0
  %v1689 = vsel %vm1665, %v1578, 0.0
  %v1690 = vsel %vm1666, %v1582, 0.0
  %v1691 = vsel %vm1667, %v1584, 0.0
  %v1692 = vsel %vm1668, %v1588, 0.0
  %v1693 = vsel %vm1669, %v1590, 0.0
  %v1694 = vsel %vm1670, %v1594, 0.0
  %v1695 = vsel %vm1671, %v1596, 0.0
  %v1696 = vsel %vm1672, %v1600, 0.0
  %v1697 = vsel %vm1673, %v1602, 0.0
  %v1698 = vsel %vm1674, %v1606, 0.0
  %v1699 = vsel %vm1675, %v1608, 0.0
  %v1700 = vsel %vm1676, %v1612, 0.0
  %v1701 = vsel %vm1677, %v1614, 0.0
  %v1702 = vsel %vm1678, %v1618, 0.0
  %v1703 = vsel %vm1679, %v1620, 0.0
  %v1704 = vsel %vm1680, %v1624, 0.0
  %v1705 = vsel %vm1681, %v1626, 0.0
  %v1706 = vshra.s32 %v1654, 4
  %vm1707 = vcmp.eq.s32.totalorder %v1706, %v1629
  %v1708 = vsel %vm1707, 1.0, 0.0
  %v1709 = vadd.s32 %v1629, 96
  %v1710 = vadd.s32 %v1629, 104
  %v1711 = vadd.s32 %v1629, 112
  %v1712 = vadd.s32 %v1629, 120
  %v1713 = vadd.s32 %v1629, 128
  %v1714 = vadd.s32 %v1629, 136
  %v1715 = vadd.s32 %v1629, 144
  %v1716 = vadd.s32 %v1629, 152
  %v1717 = vadd.s32 %v1629, 160
  %v1718 = vadd.s32 %v1629, 168
  %v1719 = vadd.s32 %v1629, 176
  %v1720 = vadd.s32 %v1629, 184
  %v1721 = vadd.s32 %v1629, 192
  %v1722 = vadd.s32 %v1629, 200
  %v1723 = vshra.s32 %v1629, 4
  %v1724 = vshra.s32 %v1630, 4
  %v1725 = vshra.s32 %v1631, 4
  %v1726 = vshra.s32 %v1632, 4
  %v1727 = vshra.s32 %v1633, 4
  %v1728 = vshra.s32 %v1634, 4
  %v1729 = vshra.s32 %v1635, 4
  %v1730 = vshra.s32 %v1636, 4
  %v1731 = vshra.s32 %v1637, 4
  %v1732 = vshra.s32 %v1638, 4
  %v1733 = vshra.s32 %v1639, 4
  %v1734 = vshra.s32 %v1640, 4
  %v1735 = vshra.s32 %v1709, 4
  %v1736 = vshra.s32 %v1710, 4
  %v1737 = vshra.s32 %v1711, 4
  %v1738 = vshra.s32 %v1712, 4
  %v1739 = vshra.s32 %v1713, 4
  %v1740 = vshra.s32 %v1714, 4
  %v1741 = vshra.s32 %v1715, 4
  %v1742 = vshra.s32 %v1716, 4
  %v1743 = vshra.s32 %v1717, 4
  %v1744 = vshra.s32 %v1718, 4
  %v1745 = vshra.s32 %v1719, 4
  %v1746 = vshra.s32 %v1720, 4
  %v1747 = vshra.s32 %v1721, 4
  %v1748 = vshra.s32 %v1722, 4
  %vm1749 = vcmp.eq.s32.totalorder %v1723, %v1654
  %vm1750 = vcmp.eq.s32.totalorder %v1724, %v1654
  %vm1751 = vcmp.eq.s32.totalorder %v1725, %v1654
  %vm1752 = vcmp.eq.s32.totalorder %v1726, %v1654
  %vm1753 = vcmp.eq.s32.totalorder %v1727, %v1654
  %vm1754 = vcmp.eq.s32.totalorder %v1728, %v1654
  %vm1755 = vcmp.eq.s32.totalorder %v1729, %v1654
  %vm1756 = vcmp.eq.s32.totalorder %v1730, %v1654
  %vm1757 = vcmp.eq.s32.totalorder %v1731, %v1654
  %vm1758 = vcmp.eq.s32.totalorder %v1732, %v1654
  %vm1759 = vcmp.eq.s32.totalorder %v1733, %v1654
  %vm1760 = vcmp.eq.s32.totalorder %v1734, %v1654
  %vm1761 = vcmp.eq.s32.totalorder %v1735, %v1654
  %vm1762 = vcmp.eq.s32.totalorder %v1736, %v1654
  %vm1763 = vcmp.eq.s32.totalorder %v1737, %v1654
  %vm1764 = vcmp.eq.s32.totalorder %v1738, %v1654
  %vm1765 = vcmp.eq.s32.totalorder %v1739, %v1654
  %vm1766 = vcmp.eq.s32.totalorder %v1740, %v1654
  %vm1767 = vcmp.eq.s32.totalorder %v1741, %v1654
  %vm1768 = vcmp.eq.s32.totalorder %v1742, %v1654
  %vm1769 = vcmp.eq.s32.totalorder %v1743, %v1654
  %vm1770 = vcmp.eq.s32.totalorder %v1744, %v1654
  %vm1771 = vcmp.eq.s32.totalorder %v1745, %v1654
  %vm1772 = vcmp.eq.s32.totalorder %v1746, %v1654
  %vm1773 = vcmp.eq.s32.totalorder %v1747, %v1654
  %vm1774 = vcmp.eq.s32.totalorder %v1748, %v1654
  %v1775 = vsel %vm1749, 1.0, 0.0
  %v1776 = vsel %vm1750, 1.0, 0.0
  %v1777 = vsel %vm1751, 1.0, 0.0
  %v1778 = vsel %vm1752, 1.0, 0.0
  %v1779 = vsel %vm1753, 1.0, 0.0
  %v1780 = vsel %vm1754, 1.0, 0.0
  %v1781 = vsel %vm1755, 1.0, 0.0
  %v1782 = vsel %vm1756, 1.0, 0.0
  %v1783 = vsel %vm1757, 1.0, 0.0
  %v1784 = vsel %vm1758, 1.0, 0.0
  %v1785 = vsel %vm1759, 1.0, 0.0
  %v1786 = vsel %vm1760, 1.0, 0.0
  %v1787 = vsel %vm1761, 1.0, 0.0
  %v1788 = vsel %vm1762, 1.0, 0.0
  %v1789 = vsel %vm1763, 1.0, 0.0
  %v1790 = vsel %vm1764, 1.0, 0.0
  %v1791 = vsel %vm1765, 1.0, 0.0
  %v1792 = vsel %vm1766, 1.0, 0.0
  %v1793 = vsel %vm1767, 1.0, 0.0
  %v1794 = vsel %vm1768, 1.0, 0.0
  %v1795 = vsel %vm1769, 1.0, 0.0
  %v1796 = vsel %vm1770, 1.0, 0.0
  %v1797 = vsel %vm1771, 1.0, 0.0
  %v1798 = vsel %vm1772, 1.0, 0.0
  %v1799 = vsel %vm1773, 1.0, 0.0
  %v1800 = vsel %vm1774, 1.0, 0.0
  %vm1801 = vcmask 785408
  %v1803 = vsel %vm1801, %v1708, 0
  %1805 = vmatprep.subr.mxu0 0.0
  %1806 = vmatpush1.msra.mxu0 0.0
  %1807 = vmatprep.subr.mxu0 0.0
  %1808 = vmatpush1.msra.mxu0 0.0
  %1809 = vmatprep.subr.mxu0 0.0
  %1810 = vmatpush1.msra.mxu0 0.0
  %1811 = vmatprep.subr.mxu0 0.0
  %1812 = vmatpush1.msra.mxu0 0.0
  %1813 = vmatprep.subr.mxu0 %v1705
  %1814 = vmatpush1.msra.mxu0 %v1704
  %1815 = vmatprep.subr.mxu0 %v1703
  %1816 = vmatpush1.msra.mxu0 %v1702
  %1817 = vmatprep.subr.mxu0 %v1701
  %1818 = vmatpush1.msra.mxu0 %v1700
  %1819 = vmatprep.subr.mxu0 %v1699
  %1820 = vmatpush1.msra.mxu0 %v1698
  %1821 = vmatprep.subr.mxu0 %v1697
  %1822 = vmatpush1.msra.mxu0 %v1696
  %1823 = vmatprep.subr.mxu0 %v1695
  %1824 = vmatpush1.msra.mxu0 %v1694
  %1825 = vmatprep.subr.mxu0 %v1693
  %1826 = vmatpush1.msra.mxu0 %v1692
  %1827 = vmatprep.subr.mxu0 %v1691
  %1828 = vmatpush1.msra.mxu0 %v1690
  %1829 = vmatprep.subr.mxu0 %v1689
  %1830 = vmatpush1.msra.mxu0 %v1688
  %1831 = vmatprep.subr.mxu0 %v1687
  %1832 = vmatpush1.msra.mxu0 %v1686
  %1833 = vmatprep.subr.mxu0 %v1685
  %1834 = vmatpush1.msra.mxu0 %v1684
  %1835 = vmatprep.subr.mxu0 %v1683
  %1836 = vmatpush1.msra.mxu0 %v1682
  %1837 = vmatprep.subr.mxu0 0.0
  %1838 = vmatpush2.msra.mxu0 0.0
  %1839 = vmatprep.subr.mxu0 0.0
  %1840 = vmatpush2.msra.mxu0 0.0
  %1841 = vmatprep.subr.mxu0 0.0
  %1842 = vmatpush2.msra.mxu0 0.0
  %1843 = vmatprep.subr.mxu0 0.0
  %1844 = vmatpush2.msra.mxu0 0.0
  %1845 = vmatprep.subr.mxu0 0.0
  %1846 = vmatpush2.msra.mxu0 0.0
  %1847 = vmatprep.subr.mxu0 0.0
  %1848 = vmatpush2.msra.mxu0 0.0
  %1849 = vmatprep.subr.mxu0 0.0
  %1850 = vmatpush2.msra.mxu0 0.0
  %1851 = vmatprep.subr.mxu0 0.0
  %1852 = vmatpush2.msra.mxu0 0.0
  %1853 = vmatprep.subr.mxu0 0.0
  %1854 = vmatpush2.msra.mxu0 0.0
  %1855 = vmatprep.subr.mxu0 0.0
  %1856 = vmatpush2.msra.mxu0 0.0
  %1857 = vmatprep.subr.mxu0 0.0
  %1858 = vmatpush2.msra.mxu0 0.0
  %1859 = vmatprep.subr.mxu0 0.0
  %1860 = vmatpush2.msra.mxu0 0.0
  %1861 = vmatprep.subr.mxu0 0.0
  %1862 = vmatpush2.msra.mxu0 0.0
  %1863 = vmatprep.subr.mxu0 0.0
  %1864 = vmatpush2.msra.mxu0 0.0
  %1865 = vmatprep.subr.mxu0 0.0
  %1866 = vmatpush2.msra.mxu0 0.0
  %1867 = vmatprep.subr.mxu0 0.0
  %1868 = vmatpush2.msra.mxu0 0.0
  %1869 = vmatprep.mubr.f32.mxu0 0.0
  %1870 = vmatmul.mubr.f32.gmra.mxu0 %v1803
  %v1871 = vpop.f32.mrf.mxu0
  %v1872 = vadd.f32 0.0, %v1871
  %v1873 = vpop.f32.mrf.mxu0
  %v1874 = vadd.f32 0.0, %v1873
  %1875 = vdwg.mxu0
  %v1876 = vld [vmem:[%s8] sm:$0x1]
  %v1878 = vlaneseq
  %v1879 = vshrl.u32 %v1878, 7
  %v1880 = vsub.s32 0, %v1879
  %v1881 = vrot.slane %v1876, %v1880
  %vm1883 = vcmask 654336
  %v1885 = vsel %vm1883, %v1874, 0
  %1887 = vmatprep.subr.mxu0 0.0
  %1888 = vmatpush1.msra.mxu0 %v1790
  %1889 = vmatprep.subr.mxu0 0.0
  %1890 = vmatpush1.msra.mxu0 %v1789
  %1891 = vmatprep.subr.mxu0 0.0
  %1892 = vmatpush1.msra.mxu0 %v1788
  %1893 = vmatprep.subr.mxu0 0.0
  %1894 = vmatpush1.msra.mxu0 %v1787
  %1895 = vmatprep.subr.mxu0 0.0
  %1896 = vmatpush1.msra.mxu0 %v1786
  %1897 = vmatprep.subr.mxu0 0.0
  %1898 = vmatpush1.msra.mxu0 %v1785
  %1899 = vmatprep.subr.mxu0 0.0
  %1900 = vmatpush1.msra.mxu0 %v1784
  %1901 = vmatprep.subr.mxu0 0.0
  %1902 = vmatpush1.msra.mxu0 %v1783
  %1903 = vmatprep.subr.mxu0 0.0
  %1904 = vmatpush1.msra.mxu0 %v1782
  %1905 = vmatprep.subr.mxu0 0.0
  %1906 = vmatpush1.msra.mxu0 %v1781
  %1907 = vmatprep.subr.mxu0 0.0
  %1908 = vmatpush1.msra.mxu0 %v1780
  %1909 = vmatprep.subr.mxu0 0.0
  %1910 = vmatpush1.msra.mxu0 %v1779
  %1911 = vmatprep.subr.mxu0 0.0
  %1912 = vmatpush1.msra.mxu0 %v1778
  %1913 = vmatprep.subr.mxu0 0.0
  %1914 = vmatpush1.msra.mxu0 %v1777
  %1915 = vmatprep.subr.mxu0 0.0
  %1916 = vmatpush1.msra.mxu0 %v1776
  %1917 = vmatprep.subr.mxu0 0.0
  %1918 = vmatpush1.msra.mxu0 %v1775
  %1919 = vmatprep.subr.mxu0 0.0
  %1920 = vmatpush2.msra.mxu0 0.0
  %1921 = vmatprep.subr.mxu0 0.0
  %1922 = vmatpush2.msra.mxu0 0.0
  %1923 = vmatprep.subr.mxu0 0.0
  %1924 = vmatpush2.msra.mxu0 0.0
  %1925 = vmatprep.subr.mxu0 0.0
  %1926 = vmatpush2.msra.mxu0 0.0
  %1927 = vmatprep.subr.mxu0 0.0
  %1928 = vmatpush2.msra.mxu0 0.0
  %1929 = vmatprep.subr.mxu0 0.0
  %1930 = vmatpush2.msra.mxu0 0.0
  %1931 = vmatprep.subr.mxu0 0.0
  %1932 = vmatpush2.msra.mxu0 %v1800
  %1933 = vmatprep.subr.mxu0 0.0
  %1934 = vmatpush2.msra.mxu0 %v1799
  %1935 = vmatprep.subr.mxu0 0.0
  %1936 = vmatpush2.msra.mxu0 %v1798
  %1937 = vmatprep.subr.mxu0 0.0
  %1938 = vmatpush2.msra.mxu0 %v1797
  %1939 = vmatprep.subr.mxu0 0.0
  %1940 = vmatpush2.msra.mxu0 %v1796
  %1941 = vmatprep.subr.mxu0 0.0
  %1942 = vmatpush2.msra.mxu0 %v1795
  %1943 = vmatprep.subr.mxu0 0.0
  %1944 = vmatpush2.msra.mxu0 %v1794
  %1945 = vmatprep.subr.mxu0 0.0
  %1946 = vmatpush2.msra.mxu0 %v1793
  %1947 = vmatprep.subr.mxu0 0.0
  %1948 = vmatpush2.msra.mxu0 %v1792
  %1949 = vmatprep.subr.mxu0 0.0
  %1950 = vmatpush2.msra.mxu0 %v1791
  %1951 = vmatprep.mubr.f32.mxu0 %v1885
  %1952 = vmatmul.mubr.f32.gmra.mxu0 %v1872
  %v1953 = vpop.f32.mrf.mxu0
  %v1954 = vadd.f32 %v1881, %v1953
  %v1955 = vpop.f32.mrf.mxu0
  %1956 = vdwg.mxu0
  %v1957 = vmax.f32 %v1954, 0.0
  %v1958 = vld [vmem:[%s2] sm:$0xff]
  %vm1959 = vcmask 48128
  %v1961 = vsel %vm1959, %v1958, 0
  %vm1963 = vcmask 1045504
  %v1965 = vsel %vm1963, %v1957, 0
  %1967 = vmatprep.subr.mxu0 0.0
  %1968 = vmatpush1.msra.mxu0 0.0
  %1969 = vmatprep.subr.mxu0 0.0
  %1970 = vmatpush1.msra.mxu0 0.0
  %1971 = vmatprep.subr.mxu0 0.0
  %1972 = vmatpush1.msra.mxu0 0.0
  %1973 = vmatprep.subr.mxu0 0.0
  %1974 = vmatpush1.msra.mxu0 0.0
  %1975 = vmatprep.subr.mxu0 0.0
  %1976 = vmatpush1.msra.mxu0 0.0
  %1977 = vmatprep.subr.mxu0 0.0
  %1978 = vmatpush1.msra.mxu0 0.0
  %1979 = vmatprep.subr.mxu0 0.0
  %1980 = vmatpush1.msra.mxu0 0.0
  %1981 = vmatprep.subr.mxu0 0.0
  %1982 = vmatpush1.msra.mxu0 0.0
  %1983 = vmatprep.subr.mxu0 0.0
  %1984 = vmatpush1.msra.mxu0 0.0
  %1985 = vmatprep.subr.mxu0 0.0
  %1986 = vmatpush1.msra.mxu0 0.0
  %1987 = vmatprep.subr.mxu0 0.0
  %1988 = vmatpush1.msra.mxu0 0.0
  %1989 = vmatprep.subr.mxu0 0.0
  %1990 = vmatpush1.msra.mxu0 0.0
  %1991 = vmatprep.subr.mxu0 0.0
  %1992 = vmatpush1.msra.mxu0 0.0
  %1993 = vmatprep.subr.mxu0 0.0
  %1994 = vmatpush1.msra.mxu0 0.0
  %1995 = vmatprep.subr.mxu0 0.0
  %1996 = vmatpush1.msra.mxu0 0.0
  %1997 = vmatprep.subr.mxu0 0.0
  %1998 = vmatpush1.msra.mxu0 %v1965
  %1999 = vmatprep.subr.mxu0 0.0
  %2000 = vmatpush2.msra.mxu0 0.0
  %2001 = vmatprep.subr.mxu0 0.0
  %2002 = vmatpush2.msra.mxu0 0.0
  %2003 = vmatprep.subr.mxu0 0.0
  %2004 = vmatpush2.msra.mxu0 0.0
  %2005 = vmatprep.subr.mxu0 0.0
  %2006 = vmatpush2.msra.mxu0 0.0
  %2007 = vmatprep.subr.mxu0 0.0
  %2008 = vmatpush2.msra.mxu0 0.0
  %2009 = vmatprep.subr.mxu0 0.0
  %2010 = vmatpush2.msra.mxu0 0.0
  %2011 = vmatprep.subr.mxu0 0.0
  %2012 = vmatpush2.msra.mxu0 0.0
  %2013 = vmatprep.subr.mxu0 0.0
  %2014 = vmatpush2.msra.mxu0 0.0
  %2015 = vmatprep.subr.mxu0 0.0
  %2016 = vmatpush2.msra.mxu0 0.0
  %2017 = vmatprep.subr.mxu0 0.0
  %2018 = vmatpush2.msra.mxu0 0.0
  %2019 = vmatprep.subr.mxu0 0.0
  %2020 = vmatpush2.msra.mxu0 0.0
  %2021 = vmatprep.subr.mxu0 0.0
  %2022 = vmatpush2.msra.mxu0 0.0
  %2023 = vmatprep.subr.mxu0 0.0
  %2024 = vmatpush2.msra.mxu0 0.0
  %2025 = vmatprep.subr.mxu0 0.0
  %2026 = vmatpush2.msra.mxu0 0.0
  %2027 = vmatprep.subr.mxu0 0.0
  %2028 = vmatpush2.msra.mxu0 0.0
  %2029 = vmatprep.subr.mxu0 0.0
  %2030 = vmatpush2.msra.mxu0 0.0
  %2031 = vmatprep.mubr.f32.mxu0 0.0
  %2032 = vmatmul.mubr.f32.gmra.mxu0 %v1961
  %v2033 = vpop.f32.mrf.mxu0
  %v2034 = vadd.f32 0.0, %v2033
  %v2035 = vpop.f32.mrf.mxu0
  %2036 = vdwg.mxu0
  %v2037 = vmul.f32 %v2034, %v930
  %v2038 = vld [vmem:[%s424] sm:$0xff]
  %v2039 = vld [vmem:[%s424 + $0x8] sm:$0xff]
  %v2040 = vld [vmem:[%s424 + $0x10] sm:$0xff]
  %v2041 = vld [vmem:[%s424 + $0x18] sm:$0xff]
  %v2042 = vld [vmem:[%s424 + $0x20] sm:$0xff]
  %v2043 = vld [vmem:[%s424 + $0x28] sm:$0xff]
  %v2044 = vld [vmem:[%s424 + $0x30] sm:$0xff]
  %v2045 = vld [vmem:[%s424 + $0x38] sm:$0xff]
  %v2046 = vld [vmem:[%s424 + $0x40] sm:$0xff]
  %v2047 = vld [vmem:[%s424 + $0x48] sm:$0xff]
  %v2048 = vld [vmem:[%s424 + $0x50] sm:$0xff]
  %v2049 = vld [vmem:[%s424 + $0x58] sm:$0xff]
  %2050 = vmatprep.subr.mxu0 0.0
  %2051 = vmatpush1.msra.mxu0 0.0
  %2052 = vmatprep.subr.mxu0 0.0
  %2053 = vmatpush1.msra.mxu0 0.0
  %2054 = vmatprep.subr.mxu0 0.0
  %2055 = vmatpush1.msra.mxu0 0.0
  %2056 = vmatprep.subr.mxu0 0.0
  %2057 = vmatpush1.msra.mxu0 0.0
  %2058 = vmatprep.subr.mxu0 0.0
  %2059 = vmatpush1.msra.mxu0 0.0
  %2060 = vmatprep.subr.mxu0 0.0
  %2061 = vmatpush1.msra.mxu0 0.0
  %2062 = vmatprep.subr.mxu0 0.0
  %2063 = vmatpush1.msra.mxu0 0.0
  %2064 = vmatprep.subr.mxu0 0.0
  %2065 = vmatpush1.msra.mxu0 0.0
  %2066 = vmatprep.subr.mxu0 0.0
  %2067 = vmatpush1.msra.mxu0 0.0
  %2068 = vmatprep.subr.mxu0 0.0
  %2069 = vmatpush1.msra.mxu0 0.0
  %2070 = vmatprep.subr.mxu0 0.0
  %2071 = vmatpush1.msra.mxu0 0.0
  %2072 = vmatprep.subr.mxu0 0.0
  %2073 = vmatpush1.msra.mxu0 0.0
  %2074 = vmatprep.subr.mxu0 0.0
  %2075 = vmatpush1.msra.mxu0 0.0
  %2076 = vmatprep.subr.mxu0 0.0
  %2077 = vmatpush1.msra.mxu0 0.0
  %2078 = vmatprep.subr.mxu0 0.0
  %2079 = vmatpush1.msra.mxu0 0.0
  %2080 = vmatprep.subr.mxu0 0.0
  %2081 = vmatpush1.msra.mxu0 %v2037
  %2082 = vmatprep.subr.mxu0 0.0
  %2083 = vmatpush2.msra.mxu0 0.0
  %2084 = vmatprep.subr.mxu0 0.0
  %2085 = vmatpush2.msra.mxu0 0.0
  %2086 = vmatprep.subr.mxu0 0.0
  %2087 = vmatpush2.msra.mxu0 0.0
  %2088 = vmatprep.subr.mxu0 0.0
  %2089 = vmatpush2.msra.mxu0 0.0
  %2090 = vmatprep.subr.mxu0 0.0
  %2091 = vmatpush2.msra.mxu0 0.0
  %2092 = vmatprep.subr.mxu0 0.0
  %2093 = vmatpush2.msra.mxu0 0.0
  %2094 = vmatprep.subr.mxu0 0.0
  %2095 = vmatpush2.msra.mxu0 0.0
  %2096 = vmatprep.subr.mxu0 0.0
  %2097 = vmatpush2.msra.mxu0 0.0
  %2098 = vmatprep.subr.mxu0 0.0
  %2099 = vmatpush2.msra.mxu0 0.0
  %2100 = vmatprep.subr.mxu0 0.0
  %2101 = vmatpush2.msra.mxu0 0.0
  %2102 = vmatprep.subr.mxu0 0.0
  %2103 = vmatpush2.msra.mxu0 0.0
  %2104 = vmatprep.subr.mxu0 0.0
  %2105 = vmatpush2.msra.mxu0 0.0
  %2106 = vmatprep.subr.mxu0 0.0
  %2107 = vmatpush2.msra.mxu0 0.0
  %2108 = vmatprep.subr.mxu0 0.0
  %2109 = vmatpush2.msra.mxu0 0.0
  %2110 = vmatprep.subr.mxu0 0.0
  %2111 = vmatpush2.msra.mxu0 0.0
  %2112 = vmatprep.subr.mxu0 0.0
  %2113 = vmatpush2.msra.mxu0 0.0
  %2114 = vmatprep.mubr.f32.mxu0 0.0
  %2115 = vmatmul.mubr.f32.gmra.mxu0 %v1284
  %v2116 = vpop.f32.mrf.mxu0
  %v2117 = vadd.f32 %v2038, %v2116
  %v2118 = vpop.f32.mrf.mxu0
  %2119 = vmatprep.mubr.f32.mxu0 0.0
  %2120 = vmatmul.mubr.f32.gmra.mxu0 %v1287
  %v2121 = vpop.f32.mrf.mxu0
  %v2122 = vadd.f32 %v2039, %v2121
  %v2123 = vpop.f32.mrf.mxu0
  %2124 = vmatprep.mubr.f32.mxu0 0.0
  %2125 = vmatmul.mubr.f32.gmra.mxu0 %v1290
  %v2126 = vpop.f32.mrf.mxu0
  %v2127 = vadd.f32 %v2040, %v2126
  %v2128 = vpop.f32.mrf.mxu0
  %2129 = vmatprep.mubr.f32.mxu0 0.0
  %2130 = vmatmul.mubr.f32.gmra.mxu0 %v1293
  %v2131 = vpop.f32.mrf.mxu0
  %v2132 = vadd.f32 %v2041, %v2131
  %v2133 = vpop.f32.mrf.mxu0
  %2134 = vmatprep.mubr.f32.mxu0 0.0
  %2135 = vmatmul.mubr.f32.gmra.mxu0 %v1296
  %v2136 = vpop.f32.mrf.mxu0
  %v2137 = vadd.f32 %v2042, %v2136
  %v2138 = vpop.f32.mrf.mxu0
  %2139 = vmatprep.mubr.f32.mxu0 0.0
  %2140 = vmatmul.mubr.f32.gmra.mxu0 %v1299
  %v2141 = vpop.f32.mrf.mxu0
  %v2142 = vadd.f32 %v2043, %v2141
  %v2143 = vpop.f32.mrf.mxu0
  %2144 = vmatprep.mubr.f32.mxu0 0.0
  %2145 = vmatmul.mubr.f32.gmra.mxu0 %v1302
  %v2146 = vpop.f32.mrf.mxu0
  %v2147 = vadd.f32 %v2044, %v2146
  %v2148 = vpop.f32.mrf.mxu0
  %2149 = vmatprep.mubr.f32.mxu0 0.0
  %2150 = vmatmul.mubr.f32.gmra.mxu0 %v1305
  %v2151 = vpop.f32.mrf.mxu0
  %v2152 = vadd.f32 %v2045, %v2151
  %v2153 = vpop.f32.mrf.mxu0
  %2154 = vmatprep.mubr.f32.mxu0 0.0
  %2155 = vmatmul.mubr.f32.gmra.mxu0 %v1308
  %v2156 = vpop.f32.mrf.mxu0
  %v2157 = vadd.f32 %v2046, %v2156
  %v2158 = vpop.f32.mrf.mxu0
  %2159 = vmatprep.mubr.f32.mxu0 0.0
  %2160 = vmatmul.mubr.f32.gmra.mxu0 %v1311
  %v2161 = vpop.f32.mrf.mxu0
  %v2162 = vadd.f32 %v2047, %v2161
  %v2163 = vpop.f32.mrf.mxu0
  %2164 = vmatprep.mubr.f32.mxu0 0.0
  %2165 = vmatmul.mubr.f32.gmra.mxu0 %v1314
  %v2166 = vpop.f32.mrf.mxu0
  %v2167 = vadd.f32 %v2048, %v2166
  %v2168 = vpop.f32.mrf.mxu0
  %2169 = vmatprep.mubr.f32.mxu0 0.0
  %2170 = vmatmul.mubr.f32.gmra.mxu0 %v1317
  %v2171 = vpop.f32.mrf.mxu0
  %v2172 = vadd.f32 %v2049, %v2171
  %v2173 = vpop.f32.mrf.mxu0
  %2174 = vdwg.mxu0
  %s2175 = scalar_lea.vmem %s7, 32
  %v2176 = vld [vmem:[%s2175] sm:$0xff]
  %v2177 = vld [vmem:[%s2175 + $0x8] sm:$0xff]
  %v2178 = vld [vmem:[%s2175 + $0x10] sm:$0x1f]
  %v2179 = vld [vmem:[%s2175 + $0x18] sm:$0x1f]
  %v2181 = vsel %vm232, %v2117, 0
  %v2184 = vsel %vm232, %v2122, 0
  %v2187 = vsel %vm232, %v2127, 0
  %v2190 = vsel %vm232, %v2132, 0
  %v2193 = vsel %vm232, %v2137, 0
  %v2196 = vsel %vm232, %v2142, 0
  %v2199 = vsel %vm232, %v2147, 0
  %v2202 = vsel %vm232, %v2152, 0
  %v2205 = vsel %vm232, %v2157, 0
  %v2208 = vsel %vm232, %v2162, 0
  %v2211 = vsel %vm232, %v2167, 0
  %v2214 = vsel %vm232, %v2172, 0
  %v2217 = vsel %vm1484, %v2178, 0
  %v2220 = vsel %vm1484, %v2179, 0
  %2222 = vmatprep.subr.mxu0 0.0
  %2223 = vmatpush1.msra.mxu0 0.0
  %2224 = vmatprep.subr.mxu0 0.0
  %2225 = vmatpush1.msra.mxu0 0.0
  %2226 = vmatprep.subr.mxu0 0.0
  %2227 = vmatpush1.msra.mxu0 0.0
  %2228 = vmatprep.subr.mxu0 0.0
  %2229 = vmatpush1.msra.mxu0 0.0
  %2230 = vmatprep.subr.mxu0 0.0
  %2231 = vmatpush1.msra.mxu0 0.0
  %2232 = vmatprep.subr.mxu0 0.0
  %2233 = vmatpush1.msra.mxu0 0.0
  %2234 = vmatprep.subr.mxu0 0.0
  %2235 = vmatpush1.msra.mxu0 0.0
  %2236 = vmatprep.subr.mxu0 0.0
  %2237 = vmatpush1.msra.mxu0 0.0
  %2238 = vmatprep.subr.mxu0 0.0
  %2239 = vmatpush1.msra.mxu0 0.0
  %2240 = vmatprep.subr.mxu0 0.0
  %2241 = vmatpush1.msra.mxu0 0.0
  %2242 = vmatprep.subr.mxu0 0.0
  %2243 = vmatpush1.msra.mxu0 0.0
  %2244 = vmatprep.subr.mxu0 0.0
  %2245 = vmatpush1.msra.mxu0 0.0
  %2246 = vmatprep.subr.mxu0 0.0
  %2247 = vmatpush1.msra.mxu0 0.0
  %2248 = vmatprep.subr.mxu0 0.0
  %2249 = vmatpush1.msra.mxu0 0.0
  %2250 = vmatprep.subr.mxu0 %v2220
  %2251 = vmatpush1.msra.mxu0 %v2217
  %2252 = vmatprep.subr.mxu0 %v2177
  %2253 = vmatpush1.msra.mxu0 %v2176
  %2254 = vmatprep.subr.mxu0 0.0
  %2255 = vmatpush2.msra.mxu0 0.0
  %2256 = vmatprep.subr.mxu0 0.0
  %2257 = vmatpush2.msra.mxu0 0.0
  %2258 = vmatprep.subr.mxu0 0.0
  %2259 = vmatpush2.msra.mxu0 0.0
  %2260 = vmatprep.subr.mxu0 0.0
  %2261 = vmatpush2.msra.mxu0 0.0
  %2262 = vmatprep.subr.mxu0 0.0
  %2263 = vmatpush2.msra.mxu0 0.0
  %2264 = vmatprep.subr.mxu0 0.0
  %2265 = vmatpush2.msra.mxu0 0.0
  %2266 = vmatprep.subr.mxu0 0.0
  %2267 = vmatpush2.msra.mxu0 0.0
  %2268 = vmatprep.subr.mxu0 0.0
  %2269 = vmatpush2.msra.mxu0 0.0
  %2270 = vmatprep.subr.mxu0 0.0
  %2271 = vmatpush2.msra.mxu0 0.0
  %2272 = vmatprep.subr.mxu0 0.0
  %2273 = vmatpush2.msra.mxu0 0.0
  %2274 = vmatprep.subr.mxu0 0.0
  %2275 = vmatpush2.msra.mxu0 0.0
  %2276 = vmatprep.subr.mxu0 0.0
  %2277 = vmatpush2.msra.mxu0 0.0
  %2278 = vmatprep.subr.mxu0 0.0
  %2279 = vmatpush2.msra.mxu0 0.0
  %2280 = vmatprep.subr.mxu0 0.0
  %2281 = vmatpush2.msra.mxu0 0.0
  %2282 = vmatprep.subr.mxu0 0.0
  %2283 = vmatpush2.msra.mxu0 0.0
  %2284 = vmatprep.subr.mxu0 0.0
  %2285 = vmatpush2.msra.mxu0 0.0
  %2286 = vmatprep.mubr.f32.mxu0 0.0
  %2287 = vmatmul.mubr.f32.gmra.mxu0 %v2181
  %v2288 = vpop.f32.mrf.mxu0
  %v2289 = vadd.f32 0.0, %v2288
  %v2290 = vpop.f32.mrf.mxu0
  %v2291 = vadd.f32 0.0, %v2290
  %2292 = vmatprep.mubr.f32.mxu0 0.0
  %2293 = vmatmul.mubr.f32.gmra.mxu0 %v2184
  %v2294 = vpop.f32.mrf.mxu0
  %v2295 = vadd.f32 0.0, %v2294
  %v2296 = vpop.f32.mrf.mxu0
  %v2297 = vadd.f32 0.0, %v2296
  %2298 = vmatprep.mubr.f32.mxu0 0.0
  %2299 = vmatmul.mubr.f32.gmra.mxu0 %v2187
  %v2300 = vpop.f32.mrf.mxu0
  %v2301 = vadd.f32 0.0, %v2300
  %v2302 = vpop.f32.mrf.mxu0
  %v2303 = vadd.f32 0.0, %v2302
  %2304 = vmatprep.mubr.f32.mxu0 0.0
  %2305 = vmatmul.mubr.f32.gmra.mxu0 %v2190
  %v2306 = vpop.f32.mrf.mxu0
  %v2307 = vadd.f32 0.0, %v2306
  %v2308 = vpop.f32.mrf.mxu0
  %v2309 = vadd.f32 0.0, %v2308
  %2310 = vmatprep.mubr.f32.mxu0 0.0
  %2311 = vmatmul.mubr.f32.gmra.mxu0 %v2193
  %v2312 = vpop.f32.mrf.mxu0
  %v2313 = vadd.f32 0.0, %v2312
  %v2314 = vpop.f32.mrf.mxu0
  %v2315 = vadd.f32 0.0, %v2314
  %2316 = vmatprep.mubr.f32.mxu0 0.0
  %2317 = vmatmul.mubr.f32.gmra.mxu0 %v2196
  %v2318 = vpop.f32.mrf.mxu0
  %v2319 = vadd.f32 0.0, %v2318
  %v2320 = vpop.f32.mrf.mxu0
  %v2321 = vadd.f32 0.0, %v2320
  %2322 = vmatprep.mubr.f32.mxu0 0.0
  %2323 = vmatmul.mubr.f32.gmra.mxu0 %v2199
  %v2324 = vpop.f32.mrf.mxu0
  %v2325 = vadd.f32 0.0, %v2324
  %v2326 = vpop.f32.mrf.mxu0
  %v2327 = vadd.f32 0.0, %v2326
  %2328 = vmatprep.mubr.f32.mxu0 0.0
  %2329 = vmatmul.mubr.f32.gmra.mxu0 %v2202
  %v2330 = vpop.f32.mrf.mxu0
  %v2331 = vadd.f32 0.0, %v2330
  %v2332 = vpop.f32.mrf.mxu0
  %v2333 = vadd.f32 0.0, %v2332
  %2334 = vmatprep.mubr.f32.mxu0 0.0
  %2335 = vmatmul.mubr.f32.gmra.mxu0 %v2205
  %v2336 = vpop.f32.mrf.mxu0
  %v2337 = vadd.f32 0.0, %v2336
  %v2338 = vpop.f32.mrf.mxu0
  %v2339 = vadd.f32 0.0, %v2338
  %2340 = vmatprep.mubr.f32.mxu0 0.0
  %2341 = vmatmul.mubr.f32.gmra.mxu0 %v2208
  %v2342 = vpop.f32.mrf.mxu0
  %v2343 = vadd.f32 0.0, %v2342
  %v2344 = vpop.f32.mrf.mxu0
  %v2345 = vadd.f32 0.0, %v2344
  %2346 = vmatprep.mubr.f32.mxu0 0.0
  %2347 = vmatmul.mubr.f32.gmra.mxu0 %v2211
  %v2348 = vpop.f32.mrf.mxu0
  %v2349 = vadd.f32 0.0, %v2348
  %v2350 = vpop.f32.mrf.mxu0
  %v2351 = vadd.f32 0.0, %v2350
  %2352 = vmatprep.mubr.f32.mxu0 0.0
  %2353 = vmatmul.mubr.f32.gmra.mxu0 %v2214
  %v2354 = vpop.f32.mrf.mxu0
  %v2355 = vadd.f32 0.0, %v2354
  %v2356 = vpop.f32.mrf.mxu0
  %v2357 = vadd.f32 0.0, %v2356
  %2358 = vdwg.mxu0
  %v2359 = vsel %vm1658, %v2289, 0.0
  %v2360 = vsel %vm1659, %v2291, 0.0
  %v2361 = vsel %vm1660, %v2295, 0.0
  %v2362 = vsel %vm1661, %v2297, 0.0
  %v2363 = vsel %vm1662, %v2301, 0.0
  %v2364 = vsel %vm1663, %v2303, 0.0
  %v2365 = vsel %vm1664, %v2307, 0.0
  %v2366 = vsel %vm1665, %v2309, 0.0
  %v2367 = vsel %vm1666, %v2313, 0.0
  %v2368 = vsel %vm1667, %v2315, 0.0
  %v2369 = vsel %vm1668, %v2319, 0.0
  %v2370 = vsel %vm1669, %v2321, 0.0
  %v2371 = vsel %vm1670, %v2325, 0.0
  %v2372 = vsel %vm1671, %v2327, 0.0
  %v2373 = vsel %vm1672, %v2331, 0.0
  %v2374 = vsel %vm1673, %v2333, 0.0
  %v2375 = vsel %vm1674, %v2337, 0.0
  %v2376 = vsel %vm1675, %v2339, 0.0
  %v2377 = vsel %vm1676, %v2343, 0.0
  %v2378 = vsel %vm1677, %v2345, 0.0
  %v2379 = vsel %vm1678, %v2349, 0.0
  %v2380 = vsel %vm1679, %v2351, 0.0
  %v2381 = vsel %vm1680, %v2355, 0.0
  %v2382 = vsel %vm1681, %v2357, 0.0
  %2383 = vmatprep.subr.mxu0 0.0
  %2384 = vmatpush1.msra.mxu0 0.0
  %2385 = vmatprep.subr.mxu0 0.0
  %2386 = vmatpush1.msra.mxu0 0.0
  %2387 = vmatprep.subr.mxu0 0.0
  %2388 = vmatpush1.msra.mxu0 0.0
  %2389 = vmatprep.subr.mxu0 0.0
  %2390 = vmatpush1.msra.mxu0 0.0
  %2391 = vmatprep.subr.mxu0 %v2382
  %2392 = vmatpush1.msra.mxu0 %v2381
  %2393 = vmatprep.subr.mxu0 %v2380
  %2394 = vmatpush1.msra.mxu0 %v2379
  %2395 = vmatprep.subr.mxu0 %v2378
  %2396 = vmatpush1.msra.mxu0 %v2377
  %2397 = vmatprep.subr.mxu0 %v2376
  %2398 = vmatpush1.msra.mxu0 %v2375
  %2399 = vmatprep.subr.mxu0 %v2374
  %2400 = vmatpush1.msra.mxu0 %v2373
  %2401 = vmatprep.subr.mxu0 %v2372
  %2402 = vmatpush1.msra.mxu0 %v2371
  %2403 = vmatprep.subr.mxu0 %v2370
  %2404 = vmatpush1.msra.mxu0 %v2369
  %2405 = vmatprep.subr.mxu0 %v2368
  %2406 = vmatpush1.msra.mxu0 %v2367
  %2407 = vmatprep.subr.mxu0 %v2366
  %2408 = vmatpush1.msra.mxu0 %v2365
  %2409 = vmatprep.subr.mxu0 %v2364
  %2410 = vmatpush1.msra.mxu0 %v2363
  %2411 = vmatprep.subr.mxu0 %v2362
  %2412 = vmatpush1.msra.mxu0 %v2361
  %2413 = vmatprep.subr.mxu0 %v2360
  %2414 = vmatpush1.msra.mxu0 %v2359
  %2415 = vmatprep.subr.mxu0 0.0
  %2416 = vmatpush2.msra.mxu0 0.0
  %2417 = vmatprep.subr.mxu0 0.0
  %2418 = vmatpush2.msra.mxu0 0.0
  %2419 = vmatprep.subr.mxu0 0.0
  %2420 = vmatpush2.msra.mxu0 0.0
  %2421 = vmatprep.subr.mxu0 0.0
  %2422 = vmatpush2.msra.mxu0 0.0
  %2423 = vmatprep.subr.mxu0 0.0
  %2424 = vmatpush2.msra.mxu0 0.0
  %2425 = vmatprep.subr.mxu0 0.0
  %2426 = vmatpush2.msra.mxu0 0.0
  %2427 = vmatprep.subr.mxu0 0.0
  %2428 = vmatpush2.msra.mxu0 0.0
  %2429 = vmatprep.subr.mxu0 0.0
  %2430 = vmatpush2.msra.mxu0 0.0
  %2431 = vmatprep.subr.mxu0 0.0
  %2432 = vmatpush2.msra.mxu0 0.0
  %2433 = vmatprep.subr.mxu0 0.0
  %2434 = vmatpush2.msra.mxu0 0.0
  %2435 = vmatprep.subr.mxu0 0.0
  %2436 = vmatpush2.msra.mxu0 0.0
  %2437 = vmatprep.subr.mxu0 0.0
  %2438 = vmatpush2.msra.mxu0 0.0
  %2439 = vmatprep.subr.mxu0 0.0
  %2440 = vmatpush2.msra.mxu0 0.0
  %2441 = vmatprep.subr.mxu0 0.0
  %2442 = vmatpush2.msra.mxu0 0.0
  %2443 = vmatprep.subr.mxu0 0.0
  %2444 = vmatpush2.msra.mxu0 0.0
  %2445 = vmatprep.subr.mxu0 0.0
  %2446 = vmatpush2.msra.mxu0 0.0
  %2447 = vmatprep.mubr.f32.mxu0 0.0
  %2448 = vmatmul.mubr.f32.gmra.mxu0 %v1803
  %v2449 = vpop.f32.mrf.mxu0
  %v2450 = vadd.f32 0.0, %v2449
  %v2451 = vpop.f32.mrf.mxu0
  %v2452 = vadd.f32 0.0, %v2451
  %2453 = vdwg.mxu0
  %s2454 = scalar_lea.vmem %s8, 1
  %v2455 = vld [vmem:[%s2454] sm:$0x1]
  %v2457 = vlaneseq
  %v2458 = vshrl.u32 %v2457, 7
  %v2459 = vsub.s32 0, %v2458
  %v2460 = vrot.slane %v2455, %v2459
  %v2463 = vsel %vm1883, %v2452, 0
  %2465 = vmatprep.subr.mxu0 0.0
  %2466 = vmatpush1.msra.mxu0 %v1790
  %2467 = vmatprep.subr.mxu0 0.0
  %2468 = vmatpush1.msra.mxu0 %v1789
  %2469 = vmatprep.subr.mxu0 0.0
  %2470 = vmatpush1.msra.mxu0 %v1788
  %2471 = vmatprep.subr.mxu0 0.0
  %2472 = vmatpush1.msra.mxu0 %v1787
  %2473 = vmatprep.subr.mxu0 0.0
  %2474 = vmatpush1.msra.mxu0 %v1786
  %2475 = vmatprep.subr.mxu0 0.0
  %2476 = vmatpush1.msra.mxu0 %v1785
  %2477 = vmatprep.subr.mxu0 0.0
  %2478 = vmatpush1.msra.mxu0 %v1784
  %2479 = vmatprep.subr.mxu0 0.0
  %2480 = vmatpush1.msra.mxu0 %v1783
  %2481 = vmatprep.subr.mxu0 0.0
  %2482 = vmatpush1.msra.mxu0 %v1782
  %2483 = vmatprep.subr.mxu0 0.0
  %2484 = vmatpush1.msra.mxu0 %v1781
  %2485 = vmatprep.subr.mxu0 0.0
  %2486 = vmatpush1.msra.mxu0 %v1780
  %2487 = vmatprep.subr.mxu0 0.0
  %2488 = vmatpush1.msra.mxu0 %v1779
  %2489 = vmatprep.subr.mxu0 0.0
  %2490 = vmatpush1.msra.mxu0 %v1778
  %2491 = vmatprep.subr.mxu0 0.0
  %2492 = vmatpush1.msra.mxu0 %v1777
  %2493 = vmatprep.subr.mxu0 0.0
  %2494 = vmatpush1.msra.mxu0 %v1776
  %2495 = vmatprep.subr.mxu0 0.0
  %2496 = vmatpush1.msra.mxu0 %v1775
  %2497 = vmatprep.subr.mxu0 0.0
  %2498 = vmatpush2.msra.mxu0 0.0
  %2499 = vmatprep.subr.mxu0 0.0
  %2500 = vmatpush2.msra.mxu0 0.0
  %2501 = vmatprep.subr.mxu0 0.0
  %2502 = vmatpush2.msra.mxu0 0.0
  %2503 = vmatprep.subr.mxu0 0.0
  %2504 = vmatpush2.msra.mxu0 0.0
  %2505 = vmatprep.subr.mxu0 0.0
  %2506 = vmatpush2.msra.mxu0 0.0
  %2507 = vmatprep.subr.mxu0 0.0
  %2508 = vmatpush2.msra.mxu0 0.0
  %2509 = vmatprep.subr.mxu0 0.0
  %2510 = vmatpush2.msra.mxu0 %v1800
  %2511 = vmatprep.subr.mxu0 0.0
  %2512 = vmatpush2.msra.mxu0 %v1799
  %2513 = vmatprep.subr.mxu0 0.0
  %2514 = vmatpush2.msra.mxu0 %v1798
  %2515 = vmatprep.subr.mxu0 0.0
  %2516 = vmatpush2.msra.mxu0 %v1797
  %2517 = vmatprep.subr.mxu0 0.0
  %2518 = vmatpush2.msra.mxu0 %v1796
  %2519 = vmatprep.subr.mxu0 0.0
  %2520 = vmatpush2.msra.mxu0 %v1795
  %2521 = vmatprep.subr.mxu0 0.0
  %2522 = vmatpush2.msra.mxu0 %v1794
  %2523 = vmatprep.subr.mxu0 0.0
  %2524 = vmatpush2.msra.mxu0 %v1793
  %2525 = vmatprep.subr.mxu0 0.0
  %2526 = vmatpush2.msra.mxu0 %v1792
  %2527 = vmatprep.subr.mxu0 0.0
  %2528 = vmatpush2.msra.mxu0 %v1791
  %2529 = vmatprep.mubr.f32.mxu0 %v2463
  %2530 = vmatmul.mubr.f32.gmra.mxu0 %v2450
  %v2531 = vpop.f32.mrf.mxu0
  %v2532 = vadd.f32 %v2460, %v2531
  %v2533 = vpop.f32.mrf.mxu0
  %2534 = vdwg.mxu0
  %v2535 = vmax.f32 %v2532, 0.0
  %v2537 = vsel %vm1963, %v2535, 0
  %2539 = vmatprep.subr.mxu0 0.0
  %2540 = vmatpush1.msra.mxu0 0.0
  %2541 = vmatprep.subr.mxu0 0.0
  %2542 = vmatpush1.msra.mxu0 0.0
  %2543 = vmatprep.subr.mxu0 0.0
  %2544 = vmatpush1.msra.mxu0 0.0
  %2545 = vmatprep.subr.mxu0 0.0
  %2546 = vmatpush1.msra.mxu0 0.0
  %2547 = vmatprep.subr.mxu0 0.0
  %2548 = vmatpush1.msra.mxu0 0.0
  %2549 = vmatprep.subr.mxu0 0.0
  %2550 = vmatpush1.msra.mxu0 0.0
  %2551 = vmatprep.subr.mxu0 0.0
  %2552 = vmatpush1.msra.mxu0 0.0
  %2553 = vmatprep.subr.mxu0 0.0
  %2554 = vmatpush1.msra.mxu0 0.0
  %2555 = vmatprep.subr.mxu0 0.0
  %2556 = vmatpush1.msra.mxu0 0.0
  %2557 = vmatprep.subr.mxu0 0.0
  %2558 = vmatpush1.msra.mxu0 0.0
  %2559 = vmatprep.subr.mxu0 0.0
  %2560 = vmatpush1.msra.mxu0 0.0
  %2561 = vmatprep.subr.mxu0 0.0
  %2562 = vmatpush1.msra.mxu0 0.0
  %2563 = vmatprep.subr.mxu0 0.0
  %2564 = vmatpush1.msra.mxu0 0.0
  %2565 = vmatprep.subr.mxu0 0.0
  %2566 = vmatpush1.msra.mxu0 0.0
  %2567 = vmatprep.subr.mxu0 0.0
  %2568 = vmatpush1.msra.mxu0 0.0
  %2569 = vmatprep.subr.mxu0 0.0
  %2570 = vmatpush1.msra.mxu0 %v2537
  %2571 = vmatprep.subr.mxu0 0.0
  %2572 = vmatpush2.msra.mxu0 0.0
  %2573 = vmatprep.subr.mxu0 0.0
  %2574 = vmatpush2.msra.mxu0 0.0
  %2575 = vmatprep.subr.mxu0 0.0
  %2576 = vmatpush2.msra.mxu0 0.0
  %2577 = vmatprep.subr.mxu0 0.0
  %2578 = vmatpush2.msra.mxu0 0.0
  %2579 = vmatprep.subr.mxu0 0.0
  %2580 = vmatpush2.msra.mxu0 0.0
  %2581 = vmatprep.subr.mxu0 0.0
  %2582 = vmatpush2.msra.mxu0 0.0
  %2583 = vmatprep.subr.mxu0 0.0
  %2584 = vmatpush2.msra.mxu0 0.0
  %2585 = vmatprep.subr.mxu0 0.0
  %2586 = vmatpush2.msra.mxu0 0.0
  %2587 = vmatprep.subr.mxu0 0.0
  %2588 = vmatpush2.msra.mxu0 0.0
  %2589 = vmatprep.subr.mxu0 0.0
  %2590 = vmatpush2.msra.mxu0 0.0
  %2591 = vmatprep.subr.mxu0 0.0
  %2592 = vmatpush2.msra.mxu0 0.0
  %2593 = vmatprep.subr.mxu0 0.0
  %2594 = vmatpush2.msra.mxu0 0.0
  %2595 = vmatprep.subr.mxu0 0.0
  %2596 = vmatpush2.msra.mxu0 0.0
  %2597 = vmatprep.subr.mxu0 0.0
  %2598 = vmatpush2.msra.mxu0 0.0
  %2599 = vmatprep.subr.mxu0 0.0
  %2600 = vmatpush2.msra.mxu0 0.0
  %2601 = vmatprep.subr.mxu0 0.0
  %2602 = vmatpush2.msra.mxu0 0.0
  %2603 = vmatprep.mubr.f32.mxu0 0.0
  %2604 = vmatmul.mubr.f32.gmra.mxu0 %v1961
  %v2605 = vpop.f32.mrf.mxu0
  %v2606 = vadd.f32 0.0, %v2605
  %v2607 = vpop.f32.mrf.mxu0
  %2608 = vdwg.mxu0
  %v2609 = vmul.f32 %v2606, %v1038
  %v2610 = vld [vmem:[%s616] sm:$0xff]
  %v2611 = vld [vmem:[%s616 + $0x8] sm:$0xff]
  %v2612 = vld [vmem:[%s616 + $0x10] sm:$0xff]
  %v2613 = vld [vmem:[%s616 + $0x18] sm:$0xff]
  %v2614 = vld [vmem:[%s616 + $0x20] sm:$0xff]
  %v2615 = vld [vmem:[%s616 + $0x28] sm:$0xff]
  %v2616 = vld [vmem:[%s616 + $0x30] sm:$0xff]
  %v2617 = vld [vmem:[%s616 + $0x38] sm:$0xff]
  %v2618 = vld [vmem:[%s616 + $0x40] sm:$0xff]
  %v2619 = vld [vmem:[%s616 + $0x48] sm:$0xff]
  %v2620 = vld [vmem:[%s616 + $0x50] sm:$0xff]
  %v2621 = vld [vmem:[%s616 + $0x58] sm:$0xff]
  %2622 = vmatprep.subr.mxu0 0.0
  %2623 = vmatpush1.msra.mxu0 0.0
  %2624 = vmatprep.subr.mxu0 0.0
  %2625 = vmatpush1.msra.mxu0 0.0
  %2626 = vmatprep.subr.mxu0 0.0
  %2627 = vmatpush1.msra.mxu0 0.0
  %2628 = vmatprep.subr.mxu0 0.0
  %2629 = vmatpush1.msra.mxu0 0.0
  %2630 = vmatprep.subr.mxu0 0.0
  %2631 = vmatpush1.msra.mxu0 0.0
  %2632 = vmatprep.subr.mxu0 0.0
  %2633 = vmatpush1.msra.mxu0 0.0
  %2634 = vmatprep.subr.mxu0 0.0
  %2635 = vmatpush1.msra.mxu0 0.0
  %2636 = vmatprep.subr.mxu0 0.0
  %2637 = vmatpush1.msra.mxu0 0.0
  %2638 = vmatprep.subr.mxu0 0.0
  %2639 = vmatpush1.msra.mxu0 0.0
  %2640 = vmatprep.subr.mxu0 0.0
  %2641 = vmatpush1.msra.mxu0 0.0
  %2642 = vmatprep.subr.mxu0 0.0
  %2643 = vmatpush1.msra.mxu0 0.0
  %2644 = vmatprep.subr.mxu0 0.0
  %2645 = vmatpush1.msra.mxu0 0.0
  %2646 = vmatprep.subr.mxu0 0.0
  %2647 = vmatpush1.msra.mxu0 0.0
  %2648 = vmatprep.subr.mxu0 0.0
  %2649 = vmatpush1.msra.mxu0 0.0
  %2650 = vmatprep.subr.mxu0 0.0
  %2651 = vmatpush1.msra.mxu0 0.0
  %2652 = vmatprep.subr.mxu0 0.0
  %2653 = vmatpush1.msra.mxu0 %v2609
  %2654 = vmatprep.subr.mxu0 0.0
  %2655 = vmatpush2.msra.mxu0 0.0
  %2656 = vmatprep.subr.mxu0 0.0
  %2657 = vmatpush2.msra.mxu0 0.0
  %2658 = vmatprep.subr.mxu0 0.0
  %2659 = vmatpush2.msra.mxu0 0.0
  %2660 = vmatprep.subr.mxu0 0.0
  %2661 = vmatpush2.msra.mxu0 0.0
  %2662 = vmatprep.subr.mxu0 0.0
  %2663 = vmatpush2.msra.mxu0 0.0
  %2664 = vmatprep.subr.mxu0 0.0
  %2665 = vmatpush2.msra.mxu0 0.0
  %2666 = vmatprep.subr.mxu0 0.0
  %2667 = vmatpush2.msra.mxu0 0.0
  %2668 = vmatprep.subr.mxu0 0.0
  %2669 = vmatpush2.msra.mxu0 0.0
  %2670 = vmatprep.subr.mxu0 0.0
  %2671 = vmatpush2.msra.mxu0 0.0
  %2672 = vmatprep.subr.mxu0 0.0
  %2673 = vmatpush2.msra.mxu0 0.0
  %2674 = vmatprep.subr.mxu0 0.0
  %2675 = vmatpush2.msra.mxu0 0.0
  %2676 = vmatprep.subr.mxu0 0.0
  %2677 = vmatpush2.msra.mxu0 0.0
  %2678 = vmatprep.subr.mxu0 0.0
  %2679 = vmatpush2.msra.mxu0 0.0
  %2680 = vmatprep.subr.mxu0 0.0
  %2681 = vmatpush2.msra.mxu0 0.0
  %2682 = vmatprep.subr.mxu0 0.0
  %2683 = vmatpush2.msra.mxu0 0.0
  %2684 = vmatprep.subr.mxu0 0.0
  %2685 = vmatpush2.msra.mxu0 0.0
  %2686 = vmatprep.mubr.f32.mxu0 0.0
  %2687 = vmatmul.mubr.f32.gmra.mxu0 %v1284
  %v2688 = vpop.f32.mrf.mxu0
  %v2689 = vadd.f32 %v2610, %v2688
  %v2690 = vpop.f32.mrf.mxu0
  %2691 = vmatprep.mubr.f32.mxu0 0.0
  %2692 = vmatmul.mubr.f32.gmra.mxu0 %v1287
  %v2693 = vpop.f32.mrf.mxu0
  %v2694 = vadd.f32 %v2611, %v2693
  %v2695 = vpop.f32.mrf.mxu0
  %2696 = vmatprep.mubr.f32.mxu0 0.0
  %2697 = vmatmul.mubr.f32.gmra.mxu0 %v1290
  %v2698 = vpop.f32.mrf.mxu0
  %v2699 = vadd.f32 %v2612, %v2698
  %v2700 = vpop.f32.mrf.mxu0
  %2701 = vmatprep.mubr.f32.mxu0 0.0
  %2702 = vmatmul.mubr.f32.gmra.mxu0 %v1293
  %v2703 = vpop.f32.mrf.mxu0
  %v2704 = vadd.f32 %v2613, %v2703
  %v2705 = vpop.f32.mrf.mxu0
  %2706 = vmatprep.mubr.f32.mxu0 0.0
  %2707 = vmatmul.mubr.f32.gmra.mxu0 %v1296
  %v2708 = vpop.f32.mrf.mxu0
  %v2709 = vadd.f32 %v2614, %v2708
  %v2710 = vpop.f32.mrf.mxu0
  %2711 = vmatprep.mubr.f32.mxu0 0.0
  %2712 = vmatmul.mubr.f32.gmra.mxu0 %v1299
  %v2713 = vpop.f32.mrf.mxu0
  %v2714 = vadd.f32 %v2615, %v2713
  %v2715 = vpop.f32.mrf.mxu0
  %2716 = vmatprep.mubr.f32.mxu0 0.0
  %2717 = vmatmul.mubr.f32.gmra.mxu0 %v1302
  %v2718 = vpop.f32.mrf.mxu0
  %v2719 = vadd.f32 %v2616, %v2718
  %v2720 = vpop.f32.mrf.mxu0
  %2721 = vmatprep.mubr.f32.mxu0 0.0
  %2722 = vmatmul.mubr.f32.gmra.mxu0 %v1305
  %v2723 = vpop.f32.mrf.mxu0
  %v2724 = vadd.f32 %v2617, %v2723
  %v2725 = vpop.f32.mrf.mxu0
  %2726 = vmatprep.mubr.f32.mxu0 0.0
  %2727 = vmatmul.mubr.f32.gmra.mxu0 %v1308
  %v2728 = vpop.f32.mrf.mxu0
  %v2729 = vadd.f32 %v2618, %v2728
  %v2730 = vpop.f32.mrf.mxu0
  %2731 = vmatprep.mubr.f32.mxu0 0.0
  %2732 = vmatmul.mubr.f32.gmra.mxu0 %v1311
  %v2733 = vpop.f32.mrf.mxu0
  %v2734 = vadd.f32 %v2619, %v2733
  %v2735 = vpop.f32.mrf.mxu0
  %2736 = vmatprep.mubr.f32.mxu0 0.0
  %2737 = vmatmul.mubr.f32.gmra.mxu0 %v1314
  %v2738 = vpop.f32.mrf.mxu0
  %v2739 = vadd.f32 %v2620, %v2738
  %v2740 = vpop.f32.mrf.mxu0
  %2741 = vmatprep.mubr.f32.mxu0 0.0
  %2742 = vmatmul.mubr.f32.gmra.mxu0 %v1317
  %v2743 = vpop.f32.mrf.mxu0
  %v2744 = vadd.f32 %v2621, %v2743
  %v2745 = vpop.f32.mrf.mxu0
  %2746 = vdwg.mxu0
  %s2747 = scalar_lea.vmem %s7, 64
  %v2748 = vld [vmem:[%s2747] sm:$0xff]
  %v2749 = vld [vmem:[%s2747 + $0x8] sm:$0xff]
  %v2750 = vld [vmem:[%s2747 + $0x10] sm:$0x1f]
  %v2751 = vld [vmem:[%s2747 + $0x18] sm:$0x1f]
  %v2753 = vsel %vm232, %v2689, 0
  %v2756 = vsel %vm232, %v2694, 0
  %v2759 = vsel %vm232, %v2699, 0
  %v2762 = vsel %vm232, %v2704, 0
  %v2765 = vsel %vm232, %v2709, 0
  %v2768 = vsel %vm232, %v2714, 0
  %v2771 = vsel %vm232, %v2719, 0
  %v2774 = vsel %vm232, %v2724, 0
  %v2777 = vsel %vm232, %v2729, 0
  %v2780 = vsel %vm232, %v2734, 0
  %v2783 = vsel %vm232, %v2739, 0
  %v2786 = vsel %vm232, %v2744, 0
  %v2789 = vsel %vm1484, %v2750, 0
  %v2792 = vsel %vm1484, %v2751, 0
  %2794 = vmatprep.subr.mxu0 0.0
  %2795 = vmatpush1.msra.mxu0 0.0
  %2796 = vmatprep.subr.mxu0 0.0
  %2797 = vmatpush1.msra.mxu0 0.0
  %2798 = vmatprep.subr.mxu0 0.0
  %2799 = vmatpush1.msra.mxu0 0.0
  %2800 = vmatprep.subr.mxu0 0.0
  %2801 = vmatpush1.msra.mxu0 0.0
  %2802 = vmatprep.subr.mxu0 0.0
  %2803 = vmatpush1.msra.mxu0 0.0
  %2804 = vmatprep.subr.mxu0 0.0
  %2805 = vmatpush1.msra.mxu0 0.0
  %2806 = vmatprep.subr.mxu0 0.0
  %2807 = vmatpush1.msra.mxu0 0.0
  %2808 = vmatprep.subr.mxu0 0.0
  %2809 = vmatpush1.msra.mxu0 0.0
  %2810 = vmatprep.subr.mxu0 0.0
  %2811 = vmatpush1.msra.mxu0 0.0
  %2812 = vmatprep.subr.mxu0 0.0
  %2813 = vmatpush1.msra.mxu0 0.0
  %2814 = vmatprep.subr.mxu0 0.0
  %2815 = vmatpush1.msra.mxu0 0.0
  %2816 = vmatprep.subr.mxu0 0.0
  %2817 = vmatpush1.msra.mxu0 0.0
  %2818 = vmatprep.subr.mxu0 0.0
  %2819 = vmatpush1.msra.mxu0 0.0
  %2820 = vmatprep.subr.mxu0 0.0
  %2821 = vmatpush1.msra.mxu0 0.0
  %2822 = vmatprep.subr.mxu0 %v2792
  %2823 = vmatpush1.msra.mxu0 %v2789
  %2824 = vmatprep.subr.mxu0 %v2749
  %2825 = vmatpush1.msra.mxu0 %v2748
  %2826 = vmatprep.subr.mxu0 0.0
  %2827 = vmatpush2.msra.mxu0 0.0
  %2828 = vmatprep.subr.mxu0 0.0
  %2829 = vmatpush2.msra.mxu0 0.0
  %2830 = vmatprep.subr.mxu0 0.0
  %2831 = vmatpush2.msra.mxu0 0.0
  %2832 = vmatprep.subr.mxu0 0.0
  %2833 = vmatpush2.msra.mxu0 0.0
  %2834 = vmatprep.subr.mxu0 0.0
  %2835 = vmatpush2.msra.mxu0 0.0
  %2836 = vmatprep.subr.mxu0 0.0
  %2837 = vmatpush2.msra.mxu0 0.0
  %2838 = vmatprep.subr.mxu0 0.0
  %2839 = vmatpush2.msra.mxu0 0.0
  %2840 = vmatprep.subr.mxu0 0.0
  %2841 = vmatpush2.msra.mxu0 0.0
  %2842 = vmatprep.subr.mxu0 0.0
  %2843 = vmatpush2.msra.mxu0 0.0
  %2844 = vmatprep.subr.mxu0 0.0
  %2845 = vmatpush2.msra.mxu0 0.0
  %2846 = vmatprep.subr.mxu0 0.0
  %2847 = vmatpush2.msra.mxu0 0.0
  %2848 = vmatprep.subr.mxu0 0.0
  %2849 = vmatpush2.msra.mxu0 0.0
  %2850 = vmatprep.subr.mxu0 0.0
  %2851 = vmatpush2.msra.mxu0 0.0
  %2852 = vmatprep.subr.mxu0 0.0
  %2853 = vmatpush2.msra.mxu0 0.0
  %2854 = vmatprep.subr.mxu0 0.0
  %2855 = vmatpush2.msra.mxu0 0.0
  %2856 = vmatprep.subr.mxu0 0.0
  %2857 = vmatpush2.msra.mxu0 0.0
  %2858 = vmatprep.mubr.f32.mxu0 0.0
  %2859 = vmatmul.mubr.f32.gmra.mxu0 %v2753
  %v2860 = vpop.f32.mrf.mxu0
  %v2861 = vadd.f32 0.0, %v2860
  %v2862 = vpop.f32.mrf.mxu0
  %v2863 = vadd.f32 0.0, %v2862
  %2864 = vmatprep.mubr.f32.mxu0 0.0
  %2865 = vmatmul.mubr.f32.gmra.mxu0 %v2756
  %v2866 = vpop.f32.mrf.mxu0
  %v2867 = vadd.f32 0.0, %v2866
  %v2868 = vpop.f32.mrf.mxu0
  %v2869 = vadd.f32 0.0, %v2868
  %2870 = vmatprep.mubr.f32.mxu0 0.0
  %2871 = vmatmul.mubr.f32.gmra.mxu0 %v2759
  %v2872 = vpop.f32.mrf.mxu0
  %v2873 = vadd.f32 0.0, %v2872
  %v2874 = vpop.f32.mrf.mxu0
  %v2875 = vadd.f32 0.0, %v2874
  %2876 = vmatprep.mubr.f32.mxu0 0.0
  %2877 = vmatmul.mubr.f32.gmra.mxu0 %v2762
  %v2878 = vpop.f32.mrf.mxu0
  %v2879 = vadd.f32 0.0, %v2878
  %v2880 = vpop.f32.mrf.mxu0
  %v2881 = vadd.f32 0.0, %v2880
  %2882 = vmatprep.mubr.f32.mxu0 0.0
  %2883 = vmatmul.mubr.f32.gmra.mxu0 %v2765
  %v2884 = vpop.f32.mrf.mxu0
  %v2885 = vadd.f32 0.0, %v2884
  %v2886 = vpop.f32.mrf.mxu0
  %v2887 = vadd.f32 0.0, %v2886
  %2888 = vmatprep.mubr.f32.mxu0 0.0
  %2889 = vmatmul.mubr.f32.gmra.mxu0 %v2768
  %v2890 = vpop.f32.mrf.mxu0
  %v2891 = vadd.f32 0.0, %v2890
  %v2892 = vpop.f32.mrf.mxu0
  %v2893 = vadd.f32 0.0, %v2892
  %2894 = vmatprep.mubr.f32.mxu0 0.0
  %2895 = vmatmul.mubr.f32.gmra.mxu0 %v2771
  %v2896 = vpop.f32.mrf.mxu0
  %v2897 = vadd.f32 0.0, %v2896
  %v2898 = vpop.f32.mrf.mxu0
  %v2899 = vadd.f32 0.0, %v2898
  %2900 = vmatprep.mubr.f32.mxu0 0.0
  %2901 = vmatmul.mubr.f32.gmra.mxu0 %v2774
  %v2902 = vpop.f32.mrf.mxu0
  %v2903 = vadd.f32 0.0, %v2902
  %v2904 = vpop.f32.mrf.mxu0
  %v2905 = vadd.f32 0.0, %v2904
  %2906 = vmatprep.mubr.f32.mxu0 0.0
  %2907 = vmatmul.mubr.f32.gmra.mxu0 %v2777
  %v2908 = vpop.f32.mrf.mxu0
  %v2909 = vadd.f32 0.0, %v2908
  %v2910 = vpop.f32.mrf.mxu0
  %v2911 = vadd.f32 0.0, %v2910
  %2912 = vmatprep.mubr.f32.mxu0 0.0
  %2913 = vmatmul.mubr.f32.gmra.mxu0 %v2780
  %v2914 = vpop.f32.mrf.mxu0
  %v2915 = vadd.f32 0.0, %v2914
  %v2916 = vpop.f32.mrf.mxu0
  %v2917 = vadd.f32 0.0, %v2916
  %2918 = vmatprep.mubr.f32.mxu0 0.0
  %2919 = vmatmul.mubr.f32.gmra.mxu0 %v2783
  %v2920 = vpop.f32.mrf.mxu0
  %v2921 = vadd.f32 0.0, %v2920
  %v2922 = vpop.f32.mrf.mxu0
  %v2923 = vadd.f32 0.0, %v2922
  %2924 = vmatprep.mubr.f32.mxu0 0.0
  %2925 = vmatmul.mubr.f32.gmra.mxu0 %v2786
  %v2926 = vpop.f32.mrf.mxu0
  %v2927 = vadd.f32 0.0, %v2926
  %v2928 = vpop.f32.mrf.mxu0
  %v2929 = vadd.f32 0.0, %v2928
  %2930 = vdwg.mxu0
  %v2931 = vsel %vm1658, %v2861, 0.0
  %v2932 = vsel %vm1659, %v2863, 0.0
  %v2933 = vsel %vm1660, %v2867, 0.0
  %v2934 = vsel %vm1661, %v2869, 0.0
  %v2935 = vsel %vm1662, %v2873, 0.0
  %v2936 = vsel %vm1663, %v2875, 0.0
  %v2937 = vsel %vm1664, %v2879, 0.0
  %v2938 = vsel %vm1665, %v2881, 0.0
  %v2939 = vsel %vm1666, %v2885, 0.0
  %v2940 = vsel %vm1667, %v2887, 0.0
  %v2941 = vsel %vm1668, %v2891, 0.0
  %v2942 = vsel %vm1669, %v2893, 0.0
  %v2943 = vsel %vm1670, %v2897, 0.0
  %v2944 = vsel %vm1671, %v2899, 0.0
  %v2945 = vsel %vm1672, %v2903, 0.0
  %v2946 = vsel %vm1673, %v2905, 0.0
  %v2947 = vsel %vm1674, %v2909, 0.0
  %v2948 = vsel %vm1675, %v2911, 0.0
  %v2949 = vsel %vm1676, %v2915, 0.0
  %v2950 = vsel %vm1677, %v2917, 0.0
  %v2951 = vsel %vm1678, %v2921, 0.0
  %v2952 = vsel %vm1679, %v2923, 0.0
  %v2953 = vsel %vm1680, %v2927, 0.0
  %v2954 = vsel %vm1681, %v2929, 0.0
  %2955 = vmatprep.subr.mxu0 0.0
  %2956 = vmatpush1.msra.mxu0 0.0
  %2957 = vmatprep.subr.mxu0 0.0
  %2958 = vmatpush1.msra.mxu0 0.0
  %2959 = vmatprep.subr.mxu0 0.0
  %2960 = vmatpush1.msra.mxu0 0.0
  %2961 = vmatprep.subr.mxu0 0.0
  %2962 = vmatpush1.msra.mxu0 0.0
  %2963 = vmatprep.subr.mxu0 %v2954
  %2964 = vmatpush1.msra.mxu0 %v2953
  %2965 = vmatprep.subr.mxu0 %v2952
  %2966 = vmatpush1.msra.mxu0 %v2951
  %2967 = vmatprep.subr.mxu0 %v2950
  %2968 = vmatpush1.msra.mxu0 %v2949
  %2969 = vmatprep.subr.mxu0 %v2948
  %2970 = vmatpush1.msra.mxu0 %v2947
  %2971 = vmatprep.subr.mxu0 %v2946
  %2972 = vmatpush1.msra.mxu0 %v2945
  %2973 = vmatprep.subr.mxu0 %v2944
  %2974 = vmatpush1.msra.mxu0 %v2943
  %2975 = vmatprep.subr.mxu0 %v2942
  %2976 = vmatpush1.msra.mxu0 %v2941
  %2977 = vmatprep.subr.mxu0 %v2940
  %2978 = vmatpush1.msra.mxu0 %v2939
  %2979 = vmatprep.subr.mxu0 %v2938
  %2980 = vmatpush1.msra.mxu0 %v2937
  %2981 = vmatprep.subr.mxu0 %v2936
  %2982 = vmatpush1.msra.mxu0 %v2935
  %2983 = vmatprep.subr.mxu0 %v2934
  %2984 = vmatpush1.msra.mxu0 %v2933
  %2985 = vmatprep.subr.mxu0 %v2932
  %2986 = vmatpush1.msra.mxu0 %v2931
  %2987 = vmatprep.subr.mxu0 0.0
  %2988 = vmatpush2.msra.mxu0 0.0
  %2989 = vmatprep.subr.mxu0 0.0
  %2990 = vmatpush2.msra.mxu0 0.0
  %2991 = vmatprep.subr.mxu0 0.0
  %2992 = vmatpush2.msra.mxu0 0.0
  %2993 = vmatprep.subr.mxu0 0.0
  %2994 = vmatpush2.msra.mxu0 0.0
  %2995 = vmatprep.subr.mxu0 0.0
  %2996 = vmatpush2.msra.mxu0 0.0
  %2997 = vmatprep.subr.mxu0 0.0
  %2998 = vmatpush2.msra.mxu0 0.0
  %2999 = vmatprep.subr.mxu0 0.0
  %3000 = vmatpush2.msra.mxu0 0.0
  %3001 = vmatprep.subr.mxu0 0.0
  %3002 = vmatpush2.msra.mxu0 0.0
  %3003 = vmatprep.subr.mxu0 0.0
  %3004 = vmatpush2.msra.mxu0 0.0
  %3005 = vmatprep.subr.mxu0 0.0
  %3006 = vmatpush2.msra.mxu0 0.0
  %3007 = vmatprep.subr.mxu0 0.0
  %3008 = vmatpush2.msra.mxu0 0.0
  %3009 = vmatprep.subr.mxu0 0.0
  %3010 = vmatpush2.msra.mxu0 0.0
  %3011 = vmatprep.subr.mxu0 0.0
  %3012 = vmatpush2.msra.mxu0 0.0
  %3013 = vmatprep.subr.mxu0 0.0
  %3014 = vmatpush2.msra.mxu0 0.0
  %3015 = vmatprep.subr.mxu0 0.0
  %3016 = vmatpush2.msra.mxu0 0.0
  %3017 = vmatprep.subr.mxu0 0.0
  %3018 = vmatpush2.msra.mxu0 0.0
  %3019 = vmatprep.mubr.f32.mxu0 0.0
  %3020 = vmatmul.mubr.f32.gmra.mxu0 %v1803
  %v3021 = vpop.f32.mrf.mxu0
  %v3022 = vadd.f32 0.0, %v3021
  %v3023 = vpop.f32.mrf.mxu0
  %v3024 = vadd.f32 0.0, %v3023
  %3025 = vdwg.mxu0
  %s3026 = scalar_lea.vmem %s8, 2
  %v3027 = vld [vmem:[%s3026] sm:$0x1]
  %v3029 = vlaneseq
  %v3030 = vshrl.u32 %v3029, 7
  %v3031 = vsub.s32 0, %v3030
  %v3032 = vrot.slane %v3027, %v3031
  %v3035 = vsel %vm1883, %v3024, 0
  %3037 = vmatprep.subr.mxu0 0.0
  %3038 = vmatpush1.msra.mxu0 %v1790
  %3039 = vmatprep.subr.mxu0 0.0
  %3040 = vmatpush1.msra.mxu0 %v1789
  %3041 = vmatprep.subr.mxu0 0.0
  %3042 = vmatpush1.msra.mxu0 %v1788
  %3043 = vmatprep.subr.mxu0 0.0
  %3044 = vmatpush1.msra.mxu0 %v1787
  %3045 = vmatprep.subr.mxu0 0.0
  %3046 = vmatpush1.msra.mxu0 %v1786
  %3047 = vmatprep.subr.mxu0 0.0
  %3048 = vmatpush1.msra.mxu0 %v1785
  %3049 = vmatprep.subr.mxu0 0.0
  %3050 = vmatpush1.msra.mxu0 %v1784
  %3051 = vmatprep.subr.mxu0 0.0
  %3052 = vmatpush1.msra.mxu0 %v1783
  %3053 = vmatprep.subr.mxu0 0.0
  %3054 = vmatpush1.msra.mxu0 %v1782
  %3055 = vmatprep.subr.mxu0 0.0
  %3056 = vmatpush1.msra.mxu0 %v1781
  %3057 = vmatprep.subr.mxu0 0.0
  %3058 = vmatpush1.msra.mxu0 %v1780
  %3059 = vmatprep.subr.mxu0 0.0
  %3060 = vmatpush1.msra.mxu0 %v1779
  %3061 = vmatprep.subr.mxu0 0.0
  %3062 = vmatpush1.msra.mxu0 %v1778
  %3063 = vmatprep.subr.mxu0 0.0
  %3064 = vmatpush1.msra.mxu0 %v1777
  %3065 = vmatprep.subr.mxu0 0.0
  %3066 = vmatpush1.msra.mxu0 %v1776
  %3067 = vmatprep.subr.mxu0 0.0
  %3068 = vmatpush1.msra.mxu0 %v1775
  %3069 = vmatprep.subr.mxu0 0.0
  %3070 = vmatpush2.msra.mxu0 0.0
  %3071 = vmatprep.subr.mxu0 0.0
  %3072 = vmatpush2.msra.mxu0 0.0
  %3073 = vmatprep.subr.mxu0 0.0
  %3074 = vmatpush2.msra.mxu0 0.0
  %3075 = vmatprep.subr.mxu0 0.0
  %3076 = vmatpush2.msra.mxu0 0.0
  %3077 = vmatprep.subr.mxu0 0.0
  %3078 = vmatpush2.msra.mxu0 0.0
  %3079 = vmatprep.subr.mxu0 0.0
  %3080 = vmatpush2.msra.mxu0 0.0
  %3081 = vmatprep.subr.mxu0 0.0
  %3082 = vmatpush2.msra.mxu0 %v1800
  %3083 = vmatprep.subr.mxu0 0.0
  %3084 = vmatpush2.msra.mxu0 %v1799
  %3085 = vmatprep.subr.mxu0 0.0
  %3086 = vmatpush2.msra.mxu0 %v1798
  %3087 = vmatprep.subr.mxu0 0.0
  %3088 = vmatpush2.msra.mxu0 %v1797
  %3089 = vmatprep.subr.mxu0 0.0
  %3090 = vmatpush2.msra.mxu0 %v1796
  %3091 = vmatprep.subr.mxu0 0.0
  %3092 = vmatpush2.msra.mxu0 %v1795
  %3093 = vmatprep.subr.mxu0 0.0
  %3094 = vmatpush2.msra.mxu0 %v1794
  %3095 = vmatprep.subr.mxu0 0.0
  %3096 = vmatpush2.msra.mxu0 %v1793
  %3097 = vmatprep.subr.mxu0 0.0
  %3098 = vmatpush2.msra.mxu0 %v1792
  %3099 = vmatprep.subr.mxu0 0.0
  %3100 = vmatpush2.msra.mxu0 %v1791
  %3101 = vmatprep.mubr.f32.mxu0 %v3035
  %3102 = vmatmul.mubr.f32.gmra.mxu0 %v3022
  %v3103 = vpop.f32.mrf.mxu0
  %v3104 = vadd.f32 %v3032, %v3103
  %v3105 = vpop.f32.mrf.mxu0
  %3106 = vdwg.mxu0
  %v3107 = vmax.f32 %v3104, 0.0
  %v3109 = vsel %vm1963, %v3107, 0
  %3111 = vmatprep.subr.mxu0 0.0
  %3112 = vmatpush1.msra.mxu0 0.0
  %3113 = vmatprep.subr.mxu0 0.0
  %3114 = vmatpush1.msra.mxu0 0.0
  %3115 = vmatprep.subr.mxu0 0.0
  %3116 = vmatpush1.msra.mxu0 0.0
  %3117 = vmatprep.subr.mxu0 0.0
  %3118 = vmatpush1.msra.mxu0 0.0
  %3119 = vmatprep.subr.mxu0 0.0
  %3120 = vmatpush1.msra.mxu0 0.0
  %3121 = vmatprep.subr.mxu0 0.0
  %3122 = vmatpush1.msra.mxu0 0.0
  %3123 = vmatprep.subr.mxu0 0.0
  %3124 = vmatpush1.msra.mxu0 0.0
  %3125 = vmatprep.subr.mxu0 0.0
  %3126 = vmatpush1.msra.mxu0 0.0
  %3127 = vmatprep.subr.mxu0 0.0
  %3128 = vmatpush1.msra.mxu0 0.0
  %3129 = vmatprep.subr.mxu0 0.0
  %3130 = vmatpush1.msra.mxu0 0.0
  %3131 = vmatprep.subr.mxu0 0.0
  %3132 = vmatpush1.msra.mxu0 0.0
  %3133 = vmatprep.subr.mxu0 0.0
  %3134 = vmatpush1.msra.mxu0 0.0
  %3135 = vmatprep.subr.mxu0 0.0
  %3136 = vmatpush1.msra.mxu0 0.0
  %3137 = vmatprep.subr.mxu0 0.0
  %3138 = vmatpush1.msra.mxu0 0.0
  %3139 = vmatprep.subr.mxu0 0.0
  %3140 = vmatpush1.msra.mxu0 0.0
  %3141 = vmatprep.subr.mxu0 0.0
  %3142 = vmatpush1.msra.mxu0 %v3109
  %3143 = vmatprep.subr.mxu0 0.0
  %3144 = vmatpush2.msra.mxu0 0.0
  %3145 = vmatprep.subr.mxu0 0.0
  %3146 = vmatpush2.msra.mxu0 0.0
  %3147 = vmatprep.subr.mxu0 0.0
  %3148 = vmatpush2.msra.mxu0 0.0
  %3149 = vmatprep.subr.mxu0 0.0
  %3150 = vmatpush2.msra.mxu0 0.0
  %3151 = vmatprep.subr.mxu0 0.0
  %3152 = vmatpush2.msra.mxu0 0.0
  %3153 = vmatprep.subr.mxu0 0.0
  %3154 = vmatpush2.msra.mxu0 0.0
  %3155 = vmatprep.subr.mxu0 0.0
  %3156 = vmatpush2.msra.mxu0 0.0
  %3157 = vmatprep.subr.mxu0 0.0
  %3158 = vmatpush2.msra.mxu0 0.0
  %3159 = vmatprep.subr.mxu0 0.0
  %3160 = vmatpush2.msra.mxu0 0.0
  %3161 = vmatprep.subr.mxu0 0.0
  %3162 = vmatpush2.msra.mxu0 0.0
  %3163 = vmatprep.subr.mxu0 0.0
  %3164 = vmatpush2.msra.mxu0 0.0
  %3165 = vmatprep.subr.mxu0 0.0
  %3166 = vmatpush2.msra.mxu0 0.0
  %3167 = vmatprep.subr.mxu0 0.0
  %3168 = vmatpush2.msra.mxu0 0.0
  %3169 = vmatprep.subr.mxu0 0.0
  %3170 = vmatpush2.msra.mxu0 0.0
  %3171 = vmatprep.subr.mxu0 0.0
  %3172 = vmatpush2.msra.mxu0 0.0
  %3173 = vmatprep.subr.mxu0 0.0
  %3174 = vmatpush2.msra.mxu0 0.0
  %3175 = vmatprep.mubr.f32.mxu0 0.0
  %3176 = vmatmul.mubr.f32.gmra.mxu0 %v1961
  %v3177 = vpop.f32.mrf.mxu0
  %v3178 = vadd.f32 0.0, %v3177
  %v3179 = vpop.f32.mrf.mxu0
  %3180 = vdwg.mxu0
  %v3181 = vmul.f32 %v3178, %v1146
  %v3182 = vld [vmem:[%s808] sm:$0xff]
  %v3183 = vld [vmem:[%s808 + $0x8] sm:$0xff]
  %v3184 = vld [vmem:[%s808 + $0x10] sm:$0xff]
  %v3185 = vld [vmem:[%s808 + $0x18] sm:$0xff]
  %v3186 = vld [vmem:[%s808 + $0x20] sm:$0xff]
  %v3187 = vld [vmem:[%s808 + $0x28] sm:$0xff]
  %v3188 = vld [vmem:[%s808 + $0x30] sm:$0xff]
  %v3189 = vld [vmem:[%s808 + $0x38] sm:$0xff]
  %v3190 = vld [vmem:[%s808 + $0x40] sm:$0xff]
  %v3191 = vld [vmem:[%s808 + $0x48] sm:$0xff]
  %v3192 = vld [vmem:[%s808 + $0x50] sm:$0xff]
  %v3193 = vld [vmem:[%s808 + $0x58] sm:$0xff]
  %3194 = vmatprep.subr.mxu0 0.0
  %3195 = vmatpush1.msra.mxu0 0.0
  %3196 = vmatprep.subr.mxu0 0.0
  %3197 = vmatpush1.msra.mxu0 0.0
  %3198 = vmatprep.subr.mxu0 0.0
  %3199 = vmatpush1.msra.mxu0 0.0
  %3200 = vmatprep.subr.mxu0 0.0
  %3201 = vmatpush1.msra.mxu0 0.0
  %3202 = vmatprep.subr.mxu0 0.0
  %3203 = vmatpush1.msra.mxu0 0.0
  %3204 = vmatprep.subr.mxu0 0.0
  %3205 = vmatpush1.msra.mxu0 0.0
  %3206 = vmatprep.subr.mxu0 0.0
  %3207 = vmatpush1.msra.mxu0 0.0
  %3208 = vmatprep.subr.mxu0 0.0
  %3209 = vmatpush1.msra.mxu0 0.0
  %3210 = vmatprep.subr.mxu0 0.0
  %3211 = vmatpush1.msra.mxu0 0.0
  %3212 = vmatprep.subr.mxu0 0.0
  %3213 = vmatpush1.msra.mxu0 0.0
  %3214 = vmatprep.subr.mxu0 0.0
  %3215 = vmatpush1.msra.mxu0 0.0
  %3216 = vmatprep.subr.mxu0 0.0
  %3217 = vmatpush1.msra.mxu0 0.0
  %3218 = vmatprep.subr.mxu0 0.0
  %3219 = vmatpush1.msra.mxu0 0.0
  %3220 = vmatprep.subr.mxu0 0.0
  %3221 = vmatpush1.msra.mxu0 0.0
  %3222 = vmatprep.subr.mxu0 0.0
  %3223 = vmatpush1.msra.mxu0 0.0
  %3224 = vmatprep.subr.mxu0 0.0
  %3225 = vmatpush1.msra.mxu0 %v3181
  %3226 = vmatprep.subr.mxu0 0.0
  %3227 = vmatpush2.msra.mxu0 0.0
  %3228 = vmatprep.subr.mxu0 0.0
  %3229 = vmatpush2.msra.mxu0 0.0
  %3230 = vmatprep.subr.mxu0 0.0
  %3231 = vmatpush2.msra.mxu0 0.0
  %3232 = vmatprep.subr.mxu0 0.0
  %3233 = vmatpush2.msra.mxu0 0.0
  %3234 = vmatprep.subr.mxu0 0.0
  %3235 = vmatpush2.msra.mxu0 0.0
  %3236 = vmatprep.subr.mxu0 0.0
  %3237 = vmatpush2.msra.mxu0 0.0
  %3238 = vmatprep.subr.mxu0 0.0
  %3239 = vmatpush2.msra.mxu0 0.0
  %3240 = vmatprep.subr.mxu0 0.0
  %3241 = vmatpush2.msra.mxu0 0.0
  %3242 = vmatprep.subr.mxu0 0.0
  %3243 = vmatpush2.msra.mxu0 0.0
  %3244 = vmatprep.subr.mxu0 0.0
  %3245 = vmatpush2.msra.mxu0 0.0
  %3246 = vmatprep.subr.mxu0 0.0
  %3247 = vmatpush2.msra.mxu0 0.0
  %3248 = vmatprep.subr.mxu0 0.0
  %3249 = vmatpush2.msra.mxu0 0.0
  %3250 = vmatprep.subr.mxu0 0.0
  %3251 = vmatpush2.msra.mxu0 0.0
  %3252 = vmatprep.subr.mxu0 0.0
  %3253 = vmatpush2.msra.mxu0 0.0
  %3254 = vmatprep.subr.mxu0 0.0
  %3255 = vmatpush2.msra.mxu0 0.0
  %3256 = vmatprep.subr.mxu0 0.0
  %3257 = vmatpush2.msra.mxu0 0.0
  %3258 = vmatprep.mubr.f32.mxu0 0.0
  %3259 = vmatmul.mubr.f32.gmra.mxu0 %v1284
  %v3260 = vpop.f32.mrf.mxu0
  %v3261 = vadd.f32 %v3182, %v3260
  %v3262 = vpop.f32.mrf.mxu0
  %3263 = vmatprep.mubr.f32.mxu0 0.0
  %3264 = vmatmul.mubr.f32.gmra.mxu0 %v1287
  %v3265 = vpop.f32.mrf.mxu0
  %v3266 = vadd.f32 %v3183, %v3265
  %v3267 = vpop.f32.mrf.mxu0
  %3268 = vmatprep.mubr.f32.mxu0 0.0
  %3269 = vmatmul.mubr.f32.gmra.mxu0 %v1290
  %v3270 = vpop.f32.mrf.mxu0
  %v3271 = vadd.f32 %v3184, %v3270
  %v3272 = vpop.f32.mrf.mxu0
  %3273 = vmatprep.mubr.f32.mxu0 0.0
  %3274 = vmatmul.mubr.f32.gmra.mxu0 %v1293
  %v3275 = vpop.f32.mrf.mxu0
  %v3276 = vadd.f32 %v3185, %v3275
  %v3277 = vpop.f32.mrf.mxu0
  %3278 = vmatprep.mubr.f32.mxu0 0.0
  %3279 = vmatmul.mubr.f32.gmra.mxu0 %v1296
  %v3280 = vpop.f32.mrf.mxu0
  %v3281 = vadd.f32 %v3186, %v3280
  %v3282 = vpop.f32.mrf.mxu0
  %3283 = vmatprep.mubr.f32.mxu0 0.0
  %3284 = vmatmul.mubr.f32.gmra.mxu0 %v1299
  %v3285 = vpop.f32.mrf.mxu0
  %v3286 = vadd.f32 %v3187, %v3285
  %v3287 = vpop.f32.mrf.mxu0
  %3288 = vmatprep.mubr.f32.mxu0 0.0
  %3289 = vmatmul.mubr.f32.gmra.mxu0 %v1302
  %v3290 = vpop.f32.mrf.mxu0
  %v3291 = vadd.f32 %v3188, %v3290
  %v3292 = vpop.f32.mrf.mxu0
  %3293 = vmatprep.mubr.f32.mxu0 0.0
  %3294 = vmatmul.mubr.f32.gmra.mxu0 %v1305
  %v3295 = vpop.f32.mrf.mxu0
  %v3296 = vadd.f32 %v3189, %v3295
  %v3297 = vpop.f32.mrf.mxu0
  %3298 = vmatprep.mubr.f32.mxu0 0.0
  %3299 = vmatmul.mubr.f32.gmra.mxu0 %v1308
  %v3300 = vpop.f32.mrf.mxu0
  %v3301 = vadd.f32 %v3190, %v3300
  %v3302 = vpop.f32.mrf.mxu0
  %3303 = vmatprep.mubr.f32.mxu0 0.0
  %3304 = vmatmul.mubr.f32.gmra.mxu0 %v1311
  %v3305 = vpop.f32.mrf.mxu0
  %v3306 = vadd.f32 %v3191, %v3305
  %v3307 = vpop.f32.mrf.mxu0
  %3308 = vmatprep.mubr.f32.mxu0 0.0
  %3309 = vmatmul.mubr.f32.gmra.mxu0 %v1314
  %v3310 = vpop.f32.mrf.mxu0
  %v3311 = vadd.f32 %v3192, %v3310
  %v3312 = vpop.f32.mrf.mxu0
  %3313 = vmatprep.mubr.f32.mxu0 0.0
  %3314 = vmatmul.mubr.f32.gmra.mxu0 %v1317
  %v3315 = vpop.f32.mrf.mxu0
  %v3316 = vadd.f32 %v3193, %v3315
  %v3317 = vpop.f32.mrf.mxu0
  %3318 = vdwg.mxu0
  %s3319 = scalar_lea.vmem %s7, 96
  %v3320 = vld [vmem:[%s3319] sm:$0xff]
  %v3321 = vld [vmem:[%s3319 + $0x8] sm:$0xff]
  %v3322 = vld [vmem:[%s3319 + $0x10] sm:$0x1f]
  %v3323 = vld [vmem:[%s3319 + $0x18] sm:$0x1f]
  %v3325 = vsel %vm232, %v3261, 0
  %v3328 = vsel %vm232, %v3266, 0
  %v3331 = vsel %vm232, %v3271, 0
  %v3334 = vsel %vm232, %v3276, 0
  %v3337 = vsel %vm232, %v3281, 0
  %v3340 = vsel %vm232, %v3286, 0
  %v3343 = vsel %vm232, %v3291, 0
  %v3346 = vsel %vm232, %v3296, 0
  %v3349 = vsel %vm232, %v3301, 0
  %v3352 = vsel %vm232, %v3306, 0
  %v3355 = vsel %vm232, %v3311, 0
  %v3358 = vsel %vm232, %v3316, 0
  %v3361 = vsel %vm1484, %v3322, 0
  %v3364 = vsel %vm1484, %v3323, 0
  %3366 = vmatprep.subr.mxu0 0.0
  %3367 = vmatpush1.msra.mxu0 0.0
  %3368 = vmatprep.subr.mxu0 0.0
  %3369 = vmatpush1.msra.mxu0 0.0
  %3370 = vmatprep.subr.mxu0 0.0
  %3371 = vmatpush1.msra.mxu0 0.0
  %3372 = vmatprep.subr.mxu0 0.0
  %3373 = vmatpush1.msra.mxu0 0.0
  %3374 = vmatprep.subr.mxu0 0.0
  %3375 = vmatpush1.msra.mxu0 0.0
  %3376 = vmatprep.subr.mxu0 0.0
  %3377 = vmatpush1.msra.mxu0 0.0
  %3378 = vmatprep.subr.mxu0 0.0
  %3379 = vmatpush1.msra.mxu0 0.0
  %3380 = vmatprep.subr.mxu0 0.0
  %3381 = vmatpush1.msra.mxu0 0.0
  %3382 = vmatprep.subr.mxu0 0.0
  %3383 = vmatpush1.msra.mxu0 0.0
  %3384 = vmatprep.subr.mxu0 0.0
  %3385 = vmatpush1.msra.mxu0 0.0
  %3386 = vmatprep.subr.mxu0 0.0
  %3387 = vmatpush1.msra.mxu0 0.0
  %3388 = vmatprep.subr.mxu0 0.0
  %3389 = vmatpush1.msra.mxu0 0.0
  %3390 = vmatprep.subr.mxu0 0.0
  %3391 = vmatpush1.msra.mxu0 0.0
  %3392 = vmatprep.subr.mxu0 0.0
  %3393 = vmatpush1.msra.mxu0 0.0
  %3394 = vmatprep.subr.mxu0 %v3364
  %3395 = vmatpush1.msra.mxu0 %v3361
  %3396 = vmatprep.subr.mxu0 %v3321
  %3397 = vmatpush1.msra.mxu0 %v3320
  %3398 = vmatprep.subr.mxu0 0.0
  %3399 = vmatpush2.msra.mxu0 0.0
  %3400 = vmatprep.subr.mxu0 0.0
  %3401 = vmatpush2.msra.mxu0 0.0
  %3402 = vmatprep.subr.mxu0 0.0
  %3403 = vmatpush2.msra.mxu0 0.0
  %3404 = vmatprep.subr.mxu0 0.0
  %3405 = vmatpush2.msra.mxu0 0.0
  %3406 = vmatprep.subr.mxu0 0.0
  %3407 = vmatpush2.msra.mxu0 0.0
  %3408 = vmatprep.subr.mxu0 0.0
  %3409 = vmatpush2.msra.mxu0 0.0
  %3410 = vmatprep.subr.mxu0 0.0
  %3411 = vmatpush2.msra.mxu0 0.0
  %3412 = vmatprep.subr.mxu0 0.0
  %3413 = vmatpush2.msra.mxu0 0.0
  %3414 = vmatprep.subr.mxu0 0.0
  %3415 = vmatpush2.msra.mxu0 0.0
  %3416 = vmatprep.subr.mxu0 0.0
  %3417 = vmatpush2.msra.mxu0 0.0
  %3418 = vmatprep.subr.mxu0 0.0
  %3419 = vmatpush2.msra.mxu0 0.0
  %3420 = vmatprep.subr.mxu0 0.0
  %3421 = vmatpush2.msra.mxu0 0.0
  %3422 = vmatprep.subr.mxu0 0.0
  %3423 = vmatpush2.msra.mxu0 0.0
  %3424 = vmatprep.subr.mxu0 0.0
  %3425 = vmatpush2.msra.mxu0 0.0
  %3426 = vmatprep.subr.mxu0 0.0
  %3427 = vmatpush2.msra.mxu0 0.0
  %3428 = vmatprep.subr.mxu0 0.0
  %3429 = vmatpush2.msra.mxu0 0.0
  %3430 = vmatprep.mubr.f32.mxu0 0.0
  %3431 = vmatmul.mubr.f32.gmra.mxu0 %v3325
  %v3432 = vpop.f32.mrf.mxu0
  %v3433 = vadd.f32 0.0, %v3432
  %v3434 = vpop.f32.mrf.mxu0
  %v3435 = vadd.f32 0.0, %v3434
  %3436 = vmatprep.mubr.f32.mxu0 0.0
  %3437 = vmatmul.mubr.f32.gmra.mxu0 %v3328
  %v3438 = vpop.f32.mrf.mxu0
  %v3439 = vadd.f32 0.0, %v3438
  %v3440 = vpop.f32.mrf.mxu0
  %v3441 = vadd.f32 0.0, %v3440
  %3442 = vmatprep.mubr.f32.mxu0 0.0
  %3443 = vmatmul.mubr.f32.gmra.mxu0 %v3331
  %v3444 = vpop.f32.mrf.mxu0
  %v3445 = vadd.f32 0.0, %v3444
  %v3446 = vpop.f32.mrf.mxu0
  %v3447 = vadd.f32 0.0, %v3446
  %3448 = vmatprep.mubr.f32.mxu0 0.0
  %3449 = vmatmul.mubr.f32.gmra.mxu0 %v3334
  %v3450 = vpop.f32.mrf.mxu0
  %v3451 = vadd.f32 0.0, %v3450
  %v3452 = vpop.f32.mrf.mxu0
  %v3453 = vadd.f32 0.0, %v3452
  %3454 = vmatprep.mubr.f32.mxu0 0.0
  %3455 = vmatmul.mubr.f32.gmra.mxu0 %v3337
  %v3456 = vpop.f32.mrf.mxu0
  %v3457 = vadd.f32 0.0, %v3456
  %v3458 = vpop.f32.mrf.mxu0
  %v3459 = vadd.f32 0.0, %v3458
  %3460 = vmatprep.mubr.f32.mxu0 0.0
  %3461 = vmatmul.mubr.f32.gmra.mxu0 %v3340
  %v3462 = vpop.f32.mrf.mxu0
  %v3463 = vadd.f32 0.0, %v3462
  %v3464 = vpop.f32.mrf.mxu0
  %v3465 = vadd.f32 0.0, %v3464
  %3466 = vmatprep.mubr.f32.mxu0 0.0
  %3467 = vmatmul.mubr.f32.gmra.mxu0 %v3343
  %v3468 = vpop.f32.mrf.mxu0
  %v3469 = vadd.f32 0.0, %v3468
  %v3470 = vpop.f32.mrf.mxu0
  %v3471 = vadd.f32 0.0, %v3470
  %3472 = vmatprep.mubr.f32.mxu0 0.0
  %3473 = vmatmul.mubr.f32.gmra.mxu0 %v3346
  %v3474 = vpop.f32.mrf.mxu0
  %v3475 = vadd.f32 0.0, %v3474
  %v3476 = vpop.f32.mrf.mxu0
  %v3477 = vadd.f32 0.0, %v3476
  %3478 = vmatprep.mubr.f32.mxu0 0.0
  %3479 = vmatmul.mubr.f32.gmra.mxu0 %v3349
  %v3480 = vpop.f32.mrf.mxu0
  %v3481 = vadd.f32 0.0, %v3480
  %v3482 = vpop.f32.mrf.mxu0
  %v3483 = vadd.f32 0.0, %v3482
  %3484 = vmatprep.mubr.f32.mxu0 0.0
  %3485 = vmatmul.mubr.f32.gmra.mxu0 %v3352
  %v3486 = vpop.f32.mrf.mxu0
  %v3487 = vadd.f32 0.0, %v3486
  %v3488 = vpop.f32.mrf.mxu0
  %v3489 = vadd.f32 0.0, %v3488
  %3490 = vmatprep.mubr.f32.mxu0 0.0
  %3491 = vmatmul.mubr.f32.gmra.mxu0 %v3355
  %v3492 = vpop.f32.mrf.mxu0
  %v3493 = vadd.f32 0.0, %v3492
  %v3494 = vpop.f32.mrf.mxu0
  %v3495 = vadd.f32 0.0, %v3494
  %3496 = vmatprep.mubr.f32.mxu0 0.0
  %3497 = vmatmul.mubr.f32.gmra.mxu0 %v3358
  %v3498 = vpop.f32.mrf.mxu0
  %v3499 = vadd.f32 0.0, %v3498
  %v3500 = vpop.f32.mrf.mxu0
  %v3501 = vadd.f32 0.0, %v3500
  %3502 = vdwg.mxu0
  %v3503 = vsel %vm1658, %v3433, 0.0
  %v3504 = vsel %vm1659, %v3435, 0.0
  %v3505 = vsel %vm1660, %v3439, 0.0
  %v3506 = vsel %vm1661, %v3441, 0.0
  %v3507 = vsel %vm1662, %v3445, 0.0
  %v3508 = vsel %vm1663, %v3447, 0.0
  %v3509 = vsel %vm1664, %v3451, 0.0
  %v3510 = vsel %vm1665, %v3453, 0.0
  %v3511 = vsel %vm1666, %v3457, 0.0
  %v3512 = vsel %vm1667, %v3459, 0.0
  %v3513 = vsel %vm1668, %v3463, 0.0
  %v3514 = vsel %vm1669, %v3465, 0.0
  %v3515 = vsel %vm1670, %v3469, 0.0
  %v3516 = vsel %vm1671, %v3471, 0.0
  %v3517 = vsel %vm1672, %v3475, 0.0
  %v3518 = vsel %vm1673, %v3477, 0.0
  %v3519 = vsel %vm1674, %v3481, 0.0
  %v3520 = vsel %vm1675, %v3483, 0.0
  %v3521 = vsel %vm1676, %v3487, 0.0
  %v3522 = vsel %vm1677, %v3489, 0.0
  %v3523 = vsel %vm1678, %v3493, 0.0
  %v3524 = vsel %vm1679, %v3495, 0.0
  %v3525 = vsel %vm1680, %v3499, 0.0
  %v3526 = vsel %vm1681, %v3501, 0.0
  %3527 = vmatprep.subr.mxu0 0.0
  %3528 = vmatpush1.msra.mxu0 0.0
  %3529 = vmatprep.subr.mxu0 0.0
  %3530 = vmatpush1.msra.mxu0 0.0
  %3531 = vmatprep.subr.mxu0 0.0
  %3532 = vmatpush1.msra.mxu0 0.0
  %3533 = vmatprep.subr.mxu0 0.0
  %3534 = vmatpush1.msra.mxu0 0.0
  %3535 = vmatprep.subr.mxu0 %v3526
  %3536 = vmatpush1.msra.mxu0 %v3525
  %3537 = vmatprep.subr.mxu0 %v3524
  %3538 = vmatpush1.msra.mxu0 %v3523
  %3539 = vmatprep.subr.mxu0 %v3522
  %3540 = vmatpush1.msra.mxu0 %v3521
  %3541 = vmatprep.subr.mxu0 %v3520
  %3542 = vmatpush1.msra.mxu0 %v3519
  %3543 = vmatprep.subr.mxu0 %v3518
  %3544 = vmatpush1.msra.mxu0 %v3517
  %3545 = vmatprep.subr.mxu0 %v3516
  %3546 = vmatpush1.msra.mxu0 %v3515
  %3547 = vmatprep.subr.mxu0 %v3514
  %3548 = vmatpush1.msra.mxu0 %v3513
  %3549 = vmatprep.subr.mxu0 %v3512
  %3550 = vmatpush1.msra.mxu0 %v3511
  %3551 = vmatprep.subr.mxu0 %v3510
  %3552 = vmatpush1.msra.mxu0 %v3509
  %3553 = vmatprep.subr.mxu0 %v3508
  %3554 = vmatpush1.msra.mxu0 %v3507
  %3555 = vmatprep.subr.mxu0 %v3506
  %3556 = vmatpush1.msra.mxu0 %v3505
  %3557 = vmatprep.subr.mxu0 %v3504
  %3558 = vmatpush1.msra.mxu0 %v3503
  %3559 = vmatprep.subr.mxu0 0.0
  %3560 = vmatpush2.msra.mxu0 0.0
  %3561 = vmatprep.subr.mxu0 0.0
  %3562 = vmatpush2.msra.mxu0 0.0
  %3563 = vmatprep.subr.mxu0 0.0
  %3564 = vmatpush2.msra.mxu0 0.0
  %3565 = vmatprep.subr.mxu0 0.0
  %3566 = vmatpush2.msra.mxu0 0.0
  %3567 = vmatprep.subr.mxu0 0.0
  %3568 = vmatpush2.msra.mxu0 0.0
  %3569 = vmatprep.subr.mxu0 0.0
  %3570 = vmatpush2.msra.mxu0 0.0
  %3571 = vmatprep.subr.mxu0 0.0
  %3572 = vmatpush2.msra.mxu0 0.0
  %3573 = vmatprep.subr.mxu0 0.0
  %3574 = vmatpush2.msra.mxu0 0.0
  %3575 = vmatprep.subr.mxu0 0.0
  %3576 = vmatpush2.msra.mxu0 0.0
  %3577 = vmatprep.subr.mxu0 0.0
  %3578 = vmatpush2.msra.mxu0 0.0
  %3579 = vmatprep.subr.mxu0 0.0
  %3580 = vmatpush2.msra.mxu0 0.0
  %3581 = vmatprep.subr.mxu0 0.0
  %3582 = vmatpush2.msra.mxu0 0.0
  %3583 = vmatprep.subr.mxu0 0.0
  %3584 = vmatpush2.msra.mxu0 0.0
  %3585 = vmatprep.subr.mxu0 0.0
  %3586 = vmatpush2.msra.mxu0 0.0
  %3587 = vmatprep.subr.mxu0 0.0
  %3588 = vmatpush2.msra.mxu0 0.0
  %3589 = vmatprep.subr.mxu0 0.0
  %3590 = vmatpush2.msra.mxu0 0.0
  %3591 = vmatprep.mubr.f32.mxu0 0.0
  %3592 = vmatmul.mubr.f32.gmra.mxu0 %v1803
  %v3593 = vpop.f32.mrf.mxu0
  %v3594 = vadd.f32 0.0, %v3593
  %v3595 = vpop.f32.mrf.mxu0
  %v3596 = vadd.f32 0.0, %v3595
  %3597 = vdwg.mxu0
  %s3598 = scalar_lea.vmem %s8, 3
  %v3599 = vld [vmem:[%s3598] sm:$0x1]
  %v3601 = vlaneseq
  %v3602 = vshrl.u32 %v3601, 7
  %v3603 = vsub.s32 0, %v3602
  %v3604 = vrot.slane %v3599, %v3603
  %v3607 = vsel %vm1883, %v3596, 0
  %3609 = vmatprep.subr.mxu0 0.0
  %3610 = vmatpush1.msra.mxu0 %v1790
  %3611 = vmatprep.subr.mxu0 0.0
  %3612 = vmatpush1.msra.mxu0 %v1789
  %3613 = vmatprep.subr.mxu0 0.0
  %3614 = vmatpush1.msra.mxu0 %v1788
  %3615 = vmatprep.subr.mxu0 0.0
  %3616 = vmatpush1.msra.mxu0 %v1787
  %3617 = vmatprep.subr.mxu0 0.0
  %3618 = vmatpush1.msra.mxu0 %v1786
  %3619 = vmatprep.subr.mxu0 0.0
  %3620 = vmatpush1.msra.mxu0 %v1785
  %3621 = vmatprep.subr.mxu0 0.0
  %3622 = vmatpush1.msra.mxu0 %v1784
  %3623 = vmatprep.subr.mxu0 0.0
  %3624 = vmatpush1.msra.mxu0 %v1783
  %3625 = vmatprep.subr.mxu0 0.0
  %3626 = vmatpush1.msra.mxu0 %v1782
  %3627 = vmatprep.subr.mxu0 0.0
  %3628 = vmatpush1.msra.mxu0 %v1781
  %3629 = vmatprep.subr.mxu0 0.0
  %3630 = vmatpush1.msra.mxu0 %v1780
  %3631 = vmatprep.subr.mxu0 0.0
  %3632 = vmatpush1.msra.mxu0 %v1779
  %3633 = vmatprep.subr.mxu0 0.0
  %3634 = vmatpush1.msra.mxu0 %v1778
  %3635 = vmatprep.subr.mxu0 0.0
  %3636 = vmatpush1.msra.mxu0 %v1777
  %3637 = vmatprep.subr.mxu0 0.0
  %3638 = vmatpush1.msra.mxu0 %v1776
  %3639 = vmatprep.subr.mxu0 0.0
  %3640 = vmatpush1.msra.mxu0 %v1775
  %3641 = vmatprep.subr.mxu0 0.0
  %3642 = vmatpush2.msra.mxu0 0.0
  %3643 = vmatprep.subr.mxu0 0.0
  %3644 = vmatpush2.msra.mxu0 0.0
  %3645 = vmatprep.subr.mxu0 0.0
  %3646 = vmatpush2.msra.mxu0 0.0
  %3647 = vmatprep.subr.mxu0 0.0
  %3648 = vmatpush2.msra.mxu0 0.0
  %3649 = vmatprep.subr.mxu0 0.0
  %3650 = vmatpush2.msra.mxu0 0.0
  %3651 = vmatprep.subr.mxu0 0.0
  %3652 = vmatpush2.msra.mxu0 0.0
  %3653 = vmatprep.subr.mxu0 0.0
  %3654 = vmatpush2.msra.mxu0 %v1800
  %3655 = vmatprep.subr.mxu0 0.0
  %3656 = vmatpush2.msra.mxu0 %v1799
  %3657 = vmatprep.subr.mxu0 0.0
  %3658 = vmatpush2.msra.mxu0 %v1798
  %3659 = vmatprep.subr.mxu0 0.0
  %3660 = vmatpush2.msra.mxu0 %v1797
  %3661 = vmatprep.subr.mxu0 0.0
  %3662 = vmatpush2.msra.mxu0 %v1796
  %3663 = vmatprep.subr.mxu0 0.0
  %3664 = vmatpush2.msra.mxu0 %v1795
  %3665 = vmatprep.subr.mxu0 0.0
  %3666 = vmatpush2.msra.mxu0 %v1794
  %3667 = vmatprep.subr.mxu0 0.0
  %3668 = vmatpush2.msra.mxu0 %v1793
  %3669 = vmatprep.subr.mxu0 0.0
  %3670 = vmatpush2.msra.mxu0 %v1792
  %3671 = vmatprep.subr.mxu0 0.0
  %3672 = vmatpush2.msra.mxu0 %v1791
  %3673 = vmatprep.mubr.f32.mxu0 %v3607
  %3674 = vmatmul.mubr.f32.gmra.mxu0 %v3594
  %v3675 = vpop.f32.mrf.mxu0
  %v3676 = vadd.f32 %v3604, %v3675
  %v3677 = vpop.f32.mrf.mxu0
  %3678 = vdwg.mxu0
  %v3679 = vmax.f32 %v3676, 0.0
  %v3681 = vsel %vm1963, %v3679, 0
  %3683 = vmatprep.subr.mxu0 0.0
  %3684 = vmatpush1.msra.mxu0 0.0
  %3685 = vmatprep.subr.mxu0 0.0
  %3686 = vmatpush1.msra.mxu0 0.0
  %3687 = vmatprep.subr.mxu0 0.0
  %3688 = vmatpush1.msra.mxu0 0.0
  %3689 = vmatprep.subr.mxu0 0.0
  %3690 = vmatpush1.msra.mxu0 0.0
  %3691 = vmatprep.subr.mxu0 0.0
  %3692 = vmatpush1.msra.mxu0 0.0
  %3693 = vmatprep.subr.mxu0 0.0
  %3694 = vmatpush1.msra.mxu0 0.0
  %3695 = vmatprep.subr.mxu0 0.0
  %3696 = vmatpush1.msra.mxu0 0.0
  %3697 = vmatprep.subr.mxu0 0.0
  %3698 = vmatpush1.msra.mxu0 0.0
  %3699 = vmatprep.subr.mxu0 0.0
  %3700 = vmatpush1.msra.mxu0 0.0
  %3701 = vmatprep.subr.mxu0 0.0
  %3702 = vmatpush1.msra.mxu0 0.0
  %3703 = vmatprep.subr.mxu0 0.0
  %3704 = vmatpush1.msra.mxu0 0.0
  %3705 = vmatprep.subr.mxu0 0.0
  %3706 = vmatpush1.msra.mxu0 0.0
  %3707 = vmatprep.subr.mxu0 0.0
  %3708 = vmatpush1.msra.mxu0 0.0
  %3709 = vmatprep.subr.mxu0 0.0
  %3710 = vmatpush1.msra.mxu0 0.0
  %3711 = vmatprep.subr.mxu0 0.0
  %3712 = vmatpush1.msra.mxu0 0.0
  %3713 = vmatprep.subr.mxu0 0.0
  %3714 = vmatpush1.msra.mxu0 %v3681
  %3715 = vmatprep.subr.mxu0 0.0
  %3716 = vmatpush2.msra.mxu0 0.0
  %3717 = vmatprep.subr.mxu0 0.0
  %3718 = vmatpush2.msra.mxu0 0.0
  %3719 = vmatprep.subr.mxu0 0.0
  %3720 = vmatpush2.msra.mxu0 0.0
  %3721 = vmatprep.subr.mxu0 0.0
  %3722 = vmatpush2.msra.mxu0 0.0
  %3723 = vmatprep.subr.mxu0 0.0
  %3724 = vmatpush2.msra.mxu0 0.0
  %3725 = vmatprep.subr.mxu0 0.0
  %3726 = vmatpush2.msra.mxu0 0.0
  %3727 = vmatprep.subr.mxu0 0.0
  %3728 = vmatpush2.msra.mxu0 0.0
  %3729 = vmatprep.subr.mxu0 0.0
  %3730 = vmatpush2.msra.mxu0 0.0
  %3731 = vmatprep.subr.mxu0 0.0
  %3732 = vmatpush2.msra.mxu0 0.0
  %3733 = vmatprep.subr.mxu0 0.0
  %3734 = vmatpush2.msra.mxu0 0.0
  %3735 = vmatprep.subr.mxu0 0.0
  %3736 = vmatpush2.msra.mxu0 0.0
  %3737 = vmatprep.subr.mxu0 0.0
  %3738 = vmatpush2.msra.mxu0 0.0
  %3739 = vmatprep.subr.mxu0 0.0
  %3740 = vmatpush2.msra.mxu0 0.0
  %3741 = vmatprep.subr.mxu0 0.0
  %3742 = vmatpush2.msra.mxu0 0.0
  %3743 = vmatprep.subr.mxu0 0.0
  %3744 = vmatpush2.msra.mxu0 0.0
  %3745 = vmatprep.subr.mxu0 0.0
  %3746 = vmatpush2.msra.mxu0 0.0
  %3747 = vmatprep.mubr.f32.mxu0 0.0
  %3748 = vmatmul.mubr.f32.gmra.mxu0 %v1961
  %v3749 = vpop.f32.mrf.mxu0
  %v3750 = vadd.f32 0.0, %v3749
  %v3751 = vpop.f32.mrf.mxu0
  %3752 = vdwg.mxu0
  %v3753 = vmul.f32 %v3750, %v1254
  %v3754 = vld [vmem:[%s4] sm:$0x3]
  %v3756 = vsel %vm1282, %v3754, 0
  %3758 = vmatprep.subr.mxu0 0.0
  %3759 = vmatpush1.msra.mxu0 0.0
  %3760 = vmatprep.subr.mxu0 0.0
  %3761 = vmatpush1.msra.mxu0 0.0
  %3762 = vmatprep.subr.mxu0 0.0
  %3763 = vmatpush1.msra.mxu0 0.0
  %3764 = vmatprep.subr.mxu0 0.0
  %3765 = vmatpush1.msra.mxu0 0.0
  %3766 = vmatprep.subr.mxu0 0.0
  %3767 = vmatpush1.msra.mxu0 0.0
  %3768 = vmatprep.subr.mxu0 0.0
  %3769 = vmatpush1.msra.mxu0 0.0
  %3770 = vmatprep.subr.mxu0 0.0
  %3771 = vmatpush1.msra.mxu0 0.0
  %3772 = vmatprep.subr.mxu0 0.0
  %3773 = vmatpush1.msra.mxu0 0.0
  %3774 = vmatprep.subr.mxu0 0.0
  %3775 = vmatpush1.msra.mxu0 0.0
  %3776 = vmatprep.subr.mxu0 0.0
  %3777 = vmatpush1.msra.mxu0 0.0
  %3778 = vmatprep.subr.mxu0 0.0
  %3779 = vmatpush1.msra.mxu0 0.0
  %3780 = vmatprep.subr.mxu0 0.0
  %3781 = vmatpush1.msra.mxu0 0.0
  %3782 = vmatprep.subr.mxu0 0.0
  %3783 = vmatpush1.msra.mxu0 0.0
  %3784 = vmatprep.subr.mxu0 0.0
  %3785 = vmatpush1.msra.mxu0 0.0
  %3786 = vmatprep.subr.mxu0 0.0
  %3787 = vmatpush1.msra.mxu0 0.0
  %3788 = vmatprep.subr.mxu0 0.0
  %3789 = vmatpush1.msra.mxu0 %v3753
  %3790 = vmatprep.subr.mxu0 0.0
  %3791 = vmatpush2.msra.mxu0 0.0
  %3792 = vmatprep.subr.mxu0 0.0
  %3793 = vmatpush2.msra.mxu0 0.0
  %3794 = vmatprep.subr.mxu0 0.0
  %3795 = vmatpush2.msra.mxu0 0.0
  %3796 = vmatprep.subr.mxu0 0.0
  %3797 = vmatpush2.msra.mxu0 0.0
  %3798 = vmatprep.subr.mxu0 0.0
  %3799 = vmatpush2.msra.mxu0 0.0
  %3800 = vmatprep.subr.mxu0 0.0
  %3801 = vmatpush2.msra.mxu0 0.0
  %3802 = vmatprep.subr.mxu0 0.0
  %3803 = vmatpush2.msra.mxu0 0.0
  %3804 = vmatprep.subr.mxu0 0.0
  %3805 = vmatpush2.msra.mxu0 0.0
  %3806 = vmatprep.subr.mxu0 0.0
  %3807 = vmatpush2.msra.mxu0 0.0
  %3808 = vmatprep.subr.mxu0 0.0
  %3809 = vmatpush2.msra.mxu0 0.0
  %3810 = vmatprep.subr.mxu0 0.0
  %3811 = vmatpush2.msra.mxu0 0.0
  %3812 = vmatprep.subr.mxu0 0.0
  %3813 = vmatpush2.msra.mxu0 0.0
  %3814 = vmatprep.subr.mxu0 0.0
  %3815 = vmatpush2.msra.mxu0 0.0
  %3816 = vmatprep.subr.mxu0 0.0
  %3817 = vmatpush2.msra.mxu0 0.0
  %3818 = vmatprep.subr.mxu0 0.0
  %3819 = vmatpush2.msra.mxu0 0.0
  %3820 = vmatprep.subr.mxu0 0.0
  %3821 = vmatpush2.msra.mxu0 0.0
  %3822 = vmatprep.mubr.f32.mxu0 0.0
  %3823 = vmatmul.mubr.f32.gmra.mxu0 %v3756
  %v3824 = vpop.f32.mrf.mxu0
  %v3825 = vadd.f32 0.0, %v3824
  %v3826 = vpop.f32.mrf.mxu0
  %3827 = vdwg.mxu0
  %v3828 = vld [vmem:[%s13] sm:$0xff]
  %v3829 = vld [vmem:[%s13 + $0x8] sm:$0x1f]
  %v3830 = vld [vmem:[#allocation3] sm:$0x1]
  %v3832 = vlaneseq
  %v3833 = vshrl.u32 %v3832, 7
  %v3834 = vsub.s32 0, %v3833
  %v3835 = vrot.slane %v3830, %v3834
  %v3838 = vsel %vm232, %v3825, 0
  %v3841 = vsel %vm1484, %v3829, 0
  %3843 = vmatprep.subr.mxu0 0.0
  %3844 = vmatpush1.msra.mxu0 0.0
  %3845 = vmatprep.subr.mxu0 0.0
  %3846 = vmatpush1.msra.mxu0 0.0
  %3847 = vmatprep.subr.mxu0 0.0
  %3848 = vmatpush1.msra.mxu0 0.0
  %3849 = vmatprep.subr.mxu0 0.0
  %3850 = vmatpush1.msra.mxu0 0.0
  %3851 = vmatprep.subr.mxu0 0.0
  %3852 = vmatpush1.msra.mxu0 0.0
  %3853 = vmatprep.subr.mxu0 0.0
  %3854 = vmatpush1.msra.mxu0 0.0
  %3855 = vmatprep.subr.mxu0 0.0
  %3856 = vmatpush1.msra.mxu0 0.0
  %3857 = vmatprep.subr.mxu0 0.0
  %3858 = vmatpush1.msra.mxu0 0.0
  %3859 = vmatprep.subr.mxu0 0.0
  %3860 = vmatpush1.msra.mxu0 0.0
  %3861 = vmatprep.subr.mxu0 0.0
  %3862 = vmatpush1.msra.mxu0 0.0
  %3863 = vmatprep.subr.mxu0 0.0
  %3864 = vmatpush1.msra.mxu0 0.0
  %3865 = vmatprep.subr.mxu0 0.0
  %3866 = vmatpush1.msra.mxu0 0.0
  %3867 = vmatprep.subr.mxu0 0.0
  %3868 = vmatpush1.msra.mxu0 0.0
  %3869 = vmatprep.subr.mxu0 0.0
  %3870 = vmatpush1.msra.mxu0 0.0
  %3871 = vmatprep.subr.mxu0 0.0
  %3872 = vmatpush1.msra.mxu0 %v3841
  %3873 = vmatprep.subr.mxu0 0.0
  %3874 = vmatpush1.msra.mxu0 %v3828
  %3875 = vmatprep.subr.mxu0 0.0
  %3876 = vmatpush2.msra.mxu0 0.0
  %3877 = vmatprep.subr.mxu0 0.0
  %3878 = vmatpush2.msra.mxu0 0.0
  %3879 = vmatprep.subr.mxu0 0.0
  %3880 = vmatpush2.msra.mxu0 0.0
  %3881 = vmatprep.subr.mxu0 0.0
  %3882 = vmatpush2.msra.mxu0 0.0
  %3883 = vmatprep.subr.mxu0 0.0
  %3884 = vmatpush2.msra.mxu0 0.0
  %3885 = vmatprep.subr.mxu0 0.0
  %3886 = vmatpush2.msra.mxu0 0.0
  %3887 = vmatprep.subr.mxu0 0.0
  %3888 = vmatpush2.msra.mxu0 0.0
  %3889 = vmatprep.subr.mxu0 0.0
  %3890 = vmatpush2.msra.mxu0 0.0
  %3891 = vmatprep.subr.mxu0 0.0
  %3892 = vmatpush2.msra.mxu0 0.0
  %3893 = vmatprep.subr.mxu0 0.0
  %3894 = vmatpush2.msra.mxu0 0.0
  %3895 = vmatprep.subr.mxu0 0.0
  %3896 = vmatpush2.msra.mxu0 0.0
  %3897 = vmatprep.subr.mxu0 0.0
  %3898 = vmatpush2.msra.mxu0 0.0
  %3899 = vmatprep.subr.mxu0 0.0
  %3900 = vmatpush2.msra.mxu0 0.0
  %3901 = vmatprep.subr.mxu0 0.0
  %3902 = vmatpush2.msra.mxu0 0.0
  %3903 = vmatprep.subr.mxu0 0.0
  %3904 = vmatpush2.msra.mxu0 0.0
  %3905 = vmatprep.subr.mxu0 0.0
  %3906 = vmatpush2.msra.mxu0 0.0
  %3907 = vmatprep.mubr.f32.mxu0 0.0
  %3908 = vmatmul.mubr.f32.gmra.mxu0 %v3838
  %v3909 = vpop.f32.mrf.mxu0
  %v3910 = vadd.f32 %v3835, %v3909
  %v3911 = vpop.f32.mrf.mxu0
  %3912 = vdwg.mxu0
  %vm3913 = vcmask 1024
  %3914 = vst.msk [vmem:[%s15] sm:$0x3] %vm3913, %v3910
  // Predicated region
  $region62: #{lrp_pure_forward.1} parent=0 // pred_check
    _
  $region63: #{lrp_pure_forward.1} parent=0 // pred_check_branch
    %3916 = sbr.rel (0) target = $region65
  $region64: #{lrp_pure_forward.1} parent=0 // pred_region
    _
  $region65: #{lrp_pure_forward.1} parent=0 // pred_fallthru
    _
  // Predicated region
  $region66: #{lrp_pure_forward.1} parent=0 // pred_check
    _
  $region67: #{lrp_pure_forward.1} parent=0 // pred_check_branch
    %3918 = sbr.rel (0) target = $region69
  $region68: #{lrp_pure_forward.1} parent=0 // pred_region
    _
  $region69: #{lrp_pure_forward.1} parent=0 // pred_fallthru
    _

</llo_original>
